<compile_context>
chip_gen: v6e
topology: v6e:2x2x1
jax: 0.10.0
libtpu: 0.0.40
codegen_flags: <defaults>
</compile_context>

<pallas_src>
import numpy as np

import jax
import jax.numpy as jnp
from jax.experimental import pallas as pl
from jax.experimental.pallas import tpu as pltpu


# ----------------------------------------------------------------------------
# fused per-image kernel
# ----------------------------------------------------------------------------
def build_kernel(p):
    meta, ncls = p["meta"], p["num_classes"]
    stem_w, stem_b = p["stem_w"], p["stem_b"]
    cls_w, cls_b = p["cls_w"], p["cls_b"]

    def kernel(x_ref, w_ref, b_ref, out_ref):
        # x_ref : (1, k_stem, H*W) bf16 im2col patches of one image
        # w_ref : (Rw, 128) bf16 packed matmul-weight slab
        # b_ref : (Cmax, Nb) f32 packed bias / depthwise-tap slab
        # out_ref: (1, ncls, 1) f32 logits

        def W(spec):                       # static slab slice -> (rows, cols) bf16
            off, r, c = spec
            return w_ref[off:off + r, 0:c]

        def B(spec):                       # static slab slice -> (C, 1) f32 column
            col, cdim = spec
            return b_ref[0:cdim, col:col + 1]

        def dense(x, wspec, bspec, act):
            # (Cout, Cin) @ (Cin, M) bf16 MXU matmul, f32 accumulation, fused epilogue.
            y = jnp.dot(W(wspec), x.astype(jnp.bfloat16),
                        preferred_element_type=jnp.float32)
            y = y + B(bspec)
            if act == "swish":
                y = y * jax.nn.sigmoid(y)
            elif act == "sigmoid":
                y = jax.nn.sigmoid(y)
            return y

        def depthwise(xin, dw_spec, k, h, w):
            # k x k depthwise conv ('same' padding, stride 1) directly on the lane-flat
            # (C, h*w) activation: tap (ki,kj) = static lane rotation (XLU) + masked FMA.
            hw = h * w
            pad = (k - 1) // 2
            col0, cdim = dw_spec
            assert w & (w - 1) == 0  # TODO(synk): non-power-of-two width needs %-based masks
            pos = jax.lax.broadcasted_iota(jnp.int32, (1, hw), 1)
            ow = jnp.bitwise_and(pos, w - 1)
            acc = jnp.zeros_like(xin)
            for ki in range(k):
                for kj in range(k):
                    di, dj = ki - pad, kj - pad
                    wt = b_ref[0:cdim, col0 + ki * k + kj:col0 + ki * k + kj + 1]
                    shift = di * w + dj
                    xs = xin if shift == 0 else pltpu.roll(xin, (-shift) % hw, axis=1)
                    conds = []
                    if di < 0:
                        conds.append(pos >= (-di) * w)
                    elif di > 0:
                        conds.append(pos < (h - di) * w)
                    if dj < 0:
                        conds.append(ow >= -dj)
                    elif dj > 0:
                        conds.append(ow <= w - 1 - dj)
                    if conds:
                        m = conds[0]
                        for extra in conds[1:]:
                            m = jnp.logical_and(m, extra)
                        xs = jnp.where(m, xs, 0.0)
                    acc = acc + xs * wt
            return acc

        # ------------- stem: single fused im2col matmul + folded BN + swish --------------
        act = jnp.dot(W(stem_w), x_ref[0], preferred_element_type=jnp.float32) + B(stem_b)
        act = act * jax.nn.sigmoid(act)                       # (32, H*W) f32, lane-dense

        # ------------- MBConv blocks ------------------------------------------------------
        for bm in meta:
            x_in = act
            if bm["exp_w"] is not None:                       # expansion 1x1 + BN + swish
                act = dense(act, bm["exp_w"], bm["exp_b"], "swish")

            d = depthwise(act, bm["dw_w"], bm["k"], bm["h"], bm["w"])
            if bm["stride"] > 1:
                # stride-s == exact 0/1 tap selection of the stride-1 result (bf16 matmul);
                # bias/swish run after it on the 4x smaller strided output.
                d = jnp.dot(d.astype(jnp.bfloat16), W(bm["sub_w"]),
                            preferred_element_type=jnp.float32)
            d = d + B(bm["dw_b"])
            d = d * jax.nn.sigmoid(d)                         # (mid, ho*wo)

            # squeeze-and-excitation (per-image spatial mean fused in-kernel)
            pooled = jnp.mean(d, axis=1, keepdims=True)       # (mid, 1)
            se = dense(pooled, bm["se1_w"], bm["se1_b"], "swish")
            se = dense(se, bm["se2_w"], bm["se2_b"], "sigmoid")
            d = d * se

            # projection 1x1 conv + folded BN (linear) [+ residual skip]
            act = dense(d, bm["pj_w"], bm["pj_b"], "none")
            if bm["has_skip"]:
                # TODO(synk): drop_connect (training-only stochastic depth) omitted.
                act = act + x_in

        # ------------- head: GAP + Linear --------------------------------------------------
        pooled = jnp.mean(act, axis=1, keepdims=True)         # (c_last, 1)
        # TODO(synk): training-mode F.dropout omitted (inference path / dropout_rate=0).
        logits = dense(pooled, cls_w, cls_b, "none")          # (ncls, 1)
        out_ref[...] = logits.reshape(1, ncls, 1)

    return kernel


# ----------------------------------------------------------------------------
# parameter construction (deterministic; BN folded; eval / running stats)
# ----------------------------------------------------------------------------
def _bn_fold(key, c, eps=1e-5):
    kg, kb = jax.random.split(key)
    gamma = 1.0 + 0.1 * jax.random.normal(kg, (c,), jnp.float32)
    beta = 0.1 * jax.random.normal(kb, (c,), jnp.float32)
    running_mean = jnp.zeros((c,), jnp.float32)
    running_var = jnp.ones((c,), jnp.float32)
    scale = gamma / jnp.sqrt(running_var + eps)
    shift = beta - running_mean * scale
    return np.asarray(scale), np.asarray(shift)


def _make_sub_matrix(h, w, s):
    """0/1 matrix S so that (stride-1 output)(C, h*w) @ S == exact stride-s output."""
    ho, wo = -(-h // s), -(-w // s)
    sub = np.zeros((h * w, ho * wo), np.float32)
    for oh in range(ho):
        for ow in range(wo):
            sub[(s * oh) * w + s * ow, oh * wo + ow] = 1.0
    return sub


def init_params(key, cfg, num_classes=10, in_ch=3, hw=16, c_stem=32):
    keys = iter(jax.random.split(key, 64))

    def nrm(shape, scale=0.1):
        return np.asarray(scale * jax.random.normal(next(keys), shape, jnp.float32))

    # ---- parameter slabs: one bf16 weight slab, one f32 bias/depthwise slab -------------
    w_rows = []
    w_off = [0]
    b_cols = []

    def add_w(mat):                         # (rows, cols) matmul weight, rows 8-aligned
        mat = np.asarray(mat, np.float32)
        r, c = mat.shape
        assert c <= 128
        r_pad = ((r + 7) // 8) * 8
        buf = np.zeros((r_pad, 128), np.float32)
        buf[:r, :c] = mat
        off = w_off[0]
        w_rows.append(buf)
        w_off[0] += r_pad
        return (off, r, c)

    def add_b(vec):                         # per-channel f32 column
        vec = np.asarray(vec, np.float32).reshape(-1)
        b_cols.append(vec)
        return (len(b_cols) - 1, vec.shape[0])

    def add_dw(mat):                        # (C, k*k) depthwise taps -> k*k columns
        mat = np.asarray(mat, np.float32)
        col0 = len(b_cols)
        for t in range(mat.shape[1]):
            b_cols.append(mat[:, t])
        return (col0, mat.shape[0])

    # ---- stem: Conv2d(3, 32, k=3, p=1, bias=False) + BN, folded, as one im2col matmul ----
    k_stem = ((9 * in_ch + 7) // 8) * 8
    w1 = nrm((c_stem, in_ch, 3, 3))
    sc, sh = _bn_fold(next(keys), c_stem)
    wk = np.transpose(w1 * sc[:, None, None, None], (0, 2, 3, 1)).reshape(c_stem, 9 * in_ch)
    wk = np.pad(wk, ((0, 0), (0, k_stem - 9 * in_ch)))
    stem_w, stem_b = add_w(wk), add_b(sh)

    # ---- MBConv blocks ---------------------------------------------------------------------
    meta = []
    in_c, cur_h, cur_w = c_stem, hw, hw
    for expansion, out_c, num_blocks, k, stride in zip(
            cfg["expansion"], cfg["out_channels"], cfg["num_blocks"],
            cfg["kernel_size"], cfg["stride"]):
        for s in [stride] + [1] * (num_blocks - 1):
            mid = expansion * in_c
            se_c = max(1, int(in_c * 0.25))
            bm = {"stride": s, "k": k, "h": cur_h, "w": cur_w,
                  "has_skip": (s == 1 and in_c == out_c), "exp_w": None}

            if expansion != 1:              # expansion 1x1 conv + folded BN + swish
                we = nrm((mid, in_c))
                sc1, sh1 = _bn_fold(next(keys), mid)
                bm["exp_w"], bm["exp_b"] = add_w(we * sc1[:, None]), add_b(sh1)

            # depthwise kxk conv (groups=mid) + folded BN: per-channel taps kept in f32
            wd = nrm((mid, 1, k, k))
            sc2, sh2 = _bn_fold(next(keys), mid)
            bm["dw_w"] = add_dw(wd[:, 0].reshape(mid, k * k) * sc2[:, None])
            bm["dw_b"] = add_b(sh2)
            if s > 1:                       # exact stride-s tap selection as bf16 0/1 matmul
                bm["sub_w"] = add_w(_make_sub_matrix(cur_h, cur_w, s))
                cur_h, cur_w = -(-cur_h // s), -(-cur_w // s)

            # squeeze-excitation 1x1 convs (with bias)
            bm["se1_w"], bm["se1_b"] = add_w(nrm((se_c, mid))), add_b(nrm((se_c,)))
            bm["se2_w"], bm["se2_b"] = add_w(nrm((mid, se_c))), add_b(nrm((mid,)))

            # projection 1x1 conv + folded BN (no activation)
            w3 = nrm((out_c, mid))
            sc3, sh3 = _bn_fold(next(keys), out_c)
            bm["pj_w"], bm["pj_b"] = add_w(w3 * sc3[:, None]), add_b(sh3)

            meta.append(bm)
            in_c = out_c

    # ---- classifier --------------------------------------------------------------------------
    cls_w = add_w(nrm((num_classes, in_c)))
    cls_b = add_b(nrm((num_classes,)))

    # ---- finalize the two slabs ---------------------------------------------------------------
    wslab = jnp.asarray(np.concatenate(w_rows, axis=0), jnp.bfloat16)
    c_max = ((max(len(v) for v in b_cols) + 7) // 8) * 8
    n_col = ((len(b_cols) + 127) // 128) * 128
    bs = np.zeros((c_max, n_col), np.float32)
    for j, v in enumerate(b_cols):
        bs[:len(v), j] = v
    bslab = jnp.asarray(bs)

    return {"meta": meta, "stem_w": stem_w, "stem_b": stem_b, "cls_w": cls_w,
            "cls_b": cls_b, "wslab": wslab, "bslab": bslab,
            "num_classes": num_classes, "k_stem": k_stem, "hw": hw}


# ----------------------------------------------------------------------------
# forward pass (one fused pallas_call)
# ----------------------------------------------------------------------------
def _im2col_stem(x_nchw, k_stem):
    """Boundary layout plumbing only (no arithmetic): 3x3/pad-1 im2col patches,
    laid out (N, k_stem, H*W) bf16 so the stem is one lane-dense MXU matmul."""
    n, cin, h, w = x_nchw.shape
    xp = jnp.pad(x_nchw, ((0, 0), (0, 0), (1, 1), (1, 1)))
    wins = [xp[:, :, ki:ki + h, kj:kj + w].reshape(n, cin, h * w)
            for ki in range(3) for kj in range(3)]
    patches = jnp.concatenate(wins, axis=1)                       # (n, 9*cin, h*w)
    patches = jnp.pad(patches, ((0, 0), (0, k_stem - 9 * cin), (0, 0)))
    return patches.astype(jnp.bfloat16)


def efficientnet_forward(x_nchw, params):
    n = x_nchw.shape[0]
    ncls = params["num_classes"]
    patches = _im2col_stem(x_nchw, params["k_stem"])
    wslab, bslab = params["wslab"], params["bslab"]

    out = pl.pallas_call(
        build_kernel(params),
        out_shape=jax.ShapeDtypeStruct((n, ncls, 1), jnp.float32),
        grid=(n,),                                   # one image per step; both TCs on v7x
        in_specs=[
            pl.BlockSpec((1,) + tuple(patches.shape[1:]), lambda i: (i, 0, 0)),
            pl.BlockSpec(tuple(wslab.shape), lambda i: (0, 0)),   # resident weight slab
            pl.BlockSpec(tuple(bslab.shape), lambda i: (0, 0)),   # resident bias/tap slab
        ],
        out_specs=pl.BlockSpec((1, ncls, 1), lambda i: (i, 0, 0)),
        compiler_params=pltpu.CompilerParams(
            dimension_semantics=("parallel",),
            vmem_limit_bytes=32 * 1024 * 1024),
    )(patches, wslab, bslab)
    return out.reshape(n, ncls)


# ----------------------------------------------------------------------------
# main
# ----------------------------------------------------------------------------
if __name__ == "__main__":
    cfg = {
        "num_blocks": [1, 1],
        "expansion": [1, 2],
        "out_channels": [16, 24],
        "kernel_size": [3, 3],
        "stride": [1, 2],
        "dropout_rate": 0.0,
        "drop_connect_rate": 0.0,
    }
    key = jax.random.PRNGKey(0)
    kx, kp = jax.random.split(key)
    x = jax.random.normal(kx, (2, 3, 16, 16), jnp.float32)   # NCHW, like the PyTorch module
    params = init_params(kp, cfg, num_classes=10, in_ch=3, hw=16)

    logits = efficientnet_forward(x, params)
    jax.block_until_ready(logits)
    assert logits.shape == (2, 10) and logits.dtype == jnp.float32
    assert bool(jnp.all(jnp.isfinite(logits)))
    print("KERNEL_OK")
</pallas_src>

<mosaic_0001>
module attributes {stable_mosaic.version = 11 : i64} {
  func.func @kernel(%arg0: i32, %arg1: memref<1x32x256xbf16, #tpu.memory_space<vmem>>, %arg2: memref<456x128xbf16, #tpu.memory_space<vmem>>, %arg3: memref<32x128xf32, #tpu.memory_space<vmem>>, %arg4: memref<1x10x1xf32, #tpu.memory_space<vmem>>) attributes {dimension_semantics = [#tpu.dimension_semantics<parallel>], iteration_bounds = array<i64: 2>, scalar_prefetch = 0 : i64, scratch_operands = 0 : i64, tpu.core_type = #tpu.core_type<tc>, window_params = [{transform_indices = @transform_0, window_bounds = array<i64: 1, 32, 256>}, {pipeline_mode = #tpu.pipeline_mode<synchronous>, transform_indices = @transform_1, window_bounds = array<i64: 456, 128>}, {pipeline_mode = #tpu.pipeline_mode<synchronous>, transform_indices = @transform_2, window_bounds = array<i64: 32, 128>}, {transform_indices = @transform_3, window_bounds = array<i64: 1, 10, 1>}]} {
    %c0 = arith.constant 0 : index
    %c0_0 = arith.constant 0 : index
    %0 = vector.load %arg2[%c0, %c0_0] : memref<456x128xbf16, #tpu.memory_space<vmem>>, vector<32x32xbf16>
    %c0_1 = arith.constant 0 : index
    %c0_2 = arith.constant 0 : index
    %c0_3 = arith.constant 0 : index
    %1 = vector.load %arg1[%c0_1, %c0_2, %c0_3] : memref<1x32x256xbf16, #tpu.memory_space<vmem>>, vector<1x32x256xbf16>
    %2 = vector.shape_cast %1 : vector<1x32x256xbf16> to vector<32x256xbf16>
    %cst = arith.constant dense<0.000000e+00> : vector<32x256xf32>
    %3 = tpu.matmul %0, %2, %cst {dimension_numbers = #tpu.dot_dimension_numbers<[1], [0], [0], [1], [0, 0, 1, 1], [], []>} : vector<32x32xbf16>, vector<32x256xbf16>, vector<32x256xf32> -> vector<32x256xf32>
    %c0_4 = arith.constant 0 : index
    %c0_5 = arith.constant 0 : index
    %4 = vector.load %arg3[%c0_4, %c0_5] : memref<32x128xf32, #tpu.memory_space<vmem>>, vector<32x1xf32>
    %5 = vector.broadcast %4 : vector<32x1xf32> to vector<32x256xf32>
    %6 = arith.addf %3, %5 : vector<32x256xf32>
    %7 = arith.negf %6 : vector<32x256xf32>
    %8 = math.exp %7 : vector<32x256xf32>
    %cst_6 = arith.constant 1.000000e+00 : f32
    %9 = vector.broadcast %cst_6 : f32 to vector<32x256xf32>
    %10 = arith.addf %9, %8 : vector<32x256xf32>
    %11 = arith.divf %9, %10 : vector<32x256xf32>
    %12 = arith.mulf %6, %11 : vector<32x256xf32>
    %13 = tpu.iota {dimensions = array<i32: 1>} : vector<1x256xi32>
    %c15_i32 = arith.constant 15 : i32
    %14 = vector.broadcast %c15_i32 : i32 to vector<1x256xi32>
    %15 = arith.andi %13, %14 : vector<1x256xi32>
    %cst_7 = arith.constant 0.000000e+00 : f32
    %16 = vector.broadcast %cst_7 : f32 to vector<32x256xf32>
    %c0_8 = arith.constant 0 : index
    %c1 = arith.constant 1 : index
    %17 = vector.load %arg3[%c0_8, %c1] : memref<32x128xf32, #tpu.memory_space<vmem>>, vector<32x1xf32>
    %c17_i32 = arith.constant 17 : i32
    %18 = tpu.dynamic_rotate %12 by %c17_i32 dim 1 : vector<32x256xf32>, i32 -> vector<32x256xf32>
    %c16_i32 = arith.constant 16 : i32
    %19 = vector.broadcast %c16_i32 : i32 to vector<1x256xi32>
    %20 = arith.cmpi sge, %13, %19 : vector<1x256xi32>
    %c1_i32 = arith.constant 1 : i32
    %21 = vector.broadcast %c1_i32 : i32 to vector<1x256xi32>
    %22 = arith.cmpi sge, %15, %21 : vector<1x256xi32>
    %23 = arith.andi %20, %22 : vector<1x256xi1>
    %cst_9 = arith.constant 0.000000e+00 : f32
    %24 = vector.shape_cast %23 : vector<1x256xi1> to vector<1x256xi1>
    %25 = vector.broadcast %24 : vector<1x256xi1> to vector<32x256xi1>
    %26 = vector.broadcast %cst_9 : f32 to vector<32x256xf32>
    %27 = arith.select %25, %18, %26 : vector<32x256xi1>, vector<32x256xf32>
    %28 = vector.broadcast %17 : vector<32x1xf32> to vector<32x256xf32>
    %29 = arith.mulf %27, %28 : vector<32x256xf32>
    %30 = arith.addf %16, %29 : vector<32x256xf32>
    %c0_10 = arith.constant 0 : index
    %c2 = arith.constant 2 : index
    %31 = vector.load %arg3[%c0_10, %c2] : memref<32x128xf32, #tpu.memory_space<vmem>>, vector<32x1xf32>
    %c16_i32_11 = arith.constant 16 : i32
    %32 = tpu.dynamic_rotate %12 by %c16_i32_11 dim 1 : vector<32x256xf32>, i32 -> vector<32x256xf32>
    %c16_i32_12 = arith.constant 16 : i32
    %33 = vector.broadcast %c16_i32_12 : i32 to vector<1x256xi32>
    %34 = arith.cmpi sge, %13, %33 : vector<1x256xi32>
    %cst_13 = arith.constant 0.000000e+00 : f32
    %35 = vector.shape_cast %34 : vector<1x256xi1> to vector<1x256xi1>
    %36 = vector.broadcast %35 : vector<1x256xi1> to vector<32x256xi1>
    %37 = vector.broadcast %cst_13 : f32 to vector<32x256xf32>
    %38 = arith.select %36, %32, %37 : vector<32x256xi1>, vector<32x256xf32>
    %39 = vector.broadcast %31 : vector<32x1xf32> to vector<32x256xf32>
    %40 = arith.mulf %38, %39 : vector<32x256xf32>
    %41 = arith.addf %30, %40 : vector<32x256xf32>
    %c0_14 = arith.constant 0 : index
    %c3 = arith.constant 3 : index
    %42 = vector.load %arg3[%c0_14, %c3] : memref<32x128xf32, #tpu.memory_space<vmem>>, vector<32x1xf32>
    %c15_i32_15 = arith.constant 15 : i32
    %43 = tpu.dynamic_rotate %12 by %c15_i32_15 dim 1 : vector<32x256xf32>, i32 -> vector<32x256xf32>
    %c16_i32_16 = arith.constant 16 : i32
    %44 = vector.broadcast %c16_i32_16 : i32 to vector<1x256xi32>
    %45 = arith.cmpi sge, %13, %44 : vector<1x256xi32>
    %c14_i32 = arith.constant 14 : i32
    %46 = vector.broadcast %c14_i32 : i32 to vector<1x256xi32>
    %47 = arith.cmpi sle, %15, %46 : vector<1x256xi32>
    %48 = arith.andi %45, %47 : vector<1x256xi1>
    %cst_17 = arith.constant 0.000000e+00 : f32
    %49 = vector.shape_cast %48 : vector<1x256xi1> to vector<1x256xi1>
    %50 = vector.broadcast %49 : vector<1x256xi1> to vector<32x256xi1>
    %51 = vector.broadcast %cst_17 : f32 to vector<32x256xf32>
    %52 = arith.select %50, %43, %51 : vector<32x256xi1>, vector<32x256xf32>
    %53 = vector.broadcast %42 : vector<32x1xf32> to vector<32x256xf32>
    %54 = arith.mulf %52, %53 : vector<32x256xf32>
    %55 = arith.addf %41, %54 : vector<32x256xf32>
    %c0_18 = arith.constant 0 : index
    %c4 = arith.constant 4 : index
    %56 = vector.load %arg3[%c0_18, %c4] : memref<32x128xf32, #tpu.memory_space<vmem>>, vector<32x1xf32>
    %c1_i32_19 = arith.constant 1 : i32
    %57 = tpu.dynamic_rotate %12 by %c1_i32_19 dim 1 : vector<32x256xf32>, i32 -> vector<32x256xf32>
    %c1_i32_20 = arith.constant 1 : i32
    %58 = vector.broadcast %c1_i32_20 : i32 to vector<1x256xi32>
    %59 = arith.cmpi sge, %15, %58 : vector<1x256xi32>
    %cst_21 = arith.constant 0.000000e+00 : f32
    %60 = vector.shape_cast %59 : vector<1x256xi1> to vector<1x256xi1>
    %61 = vector.broadcast %60 : vector<1x256xi1> to vector<32x256xi1>
    %62 = vector.broadcast %cst_21 : f32 to vector<32x256xf32>
    %63 = arith.select %61, %57, %62 : vector<32x256xi1>, vector<32x256xf32>
    %64 = vector.broadcast %56 : vector<32x1xf32> to vector<32x256xf32>
    %65 = arith.mulf %63, %64 : vector<32x256xf32>
    %66 = arith.addf %55, %65 : vector<32x256xf32>
    %c0_22 = arith.constant 0 : index
    %c5 = arith.constant 5 : index
    %67 = vector.load %arg3[%c0_22, %c5] : memref<32x128xf32, #tpu.memory_space<vmem>>, vector<32x1xf32>
    %68 = vector.broadcast %67 : vector<32x1xf32> to vector<32x256xf32>
    %69 = arith.mulf %12, %68 : vector<32x256xf32>
    %70 = arith.addf %66, %69 : vector<32x256xf32>
    %c0_23 = arith.constant 0 : index
    %c6 = arith.constant 6 : index
    %71 = vector.load %arg3[%c0_23, %c6] : memref<32x128xf32, #tpu.memory_space<vmem>>, vector<32x1xf32>
    %c255_i32 = arith.constant 255 : i32
    %72 = tpu.dynamic_rotate %12 by %c255_i32 dim 1 : vector<32x256xf32>, i32 -> vector<32x256xf32>
    %c14_i32_24 = arith.constant 14 : i32
    %73 = vector.broadcast %c14_i32_24 : i32 to vector<1x256xi32>
    %74 = arith.cmpi sle, %15, %73 : vector<1x256xi32>
    %cst_25 = arith.constant 0.000000e+00 : f32
    %75 = vector.shape_cast %74 : vector<1x256xi1> to vector<1x256xi1>
    %76 = vector.broadcast %75 : vector<1x256xi1> to vector<32x256xi1>
    %77 = vector.broadcast %cst_25 : f32 to vector<32x256xf32>
    %78 = arith.select %76, %72, %77 : vector<32x256xi1>, vector<32x256xf32>
    %79 = vector.broadcast %71 : vector<32x1xf32> to vector<32x256xf32>
    %80 = arith.mulf %78, %79 : vector<32x256xf32>
    %81 = arith.addf %70, %80 : vector<32x256xf32>
    %c0_26 = arith.constant 0 : index
    %c7 = arith.constant 7 : index
    %82 = vector.load %arg3[%c0_26, %c7] : memref<32x128xf32, #tpu.memory_space<vmem>>, vector<32x1xf32>
    %c241_i32 = arith.constant 241 : i32
    %83 = tpu.dynamic_rotate %12 by %c241_i32 dim 1 : vector<32x256xf32>, i32 -> vector<32x256xf32>
    %c240_i32 = arith.constant 240 : i32
    %84 = vector.broadcast %c240_i32 : i32 to vector<1x256xi32>
    %85 = arith.cmpi slt, %13, %84 : vector<1x256xi32>
    %c1_i32_27 = arith.constant 1 : i32
    %86 = vector.broadcast %c1_i32_27 : i32 to vector<1x256xi32>
    %87 = arith.cmpi sge, %15, %86 : vector<1x256xi32>
    %88 = arith.andi %85, %87 : vector<1x256xi1>
    %cst_28 = arith.constant 0.000000e+00 : f32
    %89 = vector.shape_cast %88 : vector<1x256xi1> to vector<1x256xi1>
    %90 = vector.broadcast %89 : vector<1x256xi1> to vector<32x256xi1>
    %91 = vector.broadcast %cst_28 : f32 to vector<32x256xf32>
    %92 = arith.select %90, %83, %91 : vector<32x256xi1>, vector<32x256xf32>
    %93 = vector.broadcast %82 : vector<32x1xf32> to vector<32x256xf32>
    %94 = arith.mulf %92, %93 : vector<32x256xf32>
    %95 = arith.addf %81, %94 : vector<32x256xf32>
    %c0_29 = arith.constant 0 : index
    %c8 = arith.constant 8 : index
    %96 = vector.load %arg3[%c0_29, %c8] : memref<32x128xf32, #tpu.memory_space<vmem>>, vector<32x1xf32>
    %c240_i32_30 = arith.constant 240 : i32
    %97 = tpu.dynamic_rotate %12 by %c240_i32_30 dim 1 : vector<32x256xf32>, i32 -> vector<32x256xf32>
    %c240_i32_31 = arith.constant 240 : i32
    %98 = vector.broadcast %c240_i32_31 : i32 to vector<1x256xi32>
    %99 = arith.cmpi slt, %13, %98 : vector<1x256xi32>
    %cst_32 = arith.constant 0.000000e+00 : f32
    %100 = vector.shape_cast %99 : vector<1x256xi1> to vector<1x256xi1>
    %101 = vector.broadcast %100 : vector<1x256xi1> to vector<32x256xi1>
    %102 = vector.broadcast %cst_32 : f32 to vector<32x256xf32>
    %103 = arith.select %101, %97, %102 : vector<32x256xi1>, vector<32x256xf32>
    %104 = vector.broadcast %96 : vector<32x1xf32> to vector<32x256xf32>
    %105 = arith.mulf %103, %104 : vector<32x256xf32>
    %106 = arith.addf %95, %105 : vector<32x256xf32>
    %c0_33 = arith.constant 0 : index
    %c9 = arith.constant 9 : index
    %107 = vector.load %arg3[%c0_33, %c9] : memref<32x128xf32, #tpu.memory_space<vmem>>, vector<32x1xf32>
    %c239_i32 = arith.constant 239 : i32
    %108 = tpu.dynamic_rotate %12 by %c239_i32 dim 1 : vector<32x256xf32>, i32 -> vector<32x256xf32>
    %c240_i32_34 = arith.constant 240 : i32
    %109 = vector.broadcast %c240_i32_34 : i32 to vector<1x256xi32>
    %110 = arith.cmpi slt, %13, %109 : vector<1x256xi32>
    %c14_i32_35 = arith.constant 14 : i32
    %111 = vector.broadcast %c14_i32_35 : i32 to vector<1x256xi32>
    %112 = arith.cmpi sle, %15, %111 : vector<1x256xi32>
    %113 = arith.andi %110, %112 : vector<1x256xi1>
    %cst_36 = arith.constant 0.000000e+00 : f32
    %114 = vector.shape_cast %113 : vector<1x256xi1> to vector<1x256xi1>
    %115 = vector.broadcast %114 : vector<1x256xi1> to vector<32x256xi1>
    %116 = vector.broadcast %cst_36 : f32 to vector<32x256xf32>
    %117 = arith.select %115, %108, %116 : vector<32x256xi1>, vector<32x256xf32>
    %118 = vector.broadcast %107 : vector<32x1xf32> to vector<32x256xf32>
    %119 = arith.mulf %117, %118 : vector<32x256xf32>
    %120 = arith.addf %106, %119 : vector<32x256xf32>
    %c0_37 = arith.constant 0 : index
    %c10 = arith.constant 10 : index
    %121 = vector.load %arg3[%c0_37, %c10] : memref<32x128xf32, #tpu.memory_space<vmem>>, vector<32x1xf32>
    %122 = vector.broadcast %121 : vector<32x1xf32> to vector<32x256xf32>
    %123 = arith.addf %120, %122 : vector<32x256xf32>
    %124 = arith.negf %123 : vector<32x256xf32>
    %125 = math.exp %124 : vector<32x256xf32>
    %cst_38 = arith.constant 1.000000e+00 : f32
    %126 = vector.broadcast %cst_38 : f32 to vector<32x256xf32>
    %127 = arith.addf %126, %125 : vector<32x256xf32>
    %128 = arith.divf %126, %127 : vector<32x256xf32>
    %129 = arith.mulf %123, %128 : vector<32x256xf32>
    %cst_39 = arith.constant dense<0.000000e+00> : vector<32xf32>
    %130 = vector.multi_reduction <add>, %129, %cst_39 [1] : vector<32x256xf32> to vector<32xf32>
    %131 = vector.shape_cast %130 : vector<32xf32> to vector<32x1xf32>
    %cst_40 = arith.constant 2.560000e+02 : f32
    %132 = vector.broadcast %cst_40 : f32 to vector<32x1xf32>
    %133 = arith.divf %131, %132 : vector<32x1xf32>
    %c32 = arith.constant 32 : index
    %c0_41 = arith.constant 0 : index
    %134 = vector.load %arg2[%c32, %c0_41] : memref<456x128xbf16, #tpu.memory_space<vmem>>, vector<8x32xbf16>
    %135 = arith.truncf %133 : vector<32x1xf32> to vector<32x1xbf16>
    %cst_42 = arith.constant dense<0.000000e+00> : vector<8x1xf32>
    %136 = tpu.matmul %134, %135, %cst_42 {dimension_numbers = #tpu.dot_dimension_numbers<[1], [0], [0], [1], [0, 0, 1, 1], [], []>} : vector<8x32xbf16>, vector<32x1xbf16>, vector<8x1xf32> -> vector<8x1xf32>
    %c0_43 = arith.constant 0 : index
    %c11 = arith.constant 11 : index
    %137 = vector.load %arg3[%c0_43, %c11] : memref<32x128xf32, #tpu.memory_space<vmem>>, vector<8x1xf32>
    %138 = arith.addf %136, %137 : vector<8x1xf32>
    %139 = arith.negf %138 : vector<8x1xf32>
    %140 = math.exp %139 : vector<8x1xf32>
    %cst_44 = arith.constant 1.000000e+00 : f32
    %141 = vector.broadcast %cst_44 : f32 to vector<8x1xf32>
    %142 = arith.addf %141, %140 : vector<8x1xf32>
    %143 = arith.divf %141, %142 : vector<8x1xf32>
    %144 = arith.mulf %138, %143 : vector<8x1xf32>
    %c40 = arith.constant 40 : index
    %c0_45 = arith.constant 0 : index
    %145 = vector.load %arg2[%c40, %c0_45] : memref<456x128xbf16, #tpu.memory_space<vmem>>, vector<32x8xbf16>
    %146 = arith.truncf %144 : vector<8x1xf32> to vector<8x1xbf16>
    %cst_46 = arith.constant dense<0.000000e+00> : vector<32x1xf32>
    %147 = tpu.matmul %145, %146, %cst_46 {dimension_numbers = #tpu.dot_dimension_numbers<[1], [0], [0], [1], [0, 0, 1, 1], [], []>} : vector<32x8xbf16>, vector<8x1xbf16>, vector<32x1xf32> -> vector<32x1xf32>
    %c0_47 = arith.constant 0 : index
    %c12 = arith.constant 12 : index
    %148 = vector.load %arg3[%c0_47, %c12] : memref<32x128xf32, #tpu.memory_space<vmem>>, vector<32x1xf32>
    %149 = arith.addf %147, %148 : vector<32x1xf32>
    %150 = arith.negf %149 : vector<32x1xf32>
    %151 = math.exp %150 : vector<32x1xf32>
    %cst_48 = arith.constant 1.000000e+00 : f32
    %152 = vector.broadcast %cst_48 : f32 to vector<32x1xf32>
    %153 = arith.addf %152, %151 : vector<32x1xf32>
    %154 = arith.divf %152, %153 : vector<32x1xf32>
    %155 = vector.broadcast %154 : vector<32x1xf32> to vector<32x256xf32>
    %156 = arith.mulf %129, %155 : vector<32x256xf32>
    %c72 = arith.constant 72 : index
    %c0_49 = arith.constant 0 : index
    %157 = vector.load %arg2[%c72, %c0_49] : memref<456x128xbf16, #tpu.memory_space<vmem>>, vector<16x32xbf16>
    %158 = arith.truncf %156 : vector<32x256xf32> to vector<32x256xbf16>
    %cst_50 = arith.constant dense<0.000000e+00> : vector<16x256xf32>
    %159 = tpu.matmul %157, %158, %cst_50 {dimension_numbers = #tpu.dot_dimension_numbers<[1], [0], [0], [1], [0, 0, 1, 1], [], []>} : vector<16x32xbf16>, vector<32x256xbf16>, vector<16x256xf32> -> vector<16x256xf32>
    %c0_51 = arith.constant 0 : index
    %c13 = arith.constant 13 : index
    %160 = vector.load %arg3[%c0_51, %c13] : memref<32x128xf32, #tpu.memory_space<vmem>>, vector<16x1xf32>
    %161 = vector.broadcast %160 : vector<16x1xf32> to vector<16x256xf32>
    %162 = arith.addf %159, %161 : vector<16x256xf32>
    %c88 = arith.constant 88 : index
    %c0_52 = arith.constant 0 : index
    %163 = vector.load %arg2[%c88, %c0_52] : memref<456x128xbf16, #tpu.memory_space<vmem>>, vector<32x16xbf16>
    %164 = arith.truncf %162 : vector<16x256xf32> to vector<16x256xbf16>
    %cst_53 = arith.constant dense<0.000000e+00> : vector<32x256xf32>
    %165 = tpu.matmul %163, %164, %cst_53 {dimension_numbers = #tpu.dot_dimension_numbers<[1], [0], [0], [1], [0, 0, 1, 1], [], []>} : vector<32x16xbf16>, vector<16x256xbf16>, vector<32x256xf32> -> vector<32x256xf32>
    %c0_54 = arith.constant 0 : index
    %c14 = arith.constant 14 : index
    %166 = vector.load %arg3[%c0_54, %c14] : memref<32x128xf32, #tpu.memory_space<vmem>>, vector<32x1xf32>
    %167 = vector.broadcast %166 : vector<32x1xf32> to vector<32x256xf32>
    %168 = arith.addf %165, %167 : vector<32x256xf32>
    %169 = arith.negf %168 : vector<32x256xf32>
    %170 = math.exp %169 : vector<32x256xf32>
    %cst_55 = arith.constant 1.000000e+00 : f32
    %171 = vector.broadcast %cst_55 : f32 to vector<32x256xf32>
    %172 = arith.addf %171, %170 : vector<32x256xf32>
    %173 = arith.divf %171, %172 : vector<32x256xf32>
    %174 = arith.mulf %168, %173 : vector<32x256xf32>
    %175 = tpu.iota {dimensions = array<i32: 1>} : vector<1x256xi32>
    %c15_i32_56 = arith.constant 15 : i32
    %176 = vector.broadcast %c15_i32_56 : i32 to vector<1x256xi32>
    %177 = arith.andi %175, %176 : vector<1x256xi32>
    %cst_57 = arith.constant 0.000000e+00 : f32
    %178 = vector.broadcast %cst_57 : f32 to vector<32x256xf32>
    %c0_58 = arith.constant 0 : index
    %c15 = arith.constant 15 : index
    %179 = vector.load %arg3[%c0_58, %c15] : memref<32x128xf32, #tpu.memory_space<vmem>>, vector<32x1xf32>
    %c17_i32_59 = arith.constant 17 : i32
    %180 = tpu.dynamic_rotate %174 by %c17_i32_59 dim 1 : vector<32x256xf32>, i32 -> vector<32x256xf32>
    %c16_i32_60 = arith.constant 16 : i32
    %181 = vector.broadcast %c16_i32_60 : i32 to vector<1x256xi32>
    %182 = arith.cmpi sge, %175, %181 : vector<1x256xi32>
    %c1_i32_61 = arith.constant 1 : i32
    %183 = vector.broadcast %c1_i32_61 : i32 to vector<1x256xi32>
    %184 = arith.cmpi sge, %177, %183 : vector<1x256xi32>
    %185 = arith.andi %182, %184 : vector<1x256xi1>
    %cst_62 = arith.constant 0.000000e+00 : f32
    %186 = vector.shape_cast %185 : vector<1x256xi1> to vector<1x256xi1>
    %187 = vector.broadcast %186 : vector<1x256xi1> to vector<32x256xi1>
    %188 = vector.broadcast %cst_62 : f32 to vector<32x256xf32>
    %189 = arith.select %187, %180, %188 : vector<32x256xi1>, vector<32x256xf32>
    %190 = vector.broadcast %179 : vector<32x1xf32> to vector<32x256xf32>
    %191 = arith.mulf %189, %190 : vector<32x256xf32>
    %192 = arith.addf %178, %191 : vector<32x256xf32>
    %c0_63 = arith.constant 0 : index
    %c16 = arith.constant 16 : index
    %193 = vector.load %arg3[%c0_63, %c16] : memref<32x128xf32, #tpu.memory_space<vmem>>, vector<32x1xf32>
    %c16_i32_64 = arith.constant 16 : i32
    %194 = tpu.dynamic_rotate %174 by %c16_i32_64 dim 1 : vector<32x256xf32>, i32 -> vector<32x256xf32>
    %c16_i32_65 = arith.constant 16 : i32
    %195 = vector.broadcast %c16_i32_65 : i32 to vector<1x256xi32>
    %196 = arith.cmpi sge, %175, %195 : vector<1x256xi32>
    %cst_66 = arith.constant 0.000000e+00 : f32
    %197 = vector.shape_cast %196 : vector<1x256xi1> to vector<1x256xi1>
    %198 = vector.broadcast %197 : vector<1x256xi1> to vector<32x256xi1>
    %199 = vector.broadcast %cst_66 : f32 to vector<32x256xf32>
    %200 = arith.select %198, %194, %199 : vector<32x256xi1>, vector<32x256xf32>
    %201 = vector.broadcast %193 : vector<32x1xf32> to vector<32x256xf32>
    %202 = arith.mulf %200, %201 : vector<32x256xf32>
    %203 = arith.addf %192, %202 : vector<32x256xf32>
    %c0_67 = arith.constant 0 : index
    %c17 = arith.constant 17 : index
    %204 = vector.load %arg3[%c0_67, %c17] : memref<32x128xf32, #tpu.memory_space<vmem>>, vector<32x1xf32>
    %c15_i32_68 = arith.constant 15 : i32
    %205 = tpu.dynamic_rotate %174 by %c15_i32_68 dim 1 : vector<32x256xf32>, i32 -> vector<32x256xf32>
    %c16_i32_69 = arith.constant 16 : i32
    %206 = vector.broadcast %c16_i32_69 : i32 to vector<1x256xi32>
    %207 = arith.cmpi sge, %175, %206 : vector<1x256xi32>
    %c14_i32_70 = arith.constant 14 : i32
    %208 = vector.broadcast %c14_i32_70 : i32 to vector<1x256xi32>
    %209 = arith.cmpi sle, %177, %208 : vector<1x256xi32>
    %210 = arith.andi %207, %209 : vector<1x256xi1>
    %cst_71 = arith.constant 0.000000e+00 : f32
    %211 = vector.shape_cast %210 : vector<1x256xi1> to vector<1x256xi1>
    %212 = vector.broadcast %211 : vector<1x256xi1> to vector<32x256xi1>
    %213 = vector.broadcast %cst_71 : f32 to vector<32x256xf32>
    %214 = arith.select %212, %205, %213 : vector<32x256xi1>, vector<32x256xf32>
    %215 = vector.broadcast %204 : vector<32x1xf32> to vector<32x256xf32>
    %216 = arith.mulf %214, %215 : vector<32x256xf32>
    %217 = arith.addf %203, %216 : vector<32x256xf32>
    %c0_72 = arith.constant 0 : index
    %c18 = arith.constant 18 : index
    %218 = vector.load %arg3[%c0_72, %c18] : memref<32x128xf32, #tpu.memory_space<vmem>>, vector<32x1xf32>
    %c1_i32_73 = arith.constant 1 : i32
    %219 = tpu.dynamic_rotate %174 by %c1_i32_73 dim 1 : vector<32x256xf32>, i32 -> vector<32x256xf32>
    %c1_i32_74 = arith.constant 1 : i32
    %220 = vector.broadcast %c1_i32_74 : i32 to vector<1x256xi32>
    %221 = arith.cmpi sge, %177, %220 : vector<1x256xi32>
    %cst_75 = arith.constant 0.000000e+00 : f32
    %222 = vector.shape_cast %221 : vector<1x256xi1> to vector<1x256xi1>
    %223 = vector.broadcast %222 : vector<1x256xi1> to vector<32x256xi1>
    %224 = vector.broadcast %cst_75 : f32 to vector<32x256xf32>
    %225 = arith.select %223, %219, %224 : vector<32x256xi1>, vector<32x256xf32>
    %226 = vector.broadcast %218 : vector<32x1xf32> to vector<32x256xf32>
    %227 = arith.mulf %225, %226 : vector<32x256xf32>
    %228 = arith.addf %217, %227 : vector<32x256xf32>
    %c0_76 = arith.constant 0 : index
    %c19 = arith.constant 19 : index
    %229 = vector.load %arg3[%c0_76, %c19] : memref<32x128xf32, #tpu.memory_space<vmem>>, vector<32x1xf32>
    %230 = vector.broadcast %229 : vector<32x1xf32> to vector<32x256xf32>
    %231 = arith.mulf %174, %230 : vector<32x256xf32>
    %232 = arith.addf %228, %231 : vector<32x256xf32>
    %c0_77 = arith.constant 0 : index
    %c20 = arith.constant 20 : index
    %233 = vector.load %arg3[%c0_77, %c20] : memref<32x128xf32, #tpu.memory_space<vmem>>, vector<32x1xf32>
    %c255_i32_78 = arith.constant 255 : i32
    %234 = tpu.dynamic_rotate %174 by %c255_i32_78 dim 1 : vector<32x256xf32>, i32 -> vector<32x256xf32>
    %c14_i32_79 = arith.constant 14 : i32
    %235 = vector.broadcast %c14_i32_79 : i32 to vector<1x256xi32>
    %236 = arith.cmpi sle, %177, %235 : vector<1x256xi32>
    %cst_80 = arith.constant 0.000000e+00 : f32
    %237 = vector.shape_cast %236 : vector<1x256xi1> to vector<1x256xi1>
    %238 = vector.broadcast %237 : vector<1x256xi1> to vector<32x256xi1>
    %239 = vector.broadcast %cst_80 : f32 to vector<32x256xf32>
    %240 = arith.select %238, %234, %239 : vector<32x256xi1>, vector<32x256xf32>
    %241 = vector.broadcast %233 : vector<32x1xf32> to vector<32x256xf32>
    %242 = arith.mulf %240, %241 : vector<32x256xf32>
    %243 = arith.addf %232, %242 : vector<32x256xf32>
    %c0_81 = arith.constant 0 : index
    %c21 = arith.constant 21 : index
    %244 = vector.load %arg3[%c0_81, %c21] : memref<32x128xf32, #tpu.memory_space<vmem>>, vector<32x1xf32>
    %c241_i32_82 = arith.constant 241 : i32
    %245 = tpu.dynamic_rotate %174 by %c241_i32_82 dim 1 : vector<32x256xf32>, i32 -> vector<32x256xf32>
    %c240_i32_83 = arith.constant 240 : i32
    %246 = vector.broadcast %c240_i32_83 : i32 to vector<1x256xi32>
    %247 = arith.cmpi slt, %175, %246 : vector<1x256xi32>
    %c1_i32_84 = arith.constant 1 : i32
    %248 = vector.broadcast %c1_i32_84 : i32 to vector<1x256xi32>
    %249 = arith.cmpi sge, %177, %248 : vector<1x256xi32>
    %250 = arith.andi %247, %249 : vector<1x256xi1>
    %cst_85 = arith.constant 0.000000e+00 : f32
    %251 = vector.shape_cast %250 : vector<1x256xi1> to vector<1x256xi1>
    %252 = vector.broadcast %251 : vector<1x256xi1> to vector<32x256xi1>
    %253 = vector.broadcast %cst_85 : f32 to vector<32x256xf32>
    %254 = arith.select %252, %245, %253 : vector<32x256xi1>, vector<32x256xf32>
    %255 = vector.broadcast %244 : vector<32x1xf32> to vector<32x256xf32>
    %256 = arith.mulf %254, %255 : vector<32x256xf32>
    %257 = arith.addf %243, %256 : vector<32x256xf32>
    %c0_86 = arith.constant 0 : index
    %c22 = arith.constant 22 : index
    %258 = vector.load %arg3[%c0_86, %c22] : memref<32x128xf32, #tpu.memory_space<vmem>>, vector<32x1xf32>
    %c240_i32_87 = arith.constant 240 : i32
    %259 = tpu.dynamic_rotate %174 by %c240_i32_87 dim 1 : vector<32x256xf32>, i32 -> vector<32x256xf32>
    %c240_i32_88 = arith.constant 240 : i32
    %260 = vector.broadcast %c240_i32_88 : i32 to vector<1x256xi32>
    %261 = arith.cmpi slt, %175, %260 : vector<1x256xi32>
    %cst_89 = arith.constant 0.000000e+00 : f32
    %262 = vector.shape_cast %261 : vector<1x256xi1> to vector<1x256xi1>
    %263 = vector.broadcast %262 : vector<1x256xi1> to vector<32x256xi1>
    %264 = vector.broadcast %cst_89 : f32 to vector<32x256xf32>
    %265 = arith.select %263, %259, %264 : vector<32x256xi1>, vector<32x256xf32>
    %266 = vector.broadcast %258 : vector<32x1xf32> to vector<32x256xf32>
    %267 = arith.mulf %265, %266 : vector<32x256xf32>
    %268 = arith.addf %257, %267 : vector<32x256xf32>
    %c0_90 = arith.constant 0 : index
    %c23 = arith.constant 23 : index
    %269 = vector.load %arg3[%c0_90, %c23] : memref<32x128xf32, #tpu.memory_space<vmem>>, vector<32x1xf32>
    %c239_i32_91 = arith.constant 239 : i32
    %270 = tpu.dynamic_rotate %174 by %c239_i32_91 dim 1 : vector<32x256xf32>, i32 -> vector<32x256xf32>
    %c240_i32_92 = arith.constant 240 : i32
    %271 = vector.broadcast %c240_i32_92 : i32 to vector<1x256xi32>
    %272 = arith.cmpi slt, %175, %271 : vector<1x256xi32>
    %c14_i32_93 = arith.constant 14 : i32
    %273 = vector.broadcast %c14_i32_93 : i32 to vector<1x256xi32>
    %274 = arith.cmpi sle, %177, %273 : vector<1x256xi32>
    %275 = arith.andi %272, %274 : vector<1x256xi1>
    %cst_94 = arith.constant 0.000000e+00 : f32
    %276 = vector.shape_cast %275 : vector<1x256xi1> to vector<1x256xi1>
    %277 = vector.broadcast %276 : vector<1x256xi1> to vector<32x256xi1>
    %278 = vector.broadcast %cst_94 : f32 to vector<32x256xf32>
    %279 = arith.select %277, %270, %278 : vector<32x256xi1>, vector<32x256xf32>
    %280 = vector.broadcast %269 : vector<32x1xf32> to vector<32x256xf32>
    %281 = arith.mulf %279, %280 : vector<32x256xf32>
    %282 = arith.addf %268, %281 : vector<32x256xf32>
    %283 = arith.truncf %282 : vector<32x256xf32> to vector<32x256xbf16>
    %c120 = arith.constant 120 : index
    %c0_95 = arith.constant 0 : index
    %284 = vector.load %arg2[%c120, %c0_95] : memref<456x128xbf16, #tpu.memory_space<vmem>>, vector<256x64xbf16>
    %cst_96 = arith.constant dense<0.000000e+00> : vector<32x64xf32>
    %285 = tpu.matmul %283, %284, %cst_96 {dimension_numbers = #tpu.dot_dimension_numbers<[1], [0], [0], [1], [0, 0, 1, 1], [], []>} : vector<32x256xbf16>, vector<256x64xbf16>, vector<32x64xf32> -> vector<32x64xf32>
    %c0_97 = arith.constant 0 : index
    %c24 = arith.constant 24 : index
    %286 = vector.load %arg3[%c0_97, %c24] : memref<32x128xf32, #tpu.memory_space<vmem>>, vector<32x1xf32>
    %287 = vector.broadcast %286 : vector<32x1xf32> to vector<32x64xf32>
    %288 = arith.addf %285, %287 : vector<32x64xf32>
    %289 = arith.negf %288 : vector<32x64xf32>
    %290 = math.exp %289 : vector<32x64xf32>
    %cst_98 = arith.constant 1.000000e+00 : f32
    %291 = vector.broadcast %cst_98 : f32 to vector<32x64xf32>
    %292 = arith.addf %291, %290 : vector<32x64xf32>
    %293 = arith.divf %291, %292 : vector<32x64xf32>
    %294 = arith.mulf %288, %293 : vector<32x64xf32>
    %cst_99 = arith.constant dense<0.000000e+00> : vector<32xf32>
    %295 = vector.multi_reduction <add>, %294, %cst_99 [1] : vector<32x64xf32> to vector<32xf32>
    %296 = vector.shape_cast %295 : vector<32xf32> to vector<32x1xf32>
    %cst_100 = arith.constant 6.400000e+01 : f32
    %297 = vector.broadcast %cst_100 : f32 to vector<32x1xf32>
    %298 = arith.divf %296, %297 : vector<32x1xf32>
    %c376 = arith.constant 376 : index
    %c0_101 = arith.constant 0 : index
    %299 = vector.load %arg2[%c376, %c0_101] : memref<456x128xbf16, #tpu.memory_space<vmem>>, vector<4x32xbf16>
    %300 = arith.truncf %298 : vector<32x1xf32> to vector<32x1xbf16>
    %cst_102 = arith.constant dense<0.000000e+00> : vector<4x1xf32>
    %301 = tpu.matmul %299, %300, %cst_102 {dimension_numbers = #tpu.dot_dimension_numbers<[1], [0], [0], [1], [0, 0, 1, 1], [], []>} : vector<4x32xbf16>, vector<32x1xbf16>, vector<4x1xf32> -> vector<4x1xf32>
    %c0_103 = arith.constant 0 : index
    %c25 = arith.constant 25 : index
    %302 = vector.load %arg3[%c0_103, %c25] : memref<32x128xf32, #tpu.memory_space<vmem>>, vector<4x1xf32>
    %303 = arith.addf %301, %302 : vector<4x1xf32>
    %304 = arith.negf %303 : vector<4x1xf32>
    %305 = math.exp %304 : vector<4x1xf32>
    %cst_104 = arith.constant 1.000000e+00 : f32
    %306 = vector.broadcast %cst_104 : f32 to vector<4x1xf32>
    %307 = arith.addf %306, %305 : vector<4x1xf32>
    %308 = arith.divf %306, %307 : vector<4x1xf32>
    %309 = arith.mulf %303, %308 : vector<4x1xf32>
    %c384 = arith.constant 384 : index
    %c0_105 = arith.constant 0 : index
    %310 = vector.load %arg2[%c384, %c0_105] : memref<456x128xbf16, #tpu.memory_space<vmem>>, vector<32x4xbf16>
    %311 = arith.truncf %309 : vector<4x1xf32> to vector<4x1xbf16>
    %cst_106 = arith.constant dense<0.000000e+00> : vector<32x1xf32>
    %312 = tpu.matmul %310, %311, %cst_106 {dimension_numbers = #tpu.dot_dimension_numbers<[1], [0], [0], [1], [0, 0, 1, 1], [], []>} : vector<32x4xbf16>, vector<4x1xbf16>, vector<32x1xf32> -> vector<32x1xf32>
    %c0_107 = arith.constant 0 : index
    %c26 = arith.constant 26 : index
    %313 = vector.load %arg3[%c0_107, %c26] : memref<32x128xf32, #tpu.memory_space<vmem>>, vector<32x1xf32>
    %314 = arith.addf %312, %313 : vector<32x1xf32>
    %315 = arith.negf %314 : vector<32x1xf32>
    %316 = math.exp %315 : vector<32x1xf32>
    %cst_108 = arith.constant 1.000000e+00 : f32
    %317 = vector.broadcast %cst_108 : f32 to vector<32x1xf32>
    %318 = arith.addf %317, %316 : vector<32x1xf32>
    %319 = arith.divf %317, %318 : vector<32x1xf32>
    %320 = vector.broadcast %319 : vector<32x1xf32> to vector<32x64xf32>
    %321 = arith.mulf %294, %320 : vector<32x64xf32>
    %c416 = arith.constant 416 : index
    %c0_109 = arith.constant 0 : index
    %322 = vector.load %arg2[%c416, %c0_109] : memref<456x128xbf16, #tpu.memory_space<vmem>>, vector<24x32xbf16>
    %323 = arith.truncf %321 : vector<32x64xf32> to vector<32x64xbf16>
    %cst_110 = arith.constant dense<0.000000e+00> : vector<24x64xf32>
    %324 = tpu.matmul %322, %323, %cst_110 {dimension_numbers = #tpu.dot_dimension_numbers<[1], [0], [0], [1], [0, 0, 1, 1], [], []>} : vector<24x32xbf16>, vector<32x64xbf16>, vector<24x64xf32> -> vector<24x64xf32>
    %c0_111 = arith.constant 0 : index
    %c27 = arith.constant 27 : index
    %325 = vector.load %arg3[%c0_111, %c27] : memref<32x128xf32, #tpu.memory_space<vmem>>, vector<24x1xf32>
    %326 = vector.broadcast %325 : vector<24x1xf32> to vector<24x64xf32>
    %327 = arith.addf %324, %326 : vector<24x64xf32>
    %cst_112 = arith.constant dense<0.000000e+00> : vector<24xf32>
    %328 = vector.multi_reduction <add>, %327, %cst_112 [1] : vector<24x64xf32> to vector<24xf32>
    %329 = vector.shape_cast %328 : vector<24xf32> to vector<24x1xf32>
    %cst_113 = arith.constant 6.400000e+01 : f32
    %330 = vector.broadcast %cst_113 : f32 to vector<24x1xf32>
    %331 = arith.divf %329, %330 : vector<24x1xf32>
    %c440 = arith.constant 440 : index
    %c0_114 = arith.constant 0 : index
    %332 = vector.load %arg2[%c440, %c0_114] : memref<456x128xbf16, #tpu.memory_space<vmem>>, vector<10x24xbf16>
    %333 = arith.truncf %331 : vector<24x1xf32> to vector<24x1xbf16>
    %cst_115 = arith.constant dense<0.000000e+00> : vector<10x1xf32>
    %334 = tpu.matmul %332, %333, %cst_115 {dimension_numbers = #tpu.dot_dimension_numbers<[1], [0], [0], [1], [0, 0, 1, 1], [], []>} : vector<10x24xbf16>, vector<24x1xbf16>, vector<10x1xf32> -> vector<10x1xf32>
    %c0_116 = arith.constant 0 : index
    %c28 = arith.constant 28 : index
    %335 = vector.load %arg3[%c0_116, %c28] : memref<32x128xf32, #tpu.memory_space<vmem>>, vector<10x1xf32>
    %336 = arith.addf %334, %335 : vector<10x1xf32>
    %337 = vector.shape_cast %336 : vector<10x1xf32> to vector<1x10x1xf32>
    %c0_117 = arith.constant 0 : index
    %c0_118 = arith.constant 0 : index
    %c0_119 = arith.constant 0 : index
    %338 = vector.load %arg4[%c0_117, %c0_118, %c0_119] : memref<1x10x1xf32, #tpu.memory_space<vmem>>, vector<1x10x1xf32>
    tpu.vector_store %arg4[%c0_117, %c0_118, %c0_119], %337 {strides = array<i32>} : memref<1x10x1xf32, #tpu.memory_space<vmem>>, vector<1x10x1xf32>,
    return
  }
  func.func @transform_0(%arg0: i32) -> (i32, i32, i32) {
    %c0_i32 = arith.constant 0 : i32
    %c0_i32_0 = arith.constant 0 : i32
    %c0_i32_1 = arith.constant 0 : i32
    return %arg0, %c0_i32, %c0_i32_0 : i32, i32, i32
  }
  func.func @transform_1(%arg0: i32) -> (i32, i32) {
    %c0_i32 = arith.constant 0 : i32
    %c0_i32_0 = arith.constant 0 : i32
    %c0_i32_1 = arith.constant 0 : i32
    return %c0_i32, %c0_i32_0 : i32, i32
  }
  func.func @transform_2(%arg0: i32) -> (i32, i32) {
    %c0_i32 = arith.constant 0 : i32
    %c0_i32_0 = arith.constant 0 : i32
    %c0_i32_1 = arith.constant 0 : i32
    return %c0_i32, %c0_i32_0 : i32, i32
  }
  func.func @transform_3(%arg0: i32) -> (i32, i32, i32) {
    %c0_i32 = arith.constant 0 : i32
    %c0_i32_0 = arith.constant 0 : i32
    %c0_i32_1 = arith.constant 0 : i32
    return %arg0, %c0_i32, %c0_i32_0 : i32, i32, i32
  }
}

</mosaic_0001>

<llo_original>
// kernel: tpu_custom_call.1
$region0: #{tpu_custom_call.1}
  #allocation0 [shape = 'u32[]', space=smem, size = 0x4, offset = 0x4, fixed_abs, tag = 'smem constant byte address 0x4 - core index']
  #allocation1 [shape = 'u32[144,128]{1,0:T(1,128)}', space=vmem, size = 0x12000, scoped, tag = 'internal scratch']
  %s0 = inlined_call_operand.hbm [shape: bf16[2,32,256], index: 0, kind: input, shape index: {}]
  %s1 = inlined_call_operand.hbm [shape: bf16[456,128], index: 1, kind: input, shape index: {}]
  %s2 = inlined_call_operand.hbm [shape: f32[32,128], index: 2, kind: input, shape index: {}]
  %s3 = inlined_call_operand.vmem [shape: f32[2,10,1], index: 3, kind: output, shape index: {}]
  %s4 = sld [smem:[#allocation0]]
  $region57: #{tpu_custom_call.1} parent=0
    _
  %s6 = ssub.s32 1, %s4
  %s7 = scalar_select 0, %s6, %s4
  $region1: #{tpu_custom_call.1} parent=0
    #allocation2 [shape = 'u8[32768]{0}', space=vmem, size = 0x8000, scoped, tag = 'input window, operand 0']
    #allocation3 [shape = 's32[2]{0}', space=sflag, size = 0x8, scoped, tag = 'scoped memory for tpu_custom_call.1']
    #allocation4 [shape = 'u8[116736]{0}', space=vmem, size = 0x1c800, scoped, tag = 'input window, operand 1, single buffered']
    #allocation5 [shape = 's32[1]{0}', space=sflag, size = 0x4, scoped, tag = 'scoped memory for tpu_custom_call.1']
    #allocation6 [shape = 'u8[16384]{0}', space=vmem, size = 0x4000, scoped, tag = 'input window, operand 2, single buffered']
    %8 = vsyncpa [#allocation3], 0
    %s9 = scalar_lea.sflag [#allocation3], 1
    %10 = vsyncpa %s9, 0
    %11 = vsyncpa [#allocation5], 0
    loop: start=0, step=1, limit=4
    $region2: #{tpu_custom_call.1} parent=1 // loop_pre_header
      _
    $region3: #{tpu_custom_call.1} parent=1 // loop_header
      %s13 = sphi 0, %s17
      %p14 = scmp.ge.s32.totalorder %s13, 4
      %s23 = sphi 0, %s25
      %s26 = sphi 0, %s23
      %s27 = sphi 0, %s26
      %s43 = sphi 0, %s27
      %s47 = sphi 0, %s47
      %s49 = sphi 0, %s47
      %s50 = sphi 0, %s49
      %s64 = sphi 0, %s50
      %s68 = sphi 0, %s68
      %s70 = sphi 0, %s68
      %s71 = sphi 0, %s70
      %s85 = sphi 0, %s71
      %s91 = sphi 0, %s93
      %s94 = sphi 0, %s91
      %s95 = sphi 0, %s94
      %s111 = sphi 0, %s95
    $region4: #{tpu_custom_call.1} parent=1 // loop_header_branch
      %16 = sbr.rel (%p14) target = $region8
    $region5: #{tpu_custom_call.1} parent=1 // loop_body
      %s18 = ssub.s32 %s13, 1
      %s19 = ssub.s32 %s13, 2
      %s20 = sadd.s32 %s13, 1
      %s21 = ssub.s32 %s13, %s20
      %p22 = scmp.eq.s32.totalorder %s21, 0
      %s24 = sadd.s32 %s23, 1
      %s25 = scalar_select %p22, %s23, %s24
      %p28 = pneg %p22
      %p29 = scmp.eq.s32.totalorder %s13, 1
      %p30 = por %p28, %p29
      %p31 = scmp.ne.s32.totalorder %s23, %s26
      %p32 = scmp.eq.s32.totalorder %s13, 0
      %p33 = por %p31, %p32
      %p34 = scmp.ne.s32.totalorder %s23, %s26
      %p35 = scmp.eq.s32.totalorder %s18, 1
      %p36 = por %p34, %p35
      %p37 = scmp.ne.s32.totalorder %s26, %s27
      %p38 = scmp.eq.s32.totalorder %s18, 0
      %p39 = por %p37, %p38
      %p40 = scmp.ne.s32.totalorder %s26, %s27
      %p41 = scmp.eq.s32.totalorder %s19, 1
      %p42 = por %p40, %p41
      %p44 = scmp.ne.s32.totalorder %s27, %s43
      %p45 = scmp.eq.s32.totalorder %s19, 0
      %p46 = por %p44, %p45
      %s48 = sadd.s32 %s47, 1
      %p51 = scmp.eq.s32.totalorder %s13, 1
      %p52 = scmp.ne.s32.totalorder %s47, %s49
      %p53 = scmp.eq.s32.totalorder %s13, 0
      %p54 = por %p52, %p53
      %p55 = scmp.ne.s32.totalorder %s47, %s49
      %p56 = scmp.eq.s32.totalorder %s18, 1
      %p57 = por %p55, %p56
      %p58 = scmp.ne.s32.totalorder %s49, %s50
      %p59 = scmp.eq.s32.totalorder %s18, 0
      %p60 = por %p58, %p59
      %p61 = scmp.ne.s32.totalorder %s49, %s50
      %p62 = scmp.eq.s32.totalorder %s19, 1
      %p63 = por %p61, %p62
      %p65 = scmp.ne.s32.totalorder %s50, %s64
      %p66 = scmp.eq.s32.totalorder %s19, 0
      %p67 = por %p65, %p66
      %s69 = sadd.s32 %s68, 1
      %p72 = scmp.eq.s32.totalorder %s13, 1
      %p73 = scmp.ne.s32.totalorder %s68, %s70
      %p74 = scmp.eq.s32.totalorder %s13, 0
      %p75 = por %p73, %p74
      %p76 = scmp.ne.s32.totalorder %s68, %s70
      %p77 = scmp.eq.s32.totalorder %s18, 1
      %p78 = por %p76, %p77
      %p79 = scmp.ne.s32.totalorder %s70, %s71
      %p80 = scmp.eq.s32.totalorder %s18, 0
      %p81 = por %p79, %p80
      %p82 = scmp.ne.s32.totalorder %s70, %s71
      %p83 = scmp.eq.s32.totalorder %s19, 1
      %p84 = por %p82, %p83
      %p86 = scmp.ne.s32.totalorder %s71, %s85
      %p87 = scmp.eq.s32.totalorder %s19, 0
      %p88 = por %p86, %p87
      %s89 = ssub.s32 %s13, %s20
      %p90 = scmp.eq.s32.totalorder %s89, 0
      %s92 = sadd.s32 %s91, 1
      %s93 = scalar_select %p90, %s91, %s92
      %p96 = pneg %p90
      %p97 = scmp.eq.s32.totalorder %s13, 1
      %p98 = por %p96, %p97
      %p99 = scmp.ne.s32.totalorder %s91, %s94
      %p100 = scmp.eq.s32.totalorder %s13, 0
      %p101 = por %p99, %p100
      %p102 = scmp.ne.s32.totalorder %s91, %s94
      %p103 = scmp.eq.s32.totalorder %s18, 1
      %p104 = por %p102, %p103
      %p105 = scmp.ne.s32.totalorder %s94, %s95
      %p106 = scmp.eq.s32.totalorder %s18, 0
      %p107 = por %p105, %p106
      %p108 = scmp.ne.s32.totalorder %s94, %s95
      %p109 = scmp.eq.s32.totalorder %s19, 1
      %p110 = por %p108, %p109
      %p112 = scmp.ne.s32.totalorder %s95, %s111
      %p113 = scmp.eq.s32.totalorder %s19, 0
      %p114 = por %p112, %p113
      %p115 = scmp.le.s32.totalorder 1, %s13
      %p116 = scmp.lt.s32.totalorder %s13, 3
      %p117 = pnand %p115, %p116
      %p118 = pneg %p117
      // Predicated region
      $region9: #{tpu_custom_call.1} parent=5 // pred_check
        _
      $region10: #{tpu_custom_call.1} parent=5 // pred_check_branch
        %120 = sbr.rel (%p117) target = $region12
      $region11: #{tpu_custom_call.1} parent=5 // pred_region
        %s121 = ssub.s32 %s13, 1
        // Predicated region
        $region13: #{tpu_custom_call.1} parent=11 // pred_check
          %p122 = pneg %p60
        $region14: #{tpu_custom_call.1} parent=11 // pred_check_branch
          %124 = sbr.rel (%p122) target = $region16
        $region15: #{tpu_custom_call.1} parent=11 // pred_region
          %s126 = ssub.s32 3648, 3648
          %127 = vsyncadd [#allocation5], %s126
          %s128 = sshll.u32 [#allocation4], 4
          %s129 = int_to_ptr.vmem [resolvable:$true] %s128
          %134 = dma.hbm_to_vmem [thread:$0]  %s1, 3648, %s129, [#allocation5], 64, 64, 4
        $region16: #{tpu_custom_call.1} parent=11 // pred_fallthru
          _
        // Predicated region
        $region17: #{tpu_custom_call.1} parent=11 // pred_check
          %p135 = pneg %p81
        $region18: #{tpu_custom_call.1} parent=11 // pred_check_branch
          %137 = sbr.rel (%p135) target = $region20
        $region19: #{tpu_custom_call.1} parent=11 // pred_region
          %s139 = ssub.s32 512, 512
          %140 = vsyncadd [#allocation5], %s139
          %s141 = sshll.u32 [#allocation6], 4
          %s142 = int_to_ptr.vmem [resolvable:$true] %s141
          %147 = dma.hbm_to_vmem [thread:$0]  %s2, 512, %s142, [#allocation5], 128, 128, 8
        $region20: #{tpu_custom_call.1} parent=11 // pred_fallthru
          _
      $region12: #{tpu_custom_call.1} parent=5 // pred_fallthru
        _
      %p148 = scmp.lt.s32.totalorder %s13, 2
      // Predicated region
      $region21: #{tpu_custom_call.1} parent=5 // pred_check
        %p149 = pneg %p148
      $region22: #{tpu_custom_call.1} parent=5 // pred_check_branch
        %151 = sbr.rel (%p149) target = $region24
      $region23: #{tpu_custom_call.1} parent=5 // pred_region
        // Predicated region
        $region25: #{tpu_custom_call.1} parent=23 // pred_check
          %p152 = pneg %p33
        $region26: #{tpu_custom_call.1} parent=23 // pred_check_branch
          %154 = sbr.rel (%p152) target = $region28
        $region27: #{tpu_custom_call.1} parent=23 // pred_region
          %s155 = sand.u32 %s23, 1
          %s156 = scalar_lea.sflag [#allocation3], %s155
          %s157 = sand.u32 %s23, 1
          %s158 = smul.addr %s157, 32
          %s159 = scalar_lea.vmem [#allocation2], %s158
          %s161 = ssub.s32 512, 512
          %162 = vsyncadd %s156, %s161
          %s163 = smul.addr %s13, 8
          %s164 = smul.addr %s163, 64
          %s165 = scalar_lea.hbm %s0, %s164
          %s166 = sshll.u32 %s159, 4
          %s167 = int_to_ptr.vmem [resolvable:$true] %s166
          %172 = dma.hbm_to_vmem [thread:$0]  %s165, 512, %s167, %s156, 128, 128, 8
        $region28: #{tpu_custom_call.1} parent=23 // pred_fallthru
          _
      $region24: #{tpu_custom_call.1} parent=5 // pred_fallthru
        _
      %p173 = scmp.le.s32.totalorder 1, %s13
      %p174 = scmp.lt.s32.totalorder %s13, 3
      %p175 = pnand %p173, %p174
      %p176 = pneg %p175
      // Predicated region
      $region29: #{tpu_custom_call.1} parent=5 // pred_check
        _
      $region30: #{tpu_custom_call.1} parent=5 // pred_check_branch
        %178 = sbr.rel (%p175) target = $region32
      $region31: #{tpu_custom_call.1} parent=5 // pred_region
        %s179 = ssub.s32 %s13, 1
        %s180 = sand.u32 %s26, 1
        %s181 = scalar_lea.sflag [#allocation3], %s180
        %s182 = sand.u32 %s26, 1
        %s183 = smul.addr %s182, 32
        %s184 = scalar_lea.vmem [#allocation2], %s183
        // Predicated region
        $region33: #{tpu_custom_call.1} parent=31 // pred_check
          %p185 = pneg %p39
        $region34: #{tpu_custom_call.1} parent=31 // pred_check_branch
          %187 = sbr.rel (%p185) target = $region36
        $region35: #{tpu_custom_call.1} parent=31 // pred_region
          %188 = dma.done %s181, 512
        $region36: #{tpu_custom_call.1} parent=31 // pred_fallthru
          _
        // Predicated region
        $region37: #{tpu_custom_call.1} parent=31 // pred_check
          %p189 = pneg %p60
        $region38: #{tpu_custom_call.1} parent=31 // pred_check_branch
          %191 = sbr.rel (%p189) target = $region40
        $region39: #{tpu_custom_call.1} parent=31 // pred_region
          %192 = dma.done [#allocation5], 3648
        $region40: #{tpu_custom_call.1} parent=31 // pred_fallthru
          _
        // Predicated region
        $region41: #{tpu_custom_call.1} parent=31 // pred_check
          %p193 = pneg %p81
        $region42: #{tpu_custom_call.1} parent=31 // pred_check_branch
          %195 = sbr.rel (%p193) target = $region44
        $region43: #{tpu_custom_call.1} parent=31 // pred_region
          %196 = dma.done [#allocation5], 512
        $region44: #{tpu_custom_call.1} parent=31 // pred_fallthru
          _
        %s197 = sand.u32 %s26, 1
        %s198 = scalar_lea.sflag [#allocation3], %s197
        %s199 = sand.u32 %s26, 1
        %s200 = smul.addr %s199, 32
        %s201 = scalar_lea.vmem [#allocation2], %s200
        %p202 = pneg %p39
        %p203 = pneg %p36
        %p204 = pneg %p60
        %p205 = pneg %p57
        %p206 = pneg %p81
        %p207 = pneg %p78
        %p208 = pneg %p107
        %p209 = pneg %p104
        %p210 = scmp.lt.s32.totalorder %s18, 1
        %s211 = scalar_select %p210, %s18, 1
        %s212 = smul.addr %s211, 2
        %s213 = smul.addr %s212, 8
        %s214 = scalar_lea.vmem %s3, %s213
        %p215 = scmp.lt.s32.totalorder %s18, 1
        %s216 = scalar_select %p215, %s18, 1
        %s217 = smul.addr %s216, 2
        %s218 = smul.addr %s217, 8
        %s219 = scalar_lea.vmem %s3, %s218
        %v221 = vld [vmem:[#allocation4] sm:$0xf]
        %v222 = vld [vmem:[#allocation4 + $0x4] sm:$0xf]
        %v223 = vld [vmem:[#allocation4 + $0x8] sm:$0xf]
        %v224 = vld [vmem:[#allocation4 + $0xc] sm:$0xf]
        %v225 = vld [vmem:[%s184] sm:$0xff]
        %v226 = vld [vmem:[%s184 + $0x8] sm:$0xff]
        %v227 = vld [vmem:[%s184 + $0x10] sm:$0xff]
        %v228 = vld [vmem:[%s184 + $0x18] sm:$0xff]
        %v229 = vld [vmem:[#allocation6] sm:$0xff]
        %v230 = vld [vmem:[#allocation6 + $0x8] sm:$0xff]
        %v231 = vld [vmem:[#allocation6 + $0x10] sm:$0xff]
        %v232 = vld [vmem:[#allocation6 + $0x18] sm:$0xff]
        %234 = vset.pattern.permute.xlu0 0
        %235 = vperm.xlu0 %234, %v229
        %v236 = vpop.permute.xlu0 %235
        %239 = vset.pattern.permute.xlu0 0
        %240 = vperm.xlu0 %239, %v230
        %v241 = vpop.permute.xlu0 %240
        %244 = vset.pattern.permute.xlu0 0
        %245 = vperm.xlu0 %244, %v231
        %v246 = vpop.permute.xlu0 %245
        %249 = vset.pattern.permute.xlu0 0
        %250 = vperm.xlu0 %249, %v232
        %v251 = vpop.permute.xlu0 %250
        %v257 = vunpack.c.l.b16 %v221
        %v258 = vunpack.c.l.b16 %v222
        %v259 = vunpack.c.l.b16 %v223
        %v260 = vunpack.c.l.b16 %v224
        %v261 = vpack.c.b16 %v258, %v257
        %v262 = vpack.c.b16 %v260, %v259
        %v267 = vunpack.c.l.b16 %v225
        %v268 = vunpack.c.h.b16 %v225
        %v269 = vunpack.c.l.b16 %v226
        %v270 = vunpack.c.h.b16 %v226
        %v271 = vunpack.c.l.b16 %v227
        %v272 = vunpack.c.h.b16 %v227
        %v273 = vunpack.c.l.b16 %v228
        %v274 = vunpack.c.h.b16 %v228
        %v275 = vpack.c.b16 %v269, %v267
        %v276 = vpack.c.b16 %v270, %v268
        %v277 = vpack.c.b16 %v273, %v271
        %v278 = vpack.c.b16 %v274, %v272
        %vm283 = vcmask 261120
        %v285 = vsel %vm283, %v261, 0
        %v288 = vsel %vm283, %v262, 0
        %290 = vmatprep.subr.bf16.mxu0 0
        %291 = vmatpush1.bf16.msra.mxu0 0
        %292 = vmatprep.subr.bf16.mxu0 0
        %293 = vmatpush1.bf16.msra.mxu0 0
        %294 = vmatprep.subr.bf16.mxu0 0
        %295 = vmatpush1.bf16.msra.mxu0 0
        %296 = vmatprep.subr.bf16.mxu0 0
        %297 = vmatpush1.bf16.msra.mxu0 0
        %298 = vmatprep.subr.bf16.mxu0 0
        %299 = vmatpush1.bf16.msra.mxu0 0
        %300 = vmatprep.subr.bf16.mxu0 0
        %301 = vmatpush1.bf16.msra.mxu0 0
        %302 = vmatprep.subr.bf16.mxu0 %v278
        %303 = vmatpush1.bf16.msra.mxu0 %v277
        %304 = vmatprep.subr.bf16.mxu0 %v276
        %305 = vmatpush1.bf16.msra.mxu0 %v275
        %306 = vmatprep.subr.bf16.mxu0 0
        %307 = vmatpush2.bf16.msra.mxu0 0
        %308 = vmatprep.subr.bf16.mxu0 0
        %309 = vmatpush2.bf16.msra.mxu0 0
        %310 = vmatprep.subr.bf16.mxu0 0
        %311 = vmatpush2.bf16.msra.mxu0 0
        %312 = vmatprep.subr.bf16.mxu0 0
        %313 = vmatpush2.bf16.msra.mxu0 0
        %314 = vmatprep.subr.bf16.mxu0 0
        %315 = vmatpush2.bf16.msra.mxu0 0
        %316 = vmatprep.subr.bf16.mxu0 0
        %317 = vmatpush2.bf16.msra.mxu0 0
        %318 = vmatprep.subr.bf16.mxu0 0
        %319 = vmatpush2.bf16.msra.mxu0 0
        %320 = vmatprep.subr.bf16.mxu0 0
        %321 = vmatpush2.bf16.msra.mxu0 0
        %322 = vmatprep.mubr.bf16.mxu0 0
        %323 = vmatmul.mubr.bf16.gmra.mxu0 %v285
        %v324 = vpop.f32.mrf.mxu0
        %v325 = vadd.f32 %v236, %v324
        %v326 = vpop.f32.mrf.mxu0
        %v327 = vadd.f32 %v236, %v326
        %v328 = vpop.f32.mrf.mxu0
        %v329 = vadd.f32 %v241, %v328
        %v330 = vpop.f32.mrf.mxu0
        %v331 = vadd.f32 %v241, %v330
        %332 = vmatprep.mubr.bf16.mxu0 0
        %333 = vmatmul.mubr.bf16.gmra.mxu0 %v288
        %v334 = vpop.f32.mrf.mxu0
        %v335 = vadd.f32 %v246, %v334
        %v336 = vpop.f32.mrf.mxu0
        %v337 = vadd.f32 %v246, %v336
        %v338 = vpop.f32.mrf.mxu0
        %v339 = vadd.f32 %v251, %v338
        %v340 = vpop.f32.mrf.mxu0
        %v341 = vadd.f32 %v251, %v340
        %342 = vdwg.mxu0
        %v343 = vxor.u32 %v325, 2147483648
        %v344 = vxor.u32 %v327, 2147483648
        %v345 = vxor.u32 %v329, 2147483648
        %v346 = vxor.u32 %v331, 2147483648
        %v347 = vxor.u32 %v335, 2147483648
        %v348 = vxor.u32 %v337, 2147483648
        %v349 = vxor.u32 %v339, 2147483648
        %v350 = vxor.u32 %v341, 2147483648
        %v351 = vmul.f32 %v343, 1.442695
        %v352 = vpow.pop %v351
        %v353 = vmul.f32 %v344, 1.442695
        %v354 = vpow.pop %v353
        %v355 = vmul.f32 %v345, 1.442695
        %v356 = vpow.pop %v355
        %v357 = vmul.f32 %v346, 1.442695
        %v358 = vpow.pop %v357
        %v359 = vmul.f32 %v347, 1.442695
        %v360 = vpow.pop %v359
        %v361 = vmul.f32 %v348, 1.442695
        %v362 = vpow.pop %v361
        %v363 = vmul.f32 %v349, 1.442695
        %v364 = vpow.pop %v363
        %v365 = vmul.f32 %v350, 1.442695
        %v366 = vpow.pop %v365
        %v367 = vadd.f32 %v352, 1.0
        %v368 = vadd.f32 %v354, 1.0
        %v369 = vadd.f32 %v356, 1.0
        %v370 = vadd.f32 %v358, 1.0
        %v371 = vadd.f32 %v360, 1.0
        %v372 = vadd.f32 %v362, 1.0
        %v373 = vadd.f32 %v364, 1.0
        %v374 = vadd.f32 %v366, 1.0
        %v375 = vrcp.pop %v367
        %v376 = vmul.f32 1.0, %v375
        %v377 = vrcp.pop %v368
        %v378 = vmul.f32 1.0, %v377
        %v379 = vrcp.pop %v369
        %v380 = vmul.f32 1.0, %v379
        %v381 = vrcp.pop %v370
        %v382 = vmul.f32 1.0, %v381
        %v383 = vrcp.pop %v371
        %v384 = vmul.f32 1.0, %v383
        %v385 = vrcp.pop %v372
        %v386 = vmul.f32 1.0, %v385
        %v387 = vrcp.pop %v373
        %v388 = vmul.f32 1.0, %v387
        %v389 = vrcp.pop %v374
        %v390 = vmul.f32 1.0, %v389
        %v391 = vmul.f32 %v325, %v376
        %v392 = vmul.f32 %v327, %v378
        %v393 = vmul.f32 %v329, %v380
        %v394 = vmul.f32 %v331, %v382
        %v395 = vmul.f32 %v335, %v384
        %v396 = vmul.f32 %v337, %v386
        %v397 = vmul.f32 %v339, %v388
        %v398 = vmul.f32 %v341, %v390
        %v399 = vlaneseq
        %v400 = vand.u32 %v399, 127
        %v401 = vadd.s32 %v400, 128
        %v402 = vand.u32 %v400, 15
        %v403 = vand.u32 %v401, 15
        %404 = vrot.lane.b32.xlu0 %v391, 17
        %v405 = vpop.permute.xlu0 %404
        %406 = vrot.lane.b32.xlu0 %v393, 17
        %v407 = vpop.permute.xlu0 %406
        %408 = vrot.lane.b32.xlu0 %v395, 17
        %v409 = vpop.permute.xlu0 %408
        %410 = vrot.lane.b32.xlu0 %v397, 17
        %v411 = vpop.permute.xlu0 %410
        %412 = vrot.lane.b32.xlu0 %v392, 17
        %v413 = vpop.permute.xlu0 %412
        %414 = vrot.lane.b32.xlu0 %v394, 17
        %v415 = vpop.permute.xlu0 %414
        %416 = vrot.lane.b32.xlu0 %v396, 17
        %v417 = vpop.permute.xlu0 %416
        %418 = vrot.lane.b32.xlu0 %v398, 17
        %v419 = vpop.permute.xlu0 %418
        %vm420 = vcmp.lt.s32.totalorder %v400, 17
        %v421 = vsel %vm420, %v405, %v413
        %v422 = vsel %vm420, %v407, %v415
        %v423 = vsel %vm420, %v409, %v417
        %v424 = vsel %vm420, %v411, %v419
        %v425 = vsel %vm420, %v413, %v405
        %v426 = vsel %vm420, %v415, %v407
        %v427 = vsel %vm420, %v417, %v409
        %v428 = vsel %vm420, %v419, %v411
        %vm429 = vcmp.ge.s32.totalorder %v400, 16
        %vm430 = vcmp.ge.s32.totalorder %v401, 16
        %vm431 = vcmp.ge.s32.totalorder %v402, 1
        %vm432 = vcmp.ge.s32.totalorder %v403, 1
        %vm433 = vmand %vm429, %vm431
        %vm434 = vmand %vm430, %vm432
        %v435 = vsel %vm433, 1, 0
        %v436 = vsel %vm434, 1, 0
        %vm437 = vcmp.eq.s32.totalorder %v435, 1
        %vm438 = vcmp.eq.s32.totalorder %v436, 1
        %v439 = vsel %vm437, %v425, 0.0
        %v440 = vsel %vm438, %v421, 0.0
        %v441 = vsel %vm437, %v426, 0.0
        %v442 = vsel %vm438, %v422, 0.0
        %v443 = vsel %vm437, %v427, 0.0
        %v444 = vsel %vm438, %v423, 0.0
        %v445 = vsel %vm437, %v428, 0.0
        %v446 = vsel %vm438, %v424, 0.0
        %447 = vset.pattern.permute.xlu0 1
        %448 = vperm.xlu0 %447, %v229
        %v449 = vpop.permute.xlu0 %448
        %451 = vset.pattern.permute.xlu0 1
        %452 = vperm.xlu0 %451, %v230
        %v453 = vpop.permute.xlu0 %452
        %455 = vset.pattern.permute.xlu0 1
        %456 = vperm.xlu0 %455, %v231
        %v457 = vpop.permute.xlu0 %456
        %459 = vset.pattern.permute.xlu0 1
        %460 = vperm.xlu0 %459, %v232
        %v461 = vpop.permute.xlu0 %460
        %v463 = vmul.f32 %v439, %v449
        %v464 = vmul.f32 %v440, %v449
        %v465 = vmul.f32 %v441, %v453
        %v466 = vmul.f32 %v442, %v453
        %v467 = vmul.f32 %v443, %v457
        %v468 = vmul.f32 %v444, %v457
        %v469 = vmul.f32 %v445, %v461
        %v470 = vmul.f32 %v446, %v461
        %v471 = vadd.f32 %v463, 0.0
        %v472 = vadd.f32 %v464, 0.0
        %v473 = vadd.f32 %v465, 0.0
        %v474 = vadd.f32 %v466, 0.0
        %v475 = vadd.f32 %v467, 0.0
        %v476 = vadd.f32 %v468, 0.0
        %v477 = vadd.f32 %v469, 0.0
        %v478 = vadd.f32 %v470, 0.0
        %479 = vrot.lane.b32.xlu0 %v391, 16
        %v480 = vpop.permute.xlu0 %479
        %481 = vrot.lane.b32.xlu0 %v393, 16
        %v482 = vpop.permute.xlu0 %481
        %483 = vrot.lane.b32.xlu0 %v395, 16
        %v484 = vpop.permute.xlu0 %483
        %485 = vrot.lane.b32.xlu0 %v397, 16
        %v486 = vpop.permute.xlu0 %485
        %487 = vrot.lane.b32.xlu0 %v392, 16
        %v488 = vpop.permute.xlu0 %487
        %489 = vrot.lane.b32.xlu0 %v394, 16
        %v490 = vpop.permute.xlu0 %489
        %491 = vrot.lane.b32.xlu0 %v396, 16
        %v492 = vpop.permute.xlu0 %491
        %493 = vrot.lane.b32.xlu0 %v398, 16
        %v494 = vpop.permute.xlu0 %493
        %vm495 = vcmp.lt.s32.totalorder %v400, 16
        %v496 = vsel %vm495, %v480, %v488
        %v497 = vsel %vm495, %v482, %v490
        %v498 = vsel %vm495, %v484, %v492
        %v499 = vsel %vm495, %v486, %v494
        %v500 = vsel %vm495, %v488, %v480
        %v501 = vsel %vm495, %v490, %v482
        %v502 = vsel %vm495, %v492, %v484
        %v503 = vsel %vm495, %v494, %v486
        %v504 = vsel %vm429, 1, 0
        %v505 = vsel %vm430, 1, 0
        %vm506 = vcmp.eq.s32.totalorder %v504, 1
        %vm507 = vcmp.eq.s32.totalorder %v505, 1
        %v508 = vsel %vm506, %v500, 0.0
        %v509 = vsel %vm507, %v496, 0.0
        %v510 = vsel %vm506, %v501, 0.0
        %v511 = vsel %vm507, %v497, 0.0
        %v512 = vsel %vm506, %v502, 0.0
        %v513 = vsel %vm507, %v498, 0.0
        %v514 = vsel %vm506, %v503, 0.0
        %v515 = vsel %vm507, %v499, 0.0
        %516 = vset.pattern.permute.xlu0 2
        %517 = vperm.xlu0 %516, %v229
        %v518 = vpop.permute.xlu0 %517
        %520 = vset.pattern.permute.xlu0 2
        %521 = vperm.xlu0 %520, %v230
        %v522 = vpop.permute.xlu0 %521
        %524 = vset.pattern.permute.xlu0 2
        %525 = vperm.xlu0 %524, %v231
        %v526 = vpop.permute.xlu0 %525
        %528 = vset.pattern.permute.xlu0 2
        %529 = vperm.xlu0 %528, %v232
        %v530 = vpop.permute.xlu0 %529
        %v532 = vmul.f32 %v508, %v518
        %v533 = vmul.f32 %v509, %v518
        %v534 = vmul.f32 %v510, %v522
        %v535 = vmul.f32 %v511, %v522
        %v536 = vmul.f32 %v512, %v526
        %v537 = vmul.f32 %v513, %v526
        %v538 = vmul.f32 %v514, %v530
        %v539 = vmul.f32 %v515, %v530
        %v540 = vadd.f32 %v471, %v532
        %v541 = vadd.f32 %v472, %v533
        %v542 = vadd.f32 %v473, %v534
        %v543 = vadd.f32 %v474, %v535
        %v544 = vadd.f32 %v475, %v536
        %v545 = vadd.f32 %v476, %v537
        %v546 = vadd.f32 %v477, %v538
        %v547 = vadd.f32 %v478, %v539
        %548 = vrot.lane.b32.xlu0 %v391, 15
        %v549 = vpop.permute.xlu0 %548
        %550 = vrot.lane.b32.xlu0 %v393, 15
        %v551 = vpop.permute.xlu0 %550
        %552 = vrot.lane.b32.xlu0 %v395, 15
        %v553 = vpop.permute.xlu0 %552
        %554 = vrot.lane.b32.xlu0 %v397, 15
        %v555 = vpop.permute.xlu0 %554
        %556 = vrot.lane.b32.xlu0 %v392, 15
        %v557 = vpop.permute.xlu0 %556
        %558 = vrot.lane.b32.xlu0 %v394, 15
        %v559 = vpop.permute.xlu0 %558
        %560 = vrot.lane.b32.xlu0 %v396, 15
        %v561 = vpop.permute.xlu0 %560
        %562 = vrot.lane.b32.xlu0 %v398, 15
        %v563 = vpop.permute.xlu0 %562
        %vm564 = vcmp.lt.s32.totalorder %v400, 15
        %v565 = vsel %vm564, %v549, %v557
        %v566 = vsel %vm564, %v551, %v559
        %v567 = vsel %vm564, %v553, %v561
        %v568 = vsel %vm564, %v555, %v563
        %v569 = vsel %vm564, %v557, %v549
        %v570 = vsel %vm564, %v559, %v551
        %v571 = vsel %vm564, %v561, %v553
        %v572 = vsel %vm564, %v563, %v555
        %vm573 = vcmp.le.s32.totalorder %v402, 14
        %vm574 = vcmp.le.s32.totalorder %v403, 14
        %vm575 = vmand %vm429, %vm573
        %vm576 = vmand %vm430, %vm574
        %v577 = vsel %vm575, 1, 0
        %v578 = vsel %vm576, 1, 0
        %vm579 = vcmp.eq.s32.totalorder %v577, 1
        %vm580 = vcmp.eq.s32.totalorder %v578, 1
        %v581 = vsel %vm579, %v569, 0.0
        %v582 = vsel %vm580, %v565, 0.0
        %v583 = vsel %vm579, %v570, 0.0
        %v584 = vsel %vm580, %v566, 0.0
        %v585 = vsel %vm579, %v571, 0.0
        %v586 = vsel %vm580, %v567, 0.0
        %v587 = vsel %vm579, %v572, 0.0
        %v588 = vsel %vm580, %v568, 0.0
        %589 = vset.pattern.permute.xlu0 3
        %590 = vperm.xlu0 %589, %v229
        %v591 = vpop.permute.xlu0 %590
        %593 = vset.pattern.permute.xlu0 3
        %594 = vperm.xlu0 %593, %v230
        %v595 = vpop.permute.xlu0 %594
        %597 = vset.pattern.permute.xlu0 3
        %598 = vperm.xlu0 %597, %v231
        %v599 = vpop.permute.xlu0 %598
        %601 = vset.pattern.permute.xlu0 3
        %602 = vperm.xlu0 %601, %v232
        %v603 = vpop.permute.xlu0 %602
        %v605 = vmul.f32 %v581, %v591
        %v606 = vmul.f32 %v582, %v591
        %v607 = vmul.f32 %v583, %v595
        %v608 = vmul.f32 %v584, %v595
        %v609 = vmul.f32 %v585, %v599
        %v610 = vmul.f32 %v586, %v599
        %v611 = vmul.f32 %v587, %v603
        %v612 = vmul.f32 %v588, %v603
        %v613 = vadd.f32 %v540, %v605
        %v614 = vadd.f32 %v541, %v606
        %v615 = vadd.f32 %v542, %v607
        %v616 = vadd.f32 %v543, %v608
        %v617 = vadd.f32 %v544, %v609
        %v618 = vadd.f32 %v545, %v610
        %v619 = vadd.f32 %v546, %v611
        %v620 = vadd.f32 %v547, %v612
        %621 = vrot.lane.b32.xlu0 %v391, 1
        %v622 = vpop.permute.xlu0 %621
        %623 = vrot.lane.b32.xlu0 %v393, 1
        %v624 = vpop.permute.xlu0 %623
        %625 = vrot.lane.b32.xlu0 %v395, 1
        %v626 = vpop.permute.xlu0 %625
        %627 = vrot.lane.b32.xlu0 %v397, 1
        %v628 = vpop.permute.xlu0 %627
        %629 = vrot.lane.b32.xlu0 %v392, 1
        %v630 = vpop.permute.xlu0 %629
        %631 = vrot.lane.b32.xlu0 %v394, 1
        %v632 = vpop.permute.xlu0 %631
        %633 = vrot.lane.b32.xlu0 %v396, 1
        %v634 = vpop.permute.xlu0 %633
        %635 = vrot.lane.b32.xlu0 %v398, 1
        %v636 = vpop.permute.xlu0 %635
        %vm637 = vcmp.lt.s32.totalorder %v400, 1
        %v638 = vsel %vm637, %v622, %v630
        %v639 = vsel %vm637, %v624, %v632
        %v640 = vsel %vm637, %v626, %v634
        %v641 = vsel %vm637, %v628, %v636
        %v642 = vsel %vm637, %v630, %v622
        %v643 = vsel %vm637, %v632, %v624
        %v644 = vsel %vm637, %v634, %v626
        %v645 = vsel %vm637, %v636, %v628
        %v646 = vsel %vm431, 1, 0
        %v647 = vsel %vm432, 1, 0
        %vm648 = vcmp.eq.s32.totalorder %v646, 1
        %vm649 = vcmp.eq.s32.totalorder %v647, 1
        %v650 = vsel %vm648, %v642, 0.0
        %v651 = vsel %vm649, %v638, 0.0
        %v652 = vsel %vm648, %v643, 0.0
        %v653 = vsel %vm649, %v639, 0.0
        %v654 = vsel %vm648, %v644, 0.0
        %v655 = vsel %vm649, %v640, 0.0
        %v656 = vsel %vm648, %v645, 0.0
        %v657 = vsel %vm649, %v641, 0.0
        %658 = vset.pattern.permute.xlu0 4
        %659 = vperm.xlu0 %658, %v229
        %v660 = vpop.permute.xlu0 %659
        %662 = vset.pattern.permute.xlu0 4
        %663 = vperm.xlu0 %662, %v230
        %v664 = vpop.permute.xlu0 %663
        %666 = vset.pattern.permute.xlu0 4
        %667 = vperm.xlu0 %666, %v231
        %v668 = vpop.permute.xlu0 %667
        %670 = vset.pattern.permute.xlu0 4
        %671 = vperm.xlu0 %670, %v232
        %v672 = vpop.permute.xlu0 %671
        %v674 = vmul.f32 %v650, %v660
        %v675 = vmul.f32 %v651, %v660
        %v676 = vmul.f32 %v652, %v664
        %v677 = vmul.f32 %v653, %v664
        %v678 = vmul.f32 %v654, %v668
        %v679 = vmul.f32 %v655, %v668
        %v680 = vmul.f32 %v656, %v672
        %v681 = vmul.f32 %v657, %v672
        %v682 = vadd.f32 %v613, %v674
        %v683 = vadd.f32 %v614, %v675
        %v684 = vadd.f32 %v615, %v676
        %v685 = vadd.f32 %v616, %v677
        %v686 = vadd.f32 %v617, %v678
        %v687 = vadd.f32 %v618, %v679
        %v688 = vadd.f32 %v619, %v680
        %v689 = vadd.f32 %v620, %v681
        %690 = vset.pattern.permute.xlu0 5
        %691 = vperm.xlu0 %690, %v229
        %v692 = vpop.permute.xlu0 %691
        %694 = vset.pattern.permute.xlu0 5
        %695 = vperm.xlu0 %694, %v230
        %v696 = vpop.permute.xlu0 %695
        %698 = vset.pattern.permute.xlu0 5
        %699 = vperm.xlu0 %698, %v231
        %v700 = vpop.permute.xlu0 %699
        %702 = vset.pattern.permute.xlu0 5
        %703 = vperm.xlu0 %702, %v232
        %v704 = vpop.permute.xlu0 %703
        %v706 = vmul.f32 %v391, %v692
        %v707 = vmul.f32 %v392, %v692
        %v708 = vmul.f32 %v393, %v696
        %v709 = vmul.f32 %v394, %v696
        %v710 = vmul.f32 %v395, %v700
        %v711 = vmul.f32 %v396, %v700
        %v712 = vmul.f32 %v397, %v704
        %v713 = vmul.f32 %v398, %v704
        %v714 = vadd.f32 %v682, %v706
        %v715 = vadd.f32 %v683, %v707
        %v716 = vadd.f32 %v684, %v708
        %v717 = vadd.f32 %v685, %v709
        %v718 = vadd.f32 %v686, %v710
        %v719 = vadd.f32 %v687, %v711
        %v720 = vadd.f32 %v688, %v712
        %v721 = vadd.f32 %v689, %v713
        %722 = vrot.lane.b32.xlu0 %v391, 127
        %v723 = vpop.permute.xlu0 %722
        %724 = vrot.lane.b32.xlu0 %v393, 127
        %v725 = vpop.permute.xlu0 %724
        %726 = vrot.lane.b32.xlu0 %v395, 127
        %v727 = vpop.permute.xlu0 %726
        %728 = vrot.lane.b32.xlu0 %v397, 127
        %v729 = vpop.permute.xlu0 %728
        %730 = vrot.lane.b32.xlu0 %v392, 127
        %v731 = vpop.permute.xlu0 %730
        %732 = vrot.lane.b32.xlu0 %v394, 127
        %v733 = vpop.permute.xlu0 %732
        %734 = vrot.lane.b32.xlu0 %v396, 127
        %v735 = vpop.permute.xlu0 %734
        %736 = vrot.lane.b32.xlu0 %v398, 127
        %v737 = vpop.permute.xlu0 %736
        %vm738 = vcmp.lt.s32.totalorder %v400, 127
        %v739 = vsel %vm738, %v723, %v731
        %v740 = vsel %vm738, %v725, %v733
        %v741 = vsel %vm738, %v727, %v735
        %v742 = vsel %vm738, %v729, %v737
        %v743 = vsel %vm738, %v731, %v723
        %v744 = vsel %vm738, %v733, %v725
        %v745 = vsel %vm738, %v735, %v727
        %v746 = vsel %vm738, %v737, %v729
        %v747 = vsel %vm573, 1, 0
        %v748 = vsel %vm574, 1, 0
        %vm749 = vcmp.eq.s32.totalorder %v747, 1
        %vm750 = vcmp.eq.s32.totalorder %v748, 1
        %v751 = vsel %vm749, %v739, 0.0
        %v752 = vsel %vm750, %v743, 0.0
        %v753 = vsel %vm749, %v740, 0.0
        %v754 = vsel %vm750, %v744, 0.0
        %v755 = vsel %vm749, %v741, 0.0
        %v756 = vsel %vm750, %v745, 0.0
        %v757 = vsel %vm749, %v742, 0.0
        %v758 = vsel %vm750, %v746, 0.0
        %759 = vset.pattern.permute.xlu0 6
        %760 = vperm.xlu0 %759, %v229
        %v761 = vpop.permute.xlu0 %760
        %763 = vset.pattern.permute.xlu0 6
        %764 = vperm.xlu0 %763, %v230
        %v765 = vpop.permute.xlu0 %764
        %767 = vset.pattern.permute.xlu0 6
        %768 = vperm.xlu0 %767, %v231
        %v769 = vpop.permute.xlu0 %768
        %771 = vset.pattern.permute.xlu0 6
        %772 = vperm.xlu0 %771, %v232
        %v773 = vpop.permute.xlu0 %772
        %v775 = vmul.f32 %v751, %v761
        %v776 = vmul.f32 %v752, %v761
        %v777 = vmul.f32 %v753, %v765
        %v778 = vmul.f32 %v754, %v765
        %v779 = vmul.f32 %v755, %v769
        %v780 = vmul.f32 %v756, %v769
        %v781 = vmul.f32 %v757, %v773
        %v782 = vmul.f32 %v758, %v773
        %v783 = vadd.f32 %v714, %v775
        %v784 = vadd.f32 %v715, %v776
        %v785 = vadd.f32 %v716, %v777
        %v786 = vadd.f32 %v717, %v778
        %v787 = vadd.f32 %v718, %v779
        %v788 = vadd.f32 %v719, %v780
        %v789 = vadd.f32 %v720, %v781
        %v790 = vadd.f32 %v721, %v782
        %791 = vrot.lane.b32.xlu0 %v391, 113
        %v792 = vpop.permute.xlu0 %791
        %793 = vrot.lane.b32.xlu0 %v393, 113
        %v794 = vpop.permute.xlu0 %793
        %795 = vrot.lane.b32.xlu0 %v395, 113
        %v796 = vpop.permute.xlu0 %795
        %797 = vrot.lane.b32.xlu0 %v397, 113
        %v798 = vpop.permute.xlu0 %797
        %799 = vrot.lane.b32.xlu0 %v392, 113
        %v800 = vpop.permute.xlu0 %799
        %801 = vrot.lane.b32.xlu0 %v394, 113
        %v802 = vpop.permute.xlu0 %801
        %803 = vrot.lane.b32.xlu0 %v396, 113
        %v804 = vpop.permute.xlu0 %803
        %805 = vrot.lane.b32.xlu0 %v398, 113
        %v806 = vpop.permute.xlu0 %805
        %vm807 = vcmp.lt.s32.totalorder %v400, 113
        %v808 = vsel %vm807, %v792, %v800
        %v809 = vsel %vm807, %v794, %v802
        %v810 = vsel %vm807, %v796, %v804
        %v811 = vsel %vm807, %v798, %v806
        %v812 = vsel %vm807, %v800, %v792
        %v813 = vsel %vm807, %v802, %v794
        %v814 = vsel %vm807, %v804, %v796
        %v815 = vsel %vm807, %v806, %v798
        %vm816 = vcmp.lt.s32.totalorder %v400, 240
        %vm817 = vcmp.lt.s32.totalorder %v401, 240
        %vm818 = vmand %vm816, %vm431
        %vm819 = vmand %vm817, %vm432
        %v820 = vsel %vm818, 1, 0
        %v821 = vsel %vm819, 1, 0
        %vm822 = vcmp.eq.s32.totalorder %v820, 1
        %vm823 = vcmp.eq.s32.totalorder %v821, 1
        %v824 = vsel %vm822, %v808, 0.0
        %v825 = vsel %vm823, %v812, 0.0
        %v826 = vsel %vm822, %v809, 0.0
        %v827 = vsel %vm823, %v813, 0.0
        %v828 = vsel %vm822, %v810, 0.0
        %v829 = vsel %vm823, %v814, 0.0
        %v830 = vsel %vm822, %v811, 0.0
        %v831 = vsel %vm823, %v815, 0.0
        %832 = vset.pattern.permute.xlu0 7
        %833 = vperm.xlu0 %832, %v229
        %v834 = vpop.permute.xlu0 %833
        %836 = vset.pattern.permute.xlu0 7
        %837 = vperm.xlu0 %836, %v230
        %v838 = vpop.permute.xlu0 %837
        %840 = vset.pattern.permute.xlu0 7
        %841 = vperm.xlu0 %840, %v231
        %v842 = vpop.permute.xlu0 %841
        %844 = vset.pattern.permute.xlu0 7
        %845 = vperm.xlu0 %844, %v232
        %v846 = vpop.permute.xlu0 %845
        %v848 = vmul.f32 %v824, %v834
        %v849 = vmul.f32 %v825, %v834
        %v850 = vmul.f32 %v826, %v838
        %v851 = vmul.f32 %v827, %v838
        %v852 = vmul.f32 %v828, %v842
        %v853 = vmul.f32 %v829, %v842
        %v854 = vmul.f32 %v830, %v846
        %v855 = vmul.f32 %v831, %v846
        %v856 = vadd.f32 %v783, %v848
        %v857 = vadd.f32 %v784, %v849
        %v858 = vadd.f32 %v785, %v850
        %v859 = vadd.f32 %v786, %v851
        %v860 = vadd.f32 %v787, %v852
        %v861 = vadd.f32 %v788, %v853
        %v862 = vadd.f32 %v789, %v854
        %v863 = vadd.f32 %v790, %v855
        %864 = vrot.lane.b32.xlu0 %v391, 112
        %v865 = vpop.permute.xlu0 %864
        %866 = vrot.lane.b32.xlu0 %v393, 112
        %v867 = vpop.permute.xlu0 %866
        %868 = vrot.lane.b32.xlu0 %v395, 112
        %v869 = vpop.permute.xlu0 %868
        %870 = vrot.lane.b32.xlu0 %v397, 112
        %v871 = vpop.permute.xlu0 %870
        %872 = vrot.lane.b32.xlu0 %v392, 112
        %v873 = vpop.permute.xlu0 %872
        %874 = vrot.lane.b32.xlu0 %v394, 112
        %v875 = vpop.permute.xlu0 %874
        %876 = vrot.lane.b32.xlu0 %v396, 112
        %v877 = vpop.permute.xlu0 %876
        %878 = vrot.lane.b32.xlu0 %v398, 112
        %v879 = vpop.permute.xlu0 %878
        %vm880 = vcmp.lt.s32.totalorder %v400, 112
        %v881 = vsel %vm880, %v865, %v873
        %v882 = vsel %vm880, %v867, %v875
        %v883 = vsel %vm880, %v869, %v877
        %v884 = vsel %vm880, %v871, %v879
        %v885 = vsel %vm880, %v873, %v865
        %v886 = vsel %vm880, %v875, %v867
        %v887 = vsel %vm880, %v877, %v869
        %v888 = vsel %vm880, %v879, %v871
        %v889 = vsel %vm816, 1, 0
        %v890 = vsel %vm817, 1, 0
        %vm891 = vcmp.eq.s32.totalorder %v889, 1
        %vm892 = vcmp.eq.s32.totalorder %v890, 1
        %v893 = vsel %vm891, %v881, 0.0
        %v894 = vsel %vm892, %v885, 0.0
        %v895 = vsel %vm891, %v882, 0.0
        %v896 = vsel %vm892, %v886, 0.0
        %v897 = vsel %vm891, %v883, 0.0
        %v898 = vsel %vm892, %v887, 0.0
        %v899 = vsel %vm891, %v884, 0.0
        %v900 = vsel %vm892, %v888, 0.0
        %901 = vset.pattern.permute.xlu0 8
        %902 = vperm.xlu0 %901, %v229
        %v903 = vpop.permute.xlu0 %902
        %905 = vset.pattern.permute.xlu0 8
        %906 = vperm.xlu0 %905, %v230
        %v907 = vpop.permute.xlu0 %906
        %909 = vset.pattern.permute.xlu0 8
        %910 = vperm.xlu0 %909, %v231
        %v911 = vpop.permute.xlu0 %910
        %913 = vset.pattern.permute.xlu0 8
        %914 = vperm.xlu0 %913, %v232
        %v915 = vpop.permute.xlu0 %914
        %v917 = vmul.f32 %v893, %v903
        %v918 = vmul.f32 %v894, %v903
        %v919 = vmul.f32 %v895, %v907
        %v920 = vmul.f32 %v896, %v907
        %v921 = vmul.f32 %v897, %v911
        %v922 = vmul.f32 %v898, %v911
        %v923 = vmul.f32 %v899, %v915
        %v924 = vmul.f32 %v900, %v915
        %v925 = vadd.f32 %v856, %v917
        %v926 = vadd.f32 %v857, %v918
        %v927 = vadd.f32 %v858, %v919
        %v928 = vadd.f32 %v859, %v920
        %v929 = vadd.f32 %v860, %v921
        %v930 = vadd.f32 %v861, %v922
        %v931 = vadd.f32 %v862, %v923
        %v932 = vadd.f32 %v863, %v924
        %933 = vrot.lane.b32.xlu0 %v391, 111
        %v934 = vpop.permute.xlu0 %933
        %935 = vrot.lane.b32.xlu0 %v393, 111
        %v936 = vpop.permute.xlu0 %935
        %937 = vrot.lane.b32.xlu0 %v395, 111
        %v938 = vpop.permute.xlu0 %937
        %939 = vrot.lane.b32.xlu0 %v397, 111
        %v940 = vpop.permute.xlu0 %939
        %941 = vrot.lane.b32.xlu0 %v392, 111
        %v942 = vpop.permute.xlu0 %941
        %943 = vrot.lane.b32.xlu0 %v394, 111
        %v944 = vpop.permute.xlu0 %943
        %945 = vrot.lane.b32.xlu0 %v396, 111
        %v946 = vpop.permute.xlu0 %945
        %947 = vrot.lane.b32.xlu0 %v398, 111
        %v948 = vpop.permute.xlu0 %947
        %vm949 = vcmp.lt.s32.totalorder %v400, 111
        %v950 = vsel %vm949, %v934, %v942
        %v951 = vsel %vm949, %v936, %v944
        %v952 = vsel %vm949, %v938, %v946
        %v953 = vsel %vm949, %v940, %v948
        %v954 = vsel %vm949, %v942, %v934
        %v955 = vsel %vm949, %v944, %v936
        %v956 = vsel %vm949, %v946, %v938
        %v957 = vsel %vm949, %v948, %v940
        %vm958 = vmand %vm816, %vm573
        %vm959 = vmand %vm817, %vm574
        %v960 = vsel %vm958, 1, 0
        %v961 = vsel %vm959, 1, 0
        %vm962 = vcmp.eq.s32.totalorder %v960, 1
        %vm963 = vcmp.eq.s32.totalorder %v961, 1
        %v964 = vsel %vm962, %v950, 0.0
        %v965 = vsel %vm963, %v954, 0.0
        %v966 = vsel %vm962, %v951, 0.0
        %v967 = vsel %vm963, %v955, 0.0
        %v968 = vsel %vm962, %v952, 0.0
        %v969 = vsel %vm963, %v956, 0.0
        %v970 = vsel %vm962, %v953, 0.0
        %v971 = vsel %vm963, %v957, 0.0
        %972 = vset.pattern.permute.xlu0 9
        %973 = vperm.xlu0 %972, %v229
        %v974 = vpop.permute.xlu0 %973
        %976 = vset.pattern.permute.xlu0 9
        %977 = vperm.xlu0 %976, %v230
        %v978 = vpop.permute.xlu0 %977
        %980 = vset.pattern.permute.xlu0 9
        %981 = vperm.xlu0 %980, %v231
        %v982 = vpop.permute.xlu0 %981
        %984 = vset.pattern.permute.xlu0 9
        %985 = vperm.xlu0 %984, %v232
        %v986 = vpop.permute.xlu0 %985
        %v988 = vmul.f32 %v964, %v974
        %v989 = vmul.f32 %v965, %v974
        %v990 = vmul.f32 %v966, %v978
        %v991 = vmul.f32 %v967, %v978
        %v992 = vmul.f32 %v968, %v982
        %v993 = vmul.f32 %v969, %v982
        %v994 = vmul.f32 %v970, %v986
        %v995 = vmul.f32 %v971, %v986
        %v996 = vadd.f32 %v925, %v988
        %v997 = vadd.f32 %v926, %v989
        %v998 = vadd.f32 %v927, %v990
        %v999 = vadd.f32 %v928, %v991
        %v1000 = vadd.f32 %v929, %v992
        %v1001 = vadd.f32 %v930, %v993
        %v1002 = vadd.f32 %v931, %v994
        %v1003 = vadd.f32 %v932, %v995
        %1004 = vset.pattern.permute.xlu0 10
        %1005 = vperm.xlu0 %1004, %v229
        %v1006 = vpop.permute.xlu0 %1005
        %1008 = vset.pattern.permute.xlu0 10
        %1009 = vperm.xlu0 %1008, %v230
        %v1010 = vpop.permute.xlu0 %1009
        %1012 = vset.pattern.permute.xlu0 10
        %1013 = vperm.xlu0 %1012, %v231
        %v1014 = vpop.permute.xlu0 %1013
        %1016 = vset.pattern.permute.xlu0 10
        %1017 = vperm.xlu0 %1016, %v232
        %v1018 = vpop.permute.xlu0 %1017
        %v1020 = vadd.f32 %v996, %v1006
        %v1021 = vadd.f32 %v997, %v1006
        %v1022 = vadd.f32 %v998, %v1010
        %v1023 = vadd.f32 %v999, %v1010
        %v1024 = vadd.f32 %v1000, %v1014
        %v1025 = vadd.f32 %v1001, %v1014
        %v1026 = vadd.f32 %v1002, %v1018
        %v1027 = vadd.f32 %v1003, %v1018
        %v1028 = vxor.u32 %v1020, 2147483648
        %v1029 = vxor.u32 %v1021, 2147483648
        %v1030 = vxor.u32 %v1022, 2147483648
        %v1031 = vxor.u32 %v1023, 2147483648
        %v1032 = vxor.u32 %v1024, 2147483648
        %v1033 = vxor.u32 %v1025, 2147483648
        %v1034 = vxor.u32 %v1026, 2147483648
        %v1035 = vxor.u32 %v1027, 2147483648
        %v1036 = vmul.f32 %v1028, 1.442695
        %v1037 = vpow.pop %v1036
        %v1038 = vmul.f32 %v1029, 1.442695
        %v1039 = vpow.pop %v1038
        %v1040 = vmul.f32 %v1030, 1.442695
        %v1041 = vpow.pop %v1040
        %v1042 = vmul.f32 %v1031, 1.442695
        %v1043 = vpow.pop %v1042
        %v1044 = vmul.f32 %v1032, 1.442695
        %v1045 = vpow.pop %v1044
        %v1046 = vmul.f32 %v1033, 1.442695
        %v1047 = vpow.pop %v1046
        %v1048 = vmul.f32 %v1034, 1.442695
        %v1049 = vpow.pop %v1048
        %v1050 = vmul.f32 %v1035, 1.442695
        %v1051 = vpow.pop %v1050
        %v1052 = vadd.f32 %v1037, 1.0
        %v1053 = vadd.f32 %v1039, 1.0
        %v1054 = vadd.f32 %v1041, 1.0
        %v1055 = vadd.f32 %v1043, 1.0
        %v1056 = vadd.f32 %v1045, 1.0
        %v1057 = vadd.f32 %v1047, 1.0
        %v1058 = vadd.f32 %v1049, 1.0
        %v1059 = vadd.f32 %v1051, 1.0
        %v1060 = vrcp.pop %v1052
        %v1061 = vmul.f32 1.0, %v1060
        %v1062 = vrcp.pop %v1053
        %v1063 = vmul.f32 1.0, %v1062
        %v1064 = vrcp.pop %v1054
        %v1065 = vmul.f32 1.0, %v1064
        %v1066 = vrcp.pop %v1055
        %v1067 = vmul.f32 1.0, %v1066
        %v1068 = vrcp.pop %v1056
        %v1069 = vmul.f32 1.0, %v1068
        %v1070 = vrcp.pop %v1057
        %v1071 = vmul.f32 1.0, %v1070
        %v1072 = vrcp.pop %v1058
        %v1073 = vmul.f32 1.0, %v1072
        %v1074 = vrcp.pop %v1059
        %v1075 = vmul.f32 1.0, %v1074
        %v1076 = vmul.f32 %v1020, %v1061
        %v1077 = vmul.f32 %v1021, %v1063
        %v1078 = vmul.f32 %v1022, %v1065
        %v1079 = vmul.f32 %v1023, %v1067
        %v1080 = vmul.f32 %v1024, %v1069
        %v1081 = vmul.f32 %v1025, %v1071
        %v1082 = vmul.f32 %v1026, %v1073
        %v1083 = vmul.f32 %v1027, %v1075
        %v1084 = vadd.f32 %v1076, %v1077
        %1085 = vadd.xlane.f32.xlu0 %v1084
        %v1086 = vpop.xlane.xlu0 %1085
        %v1087 = vadd.f32 %v1078, %v1079
        %1088 = vadd.xlane.f32.xlu0 %v1087
        %v1089 = vpop.xlane.xlu0 %1088
        %v1090 = vadd.f32 %v1080, %v1081
        %1091 = vadd.xlane.f32.xlu0 %v1090
        %v1092 = vpop.xlane.xlu0 %1091
        %v1093 = vadd.f32 %v1082, %v1083
        %1094 = vadd.xlane.f32.xlu0 %v1093
        %v1095 = vpop.xlane.xlu0 %1094
        %v1096 = vrcp.pop 256.0
        %v1097 = vmul.f32 %v1086, %v1096
        %v1098 = vmul.f32 %v1089, %v1096
        %v1099 = vmul.f32 %v1092, %v1096
        %v1100 = vmul.f32 %v1095, %v1096
        %v1101 = vld [vmem:[#allocation4 + $0x10] sm:$0xf]
        %v1102 = vpack.c.bf16 %v1098, %v1097
        %v1103 = vpack.c.bf16 %v1100, %v1099
        %v1104 = vld [vmem:[#allocation6] sm:$0xff]
        %1106 = vrot.lane.b32.xlu0 %v1104, 117
        %v1107 = vpop.permute.xlu0 %1106
        %v1110 = vsel %vm283, %v1101, 0
        %1112 = vmatprep.subr.bf16.mxu0 0
        %1113 = vmatpush1.bf16.msra.mxu0 0
        %1114 = vmatprep.subr.bf16.mxu0 0
        %1115 = vmatpush1.bf16.msra.mxu0 0
        %1116 = vmatprep.subr.bf16.mxu0 0
        %1117 = vmatpush1.bf16.msra.mxu0 0
        %1118 = vmatprep.subr.bf16.mxu0 0
        %1119 = vmatpush1.bf16.msra.mxu0 0
        %1120 = vmatprep.subr.bf16.mxu0 0
        %1121 = vmatpush1.bf16.msra.mxu0 0
        %1122 = vmatprep.subr.bf16.mxu0 0
        %1123 = vmatpush1.bf16.msra.mxu0 0
        %1124 = vmatprep.subr.bf16.mxu0 0
        %1125 = vmatpush1.bf16.msra.mxu0 %v1103
        %1126 = vmatprep.subr.bf16.mxu0 0
        %1127 = vmatpush1.bf16.msra.mxu0 %v1102
        %1128 = vmatprep.subr.bf16.mxu0 0
        %1129 = vmatpush2.bf16.msra.mxu0 0
        %1130 = vmatprep.subr.bf16.mxu0 0
        %1131 = vmatpush2.bf16.msra.mxu0 0
        %1132 = vmatprep.subr.bf16.mxu0 0
        %1133 = vmatpush2.bf16.msra.mxu0 0
        %1134 = vmatprep.subr.bf16.mxu0 0
        %1135 = vmatpush2.bf16.msra.mxu0 0
        %1136 = vmatprep.subr.bf16.mxu0 0
        %1137 = vmatpush2.bf16.msra.mxu0 0
        %1138 = vmatprep.subr.bf16.mxu0 0
        %1139 = vmatpush2.bf16.msra.mxu0 0
        %1140 = vmatprep.subr.bf16.mxu0 0
        %1141 = vmatpush2.bf16.msra.mxu0 0
        %1142 = vmatprep.subr.bf16.mxu0 0
        %1143 = vmatpush2.bf16.msra.mxu0 0
        %1144 = vmatprep.mubr.bf16.mxu0 0
        %1145 = vmatmul.mubr.bf16.gmra.mxu0 %v1110
        %v1146 = vpop.f32.mrf.mxu0
        %v1147 = vadd.f32 %v1107, %v1146
        %v1148 = vpop.f32.mrf.mxu0
        %v1149 = vpop.f32.mrf.mxu0
        %v1150 = vpop.f32.mrf.mxu0
        %1151 = vdwg.mxu0
        %v1152 = vxor.u32 %v1147, 2147483648
        %v1153 = vmul.f32 %v1152, 1.442695
        %v1154 = vpow.pop %v1153
        %v1155 = vadd.f32 %v1154, 1.0
        %v1156 = vrcp.pop %v1155
        %v1157 = vmul.f32 1.0, %v1156
        %v1158 = vmul.f32 %v1147, %v1157
        %v1159 = vld [vmem:[#allocation4 + $0x14] sm:$0xf]
        %v1160 = vld [vmem:[#allocation4 + $0x18] sm:$0xf]
        %v1161 = vld [vmem:[#allocation4 + $0x1c] sm:$0xf]
        %v1162 = vld [vmem:[#allocation4 + $0x20] sm:$0xf]
        %v1163 = vpack.c.bf16 %v1158, %v1158
        %v1168 = vunpack.c.l.b16 %v1159
        %v1169 = vunpack.c.l.b16 %v1160
        %v1170 = vunpack.c.l.b16 %v1161
        %v1171 = vunpack.c.l.b16 %v1162
        %v1172 = vpack.c.b16 %v1169, %v1168
        %v1173 = vpack.c.b16 %v1171, %v1170
        %1174 = vrot.lane.b32.xlu0 %v229, 116
        %v1175 = vpop.permute.xlu0 %1174
        %1176 = vrot.lane.b32.xlu0 %v230, 116
        %v1177 = vpop.permute.xlu0 %1176
        %1178 = vrot.lane.b32.xlu0 %v231, 116
        %v1179 = vpop.permute.xlu0 %1178
        %1180 = vrot.lane.b32.xlu0 %v232, 116
        %v1181 = vpop.permute.xlu0 %1180
        %vm1186 = vcmask 64512
        %v1188 = vsel %vm1186, %v1172, 0
        %v1191 = vsel %vm1186, %v1173, 0
        %vm1193 = vcmask 1043456
        %v1195 = vsel %vm1193, %v1163, 0
        %1197 = vmatprep.subr.bf16.mxu0 0
        %1198 = vmatpush1.bf16.msra.mxu0 0
        %1199 = vmatprep.subr.bf16.mxu0 0
        %1200 = vmatpush1.bf16.msra.mxu0 0
        %1201 = vmatprep.subr.bf16.mxu0 0
        %1202 = vmatpush1.bf16.msra.mxu0 0
        %1203 = vmatprep.subr.bf16.mxu0 0
        %1204 = vmatpush1.bf16.msra.mxu0 0
        %1205 = vmatprep.subr.bf16.mxu0 0
        %1206 = vmatpush1.bf16.msra.mxu0 0
        %1207 = vmatprep.subr.bf16.mxu0 0
        %1208 = vmatpush1.bf16.msra.mxu0 0
        %1209 = vmatprep.subr.bf16.mxu0 0
        %1210 = vmatpush1.bf16.msra.mxu0 0
        %1211 = vmatprep.subr.bf16.mxu0 0
        %1212 = vmatpush1.bf16.msra.mxu0 %v1195
        %1213 = vmatprep.subr.bf16.mxu0 0
        %1214 = vmatpush2.bf16.msra.mxu0 0
        %1215 = vmatprep.subr.bf16.mxu0 0
        %1216 = vmatpush2.bf16.msra.mxu0 0
        %1217 = vmatprep.subr.bf16.mxu0 0
        %1218 = vmatpush2.bf16.msra.mxu0 0
        %1219 = vmatprep.subr.bf16.mxu0 0
        %1220 = vmatpush2.bf16.msra.mxu0 0
        %1221 = vmatprep.subr.bf16.mxu0 0
        %1222 = vmatpush2.bf16.msra.mxu0 0
        %1223 = vmatprep.subr.bf16.mxu0 0
        %1224 = vmatpush2.bf16.msra.mxu0 0
        %1225 = vmatprep.subr.bf16.mxu0 0
        %1226 = vmatpush2.bf16.msra.mxu0 0
        %1227 = vmatprep.subr.bf16.mxu0 0
        %1228 = vmatpush2.bf16.msra.mxu0 0
        %1229 = vmatprep.mubr.bf16.mxu0 0
        %1230 = vmatmul.mubr.bf16.gmra.mxu0 %v1188
        %v1231 = vpop.f32.mrf.mxu0
        %v1232 = vadd.f32 %v1175, %v1231
        %v1233 = vpop.f32.mrf.mxu0
        %v1234 = vpop.f32.mrf.mxu0
        %v1235 = vadd.f32 %v1177, %v1234
        %v1236 = vpop.f32.mrf.mxu0
        %1237 = vmatprep.mubr.bf16.mxu0 0
        %1238 = vmatmul.mubr.bf16.gmra.mxu0 %v1191
        %v1239 = vpop.f32.mrf.mxu0
        %v1240 = vadd.f32 %v1179, %v1239
        %v1241 = vpop.f32.mrf.mxu0
        %v1242 = vpop.f32.mrf.mxu0
        %v1243 = vadd.f32 %v1181, %v1242
        %v1244 = vpop.f32.mrf.mxu0
        %1245 = vdwg.mxu0
        %v1246 = vxor.u32 %v1232, 2147483648
        %v1247 = vxor.u32 %v1235, 2147483648
        %v1248 = vxor.u32 %v1240, 2147483648
        %v1249 = vxor.u32 %v1243, 2147483648
        %v1250 = vmul.f32 %v1246, 1.442695
        %v1251 = vpow.pop %v1250
        %v1252 = vmul.f32 %v1247, 1.442695
        %v1253 = vpow.pop %v1252
        %v1254 = vmul.f32 %v1248, 1.442695
        %v1255 = vpow.pop %v1254
        %v1256 = vmul.f32 %v1249, 1.442695
        %v1257 = vpow.pop %v1256
        %v1258 = vadd.f32 %v1251, 1.0
        %v1259 = vadd.f32 %v1253, 1.0
        %v1260 = vadd.f32 %v1255, 1.0
        %v1261 = vadd.f32 %v1257, 1.0
        %v1262 = vrcp.pop %v1258
        %v1263 = vmul.f32 1.0, %v1262
        %v1264 = vrcp.pop %v1259
        %v1265 = vmul.f32 1.0, %v1264
        %v1266 = vrcp.pop %v1260
        %v1267 = vmul.f32 1.0, %v1266
        %v1268 = vrcp.pop %v1261
        %v1269 = vmul.f32 1.0, %v1268
        %1271 = vset.pattern.permute.xlu0 0
        %1272 = vperm.xlu0 %1271, %v1263
        %v1273 = vpop.permute.xlu0 %1272
        %1276 = vset.pattern.permute.xlu0 0
        %1277 = vperm.xlu0 %1276, %v1265
        %v1278 = vpop.permute.xlu0 %1277
        %1281 = vset.pattern.permute.xlu0 0
        %1282 = vperm.xlu0 %1281, %v1267
        %v1283 = vpop.permute.xlu0 %1282
        %1286 = vset.pattern.permute.xlu0 0
        %1287 = vperm.xlu0 %1286, %v1269
        %v1288 = vpop.permute.xlu0 %1287
        %v1290 = vmul.f32 %v1076, %v1273
        %v1291 = vmul.f32 %v1077, %v1273
        %v1292 = vmul.f32 %v1078, %v1278
        %v1293 = vmul.f32 %v1079, %v1278
        %v1294 = vmul.f32 %v1080, %v1283
        %v1295 = vmul.f32 %v1081, %v1283
        %v1296 = vmul.f32 %v1082, %v1288
        %v1297 = vmul.f32 %v1083, %v1288
        %v1298 = vld [vmem:[#allocation4 + $0x24] sm:$0xf]
        %v1299 = vld [vmem:[#allocation4 + $0x28] sm:$0xf]
        %v1300 = vpack.c.bf16 %v1292, %v1290
        %v1301 = vpack.c.bf16 %v1293, %v1291
        %v1302 = vpack.c.bf16 %v1296, %v1294
        %v1303 = vpack.c.bf16 %v1297, %v1295
        %v1304 = vld [vmem:[#allocation6] sm:$0xff]
        %v1305 = vld [vmem:[#allocation6 + $0x8] sm:$0xff]
        %1307 = vset.pattern.permute.xlu0 13
        %1308 = vperm.xlu0 %1307, %v1304
        %v1309 = vpop.permute.xlu0 %1308
        %1312 = vset.pattern.permute.xlu0 13
        %1313 = vperm.xlu0 %1312, %v1305
        %v1314 = vpop.permute.xlu0 %1313
        %v1318 = vunpack.c.l.b16 %v1298
        %v1319 = vunpack.c.l.b16 %v1299
        %v1320 = vpack.c.b16 %v1319, %v1318
        %v1322 = vsel %vm283, %v1320, 0
        %1324 = vmatprep.subr.bf16.mxu0 0
        %1325 = vmatpush1.bf16.msra.mxu0 0
        %1326 = vmatprep.subr.bf16.mxu0 0
        %1327 = vmatpush1.bf16.msra.mxu0 0
        %1328 = vmatprep.subr.bf16.mxu0 0
        %1329 = vmatpush1.bf16.msra.mxu0 0
        %1330 = vmatprep.subr.bf16.mxu0 0
        %1331 = vmatpush1.bf16.msra.mxu0 0
        %1332 = vmatprep.subr.bf16.mxu0 0
        %1333 = vmatpush1.bf16.msra.mxu0 0
        %1334 = vmatprep.subr.bf16.mxu0 0
        %1335 = vmatpush1.bf16.msra.mxu0 0
        %1336 = vmatprep.subr.bf16.mxu0 %v1303
        %1337 = vmatpush1.bf16.msra.mxu0 %v1302
        %1338 = vmatprep.subr.bf16.mxu0 %v1301
        %1339 = vmatpush1.bf16.msra.mxu0 %v1300
        %1340 = vmatprep.subr.bf16.mxu0 0
        %1341 = vmatpush2.bf16.msra.mxu0 0
        %1342 = vmatprep.subr.bf16.mxu0 0
        %1343 = vmatpush2.bf16.msra.mxu0 0
        %1344 = vmatprep.subr.bf16.mxu0 0
        %1345 = vmatpush2.bf16.msra.mxu0 0
        %1346 = vmatprep.subr.bf16.mxu0 0
        %1347 = vmatpush2.bf16.msra.mxu0 0
        %1348 = vmatprep.subr.bf16.mxu0 0
        %1349 = vmatpush2.bf16.msra.mxu0 0
        %1350 = vmatprep.subr.bf16.mxu0 0
        %1351 = vmatpush2.bf16.msra.mxu0 0
        %1352 = vmatprep.subr.bf16.mxu0 0
        %1353 = vmatpush2.bf16.msra.mxu0 0
        %1354 = vmatprep.subr.bf16.mxu0 0
        %1355 = vmatpush2.bf16.msra.mxu0 0
        %1356 = vmatprep.mubr.bf16.mxu0 0
        %1357 = vmatmul.mubr.bf16.gmra.mxu0 %v1322
        %v1358 = vpop.f32.mrf.mxu0
        %v1359 = vadd.f32 %v1309, %v1358
        %v1360 = vpop.f32.mrf.mxu0
        %v1361 = vadd.f32 %v1309, %v1360
        %v1362 = vpop.f32.mrf.mxu0
        %v1363 = vadd.f32 %v1314, %v1362
        %v1364 = vpop.f32.mrf.mxu0
        %v1365 = vadd.f32 %v1314, %v1364
        %1366 = vdwg.mxu0
        %v1367 = vld [vmem:[#allocation4 + $0x2c] sm:$0xf]
        %v1368 = vld [vmem:[#allocation4 + $0x30] sm:$0xf]
        %v1369 = vld [vmem:[#allocation4 + $0x34] sm:$0xf]
        %v1370 = vld [vmem:[#allocation4 + $0x38] sm:$0xf]
        %v1371 = vpack.c.bf16 %v1363, %v1359
        %v1372 = vpack.c.bf16 %v1365, %v1361
        %1373 = vset.pattern.permute.xlu0 14
        %1374 = vperm.xlu0 %1373, %v229
        %v1375 = vpop.permute.xlu0 %1374
        %1377 = vset.pattern.permute.xlu0 14
        %1378 = vperm.xlu0 %1377, %v230
        %v1379 = vpop.permute.xlu0 %1378
        %1381 = vset.pattern.permute.xlu0 14
        %1382 = vperm.xlu0 %1381, %v231
        %v1383 = vpop.permute.xlu0 %1382
        %1385 = vset.pattern.permute.xlu0 14
        %1386 = vperm.xlu0 %1385, %v232
        %v1387 = vpop.permute.xlu0 %1386
        %v1393 = vunpack.c.l.b16 %v1367
        %v1394 = vunpack.c.l.b16 %v1368
        %v1395 = vunpack.c.l.b16 %v1369
        %v1396 = vunpack.c.l.b16 %v1370
        %v1397 = vpack.c.b16 %v1394, %v1393
        %v1398 = vpack.c.b16 %v1396, %v1395
        %vm1399 = vcmask 130048
        %v1401 = vsel %vm1399, %v1397, 0
        %v1404 = vsel %vm1399, %v1398, 0
        %1406 = vmatprep.subr.bf16.mxu0 0
        %1407 = vmatpush1.bf16.msra.mxu0 0
        %1408 = vmatprep.subr.bf16.mxu0 0
        %1409 = vmatpush1.bf16.msra.mxu0 0
        %1410 = vmatprep.subr.bf16.mxu0 0
        %1411 = vmatpush1.bf16.msra.mxu0 0
        %1412 = vmatprep.subr.bf16.mxu0 0
        %1413 = vmatpush1.bf16.msra.mxu0 0
        %1414 = vmatprep.subr.bf16.mxu0 0
        %1415 = vmatpush1.bf16.msra.mxu0 0
        %1416 = vmatprep.subr.bf16.mxu0 0
        %1417 = vmatpush1.bf16.msra.mxu0 0
        %1418 = vmatprep.subr.bf16.mxu0 0
        %1419 = vmatpush1.bf16.msra.mxu0 0
        %1420 = vmatprep.subr.bf16.mxu0 %v1372
        %1421 = vmatpush1.bf16.msra.mxu0 %v1371
        %1422 = vmatprep.subr.bf16.mxu0 0
        %1423 = vmatpush2.bf16.msra.mxu0 0
        %1424 = vmatprep.subr.bf16.mxu0 0
        %1425 = vmatpush2.bf16.msra.mxu0 0
        %1426 = vmatprep.subr.bf16.mxu0 0
        %1427 = vmatpush2.bf16.msra.mxu0 0
        %1428 = vmatprep.subr.bf16.mxu0 0
        %1429 = vmatpush2.bf16.msra.mxu0 0
        %1430 = vmatprep.subr.bf16.mxu0 0
        %1431 = vmatpush2.bf16.msra.mxu0 0
        %1432 = vmatprep.subr.bf16.mxu0 0
        %1433 = vmatpush2.bf16.msra.mxu0 0
        %1434 = vmatprep.subr.bf16.mxu0 0
        %1435 = vmatpush2.bf16.msra.mxu0 0
        %1436 = vmatprep.subr.bf16.mxu0 0
        %1437 = vmatpush2.bf16.msra.mxu0 0
        %1438 = vmatprep.mubr.bf16.mxu0 0
        %1439 = vmatmul.mubr.bf16.gmra.mxu0 %v1401
        %v1440 = vpop.f32.mrf.mxu0
        %v1441 = vadd.f32 %v1375, %v1440
        %v1442 = vpop.f32.mrf.mxu0
        %v1443 = vadd.f32 %v1375, %v1442
        %v1444 = vpop.f32.mrf.mxu0
        %v1445 = vadd.f32 %v1379, %v1444
        %v1446 = vpop.f32.mrf.mxu0
        %v1447 = vadd.f32 %v1379, %v1446
        %1448 = vmatprep.mubr.bf16.mxu0 0
        %1449 = vmatmul.mubr.bf16.gmra.mxu0 %v1404
        %v1450 = vpop.f32.mrf.mxu0
        %v1451 = vadd.f32 %v1383, %v1450
        %v1452 = vpop.f32.mrf.mxu0
        %v1453 = vadd.f32 %v1383, %v1452
        %v1454 = vpop.f32.mrf.mxu0
        %v1455 = vadd.f32 %v1387, %v1454
        %v1456 = vpop.f32.mrf.mxu0
        %v1457 = vadd.f32 %v1387, %v1456
        %1458 = vdwg.mxu0
        %v1459 = vxor.u32 %v1441, 2147483648
        %v1460 = vxor.u32 %v1443, 2147483648
        %v1461 = vxor.u32 %v1445, 2147483648
        %v1462 = vxor.u32 %v1447, 2147483648
        %v1463 = vxor.u32 %v1451, 2147483648
        %v1464 = vxor.u32 %v1453, 2147483648
        %v1465 = vxor.u32 %v1455, 2147483648
        %v1466 = vxor.u32 %v1457, 2147483648
        %v1467 = vmul.f32 %v1459, 1.442695
        %v1468 = vpow.pop %v1467
        %v1469 = vmul.f32 %v1460, 1.442695
        %v1470 = vpow.pop %v1469
        %v1471 = vmul.f32 %v1461, 1.442695
        %v1472 = vpow.pop %v1471
        %v1473 = vmul.f32 %v1462, 1.442695
        %v1474 = vpow.pop %v1473
        %v1475 = vmul.f32 %v1463, 1.442695
        %v1476 = vpow.pop %v1475
        %v1477 = vmul.f32 %v1464, 1.442695
        %v1478 = vpow.pop %v1477
        %v1479 = vmul.f32 %v1465, 1.442695
        %v1480 = vpow.pop %v1479
        %v1481 = vmul.f32 %v1466, 1.442695
        %v1482 = vpow.pop %v1481
        %v1483 = vadd.f32 %v1468, 1.0
        %v1484 = vadd.f32 %v1470, 1.0
        %v1485 = vadd.f32 %v1472, 1.0
        %v1486 = vadd.f32 %v1474, 1.0
        %v1487 = vadd.f32 %v1476, 1.0
        %v1488 = vadd.f32 %v1478, 1.0
        %v1489 = vadd.f32 %v1480, 1.0
        %v1490 = vadd.f32 %v1482, 1.0
        %v1491 = vrcp.pop %v1483
        %v1492 = vmul.f32 1.0, %v1491
        %v1493 = vrcp.pop %v1484
        %v1494 = vmul.f32 1.0, %v1493
        %v1495 = vrcp.pop %v1485
        %v1496 = vmul.f32 1.0, %v1495
        %v1497 = vrcp.pop %v1486
        %v1498 = vmul.f32 1.0, %v1497
        %v1499 = vrcp.pop %v1487
        %v1500 = vmul.f32 1.0, %v1499
        %v1501 = vrcp.pop %v1488
        %v1502 = vmul.f32 1.0, %v1501
        %v1503 = vrcp.pop %v1489
        %v1504 = vmul.f32 1.0, %v1503
        %v1505 = vrcp.pop %v1490
        %v1506 = vmul.f32 1.0, %v1505
        %v1507 = vmul.f32 %v1441, %v1492
        %v1508 = vmul.f32 %v1443, %v1494
        %v1509 = vmul.f32 %v1445, %v1496
        %v1510 = vmul.f32 %v1447, %v1498
        %v1511 = vmul.f32 %v1451, %v1500
        %v1512 = vmul.f32 %v1453, %v1502
        %v1513 = vmul.f32 %v1455, %v1504
        %v1514 = vmul.f32 %v1457, %v1506
        %1515 = vrot.lane.b32.xlu0 %v1507, 17
        %v1516 = vpop.permute.xlu0 %1515
        %1517 = vrot.lane.b32.xlu0 %v1509, 17
        %v1518 = vpop.permute.xlu0 %1517
        %1519 = vrot.lane.b32.xlu0 %v1511, 17
        %v1520 = vpop.permute.xlu0 %1519
        %1521 = vrot.lane.b32.xlu0 %v1513, 17
        %v1522 = vpop.permute.xlu0 %1521
        %1523 = vrot.lane.b32.xlu0 %v1508, 17
        %v1524 = vpop.permute.xlu0 %1523
        %1525 = vrot.lane.b32.xlu0 %v1510, 17
        %v1526 = vpop.permute.xlu0 %1525
        %1527 = vrot.lane.b32.xlu0 %v1512, 17
        %v1528 = vpop.permute.xlu0 %1527
        %1529 = vrot.lane.b32.xlu0 %v1514, 17
        %v1530 = vpop.permute.xlu0 %1529
        %v1531 = vsel %vm420, %v1516, %v1524
        %v1532 = vsel %vm420, %v1518, %v1526
        %v1533 = vsel %vm420, %v1520, %v1528
        %v1534 = vsel %vm420, %v1522, %v1530
        %v1535 = vsel %vm420, %v1524, %v1516
        %v1536 = vsel %vm420, %v1526, %v1518
        %v1537 = vsel %vm420, %v1528, %v1520
        %v1538 = vsel %vm420, %v1530, %v1522
        %v1539 = vsel %vm437, %v1535, 0.0
        %v1540 = vsel %vm438, %v1531, 0.0
        %v1541 = vsel %vm437, %v1536, 0.0
        %v1542 = vsel %vm438, %v1532, 0.0
        %v1543 = vsel %vm437, %v1537, 0.0
        %v1544 = vsel %vm438, %v1533, 0.0
        %v1545 = vsel %vm437, %v1538, 0.0
        %v1546 = vsel %vm438, %v1534, 0.0
        %1547 = vset.pattern.permute.xlu0 15
        %1548 = vperm.xlu0 %1547, %v229
        %v1549 = vpop.permute.xlu0 %1548
        %1551 = vset.pattern.permute.xlu0 15
        %1552 = vperm.xlu0 %1551, %v230
        %v1553 = vpop.permute.xlu0 %1552
        %1555 = vset.pattern.permute.xlu0 15
        %1556 = vperm.xlu0 %1555, %v231
        %v1557 = vpop.permute.xlu0 %1556
        %1559 = vset.pattern.permute.xlu0 15
        %1560 = vperm.xlu0 %1559, %v232
        %v1561 = vpop.permute.xlu0 %1560
        %v1563 = vmul.f32 %v1539, %v1549
        %v1564 = vmul.f32 %v1540, %v1549
        %v1565 = vmul.f32 %v1541, %v1553
        %v1566 = vmul.f32 %v1542, %v1553
        %v1567 = vmul.f32 %v1543, %v1557
        %v1568 = vmul.f32 %v1544, %v1557
        %v1569 = vmul.f32 %v1545, %v1561
        %v1570 = vmul.f32 %v1546, %v1561
        %v1571 = vadd.f32 %v1563, 0.0
        %v1572 = vadd.f32 %v1564, 0.0
        %v1573 = vadd.f32 %v1565, 0.0
        %v1574 = vadd.f32 %v1566, 0.0
        %v1575 = vadd.f32 %v1567, 0.0
        %v1576 = vadd.f32 %v1568, 0.0
        %v1577 = vadd.f32 %v1569, 0.0
        %v1578 = vadd.f32 %v1570, 0.0
        %1579 = vrot.lane.b32.xlu0 %v1507, 16
        %v1580 = vpop.permute.xlu0 %1579
        %1581 = vrot.lane.b32.xlu0 %v1509, 16
        %v1582 = vpop.permute.xlu0 %1581
        %1583 = vrot.lane.b32.xlu0 %v1511, 16
        %v1584 = vpop.permute.xlu0 %1583
        %1585 = vrot.lane.b32.xlu0 %v1513, 16
        %v1586 = vpop.permute.xlu0 %1585
        %1587 = vrot.lane.b32.xlu0 %v1508, 16
        %v1588 = vpop.permute.xlu0 %1587
        %1589 = vrot.lane.b32.xlu0 %v1510, 16
        %v1590 = vpop.permute.xlu0 %1589
        %1591 = vrot.lane.b32.xlu0 %v1512, 16
        %v1592 = vpop.permute.xlu0 %1591
        %1593 = vrot.lane.b32.xlu0 %v1514, 16
        %v1594 = vpop.permute.xlu0 %1593
        %v1595 = vsel %vm495, %v1580, %v1588
        %v1596 = vsel %vm495, %v1582, %v1590
        %v1597 = vsel %vm495, %v1584, %v1592
        %v1598 = vsel %vm495, %v1586, %v1594
        %v1599 = vsel %vm495, %v1588, %v1580
        %v1600 = vsel %vm495, %v1590, %v1582
        %v1601 = vsel %vm495, %v1592, %v1584
        %v1602 = vsel %vm495, %v1594, %v1586
        %v1603 = vsel %vm506, %v1599, 0.0
        %v1604 = vsel %vm507, %v1595, 0.0
        %v1605 = vsel %vm506, %v1600, 0.0
        %v1606 = vsel %vm507, %v1596, 0.0
        %v1607 = vsel %vm506, %v1601, 0.0
        %v1608 = vsel %vm507, %v1597, 0.0
        %v1609 = vsel %vm506, %v1602, 0.0
        %v1610 = vsel %vm507, %v1598, 0.0
        %1611 = vset.pattern.permute.xlu0 16
        %1612 = vperm.xlu0 %1611, %v229
        %v1613 = vpop.permute.xlu0 %1612
        %1615 = vset.pattern.permute.xlu0 16
        %1616 = vperm.xlu0 %1615, %v230
        %v1617 = vpop.permute.xlu0 %1616
        %1619 = vset.pattern.permute.xlu0 16
        %1620 = vperm.xlu0 %1619, %v231
        %v1621 = vpop.permute.xlu0 %1620
        %1623 = vset.pattern.permute.xlu0 16
        %1624 = vperm.xlu0 %1623, %v232
        %v1625 = vpop.permute.xlu0 %1624
        %v1627 = vmul.f32 %v1603, %v1613
        %v1628 = vmul.f32 %v1604, %v1613
        %v1629 = vmul.f32 %v1605, %v1617
        %v1630 = vmul.f32 %v1606, %v1617
        %v1631 = vmul.f32 %v1607, %v1621
        %v1632 = vmul.f32 %v1608, %v1621
        %v1633 = vmul.f32 %v1609, %v1625
        %v1634 = vmul.f32 %v1610, %v1625
        %v1635 = vadd.f32 %v1571, %v1627
        %v1636 = vadd.f32 %v1572, %v1628
        %v1637 = vadd.f32 %v1573, %v1629
        %v1638 = vadd.f32 %v1574, %v1630
        %v1639 = vadd.f32 %v1575, %v1631
        %v1640 = vadd.f32 %v1576, %v1632
        %v1641 = vadd.f32 %v1577, %v1633
        %v1642 = vadd.f32 %v1578, %v1634
        %1643 = vrot.lane.b32.xlu0 %v1507, 15
        %v1644 = vpop.permute.xlu0 %1643
        %1645 = vrot.lane.b32.xlu0 %v1509, 15
        %v1646 = vpop.permute.xlu0 %1645
        %1647 = vrot.lane.b32.xlu0 %v1511, 15
        %v1648 = vpop.permute.xlu0 %1647
        %1649 = vrot.lane.b32.xlu0 %v1513, 15
        %v1650 = vpop.permute.xlu0 %1649
        %1651 = vrot.lane.b32.xlu0 %v1508, 15
        %v1652 = vpop.permute.xlu0 %1651
        %1653 = vrot.lane.b32.xlu0 %v1510, 15
        %v1654 = vpop.permute.xlu0 %1653
        %1655 = vrot.lane.b32.xlu0 %v1512, 15
        %v1656 = vpop.permute.xlu0 %1655
        %1657 = vrot.lane.b32.xlu0 %v1514, 15
        %v1658 = vpop.permute.xlu0 %1657
        %v1659 = vsel %vm564, %v1644, %v1652
        %v1660 = vsel %vm564, %v1646, %v1654
        %v1661 = vsel %vm564, %v1648, %v1656
        %v1662 = vsel %vm564, %v1650, %v1658
        %v1663 = vsel %vm564, %v1652, %v1644
        %v1664 = vsel %vm564, %v1654, %v1646
        %v1665 = vsel %vm564, %v1656, %v1648
        %v1666 = vsel %vm564, %v1658, %v1650
        %v1667 = vsel %vm579, %v1663, 0.0
        %v1668 = vsel %vm580, %v1659, 0.0
        %v1669 = vsel %vm579, %v1664, 0.0
        %v1670 = vsel %vm580, %v1660, 0.0
        %v1671 = vsel %vm579, %v1665, 0.0
        %v1672 = vsel %vm580, %v1661, 0.0
        %v1673 = vsel %vm579, %v1666, 0.0
        %v1674 = vsel %vm580, %v1662, 0.0
        %1675 = vset.pattern.permute.xlu0 17
        %1676 = vperm.xlu0 %1675, %v229
        %v1677 = vpop.permute.xlu0 %1676
        %1679 = vset.pattern.permute.xlu0 17
        %1680 = vperm.xlu0 %1679, %v230
        %v1681 = vpop.permute.xlu0 %1680
        %1683 = vset.pattern.permute.xlu0 17
        %1684 = vperm.xlu0 %1683, %v231
        %v1685 = vpop.permute.xlu0 %1684
        %1687 = vset.pattern.permute.xlu0 17
        %1688 = vperm.xlu0 %1687, %v232
        %v1689 = vpop.permute.xlu0 %1688
        %v1691 = vmul.f32 %v1667, %v1677
        %v1692 = vmul.f32 %v1668, %v1677
        %v1693 = vmul.f32 %v1669, %v1681
        %v1694 = vmul.f32 %v1670, %v1681
        %v1695 = vmul.f32 %v1671, %v1685
        %v1696 = vmul.f32 %v1672, %v1685
        %v1697 = vmul.f32 %v1673, %v1689
        %v1698 = vmul.f32 %v1674, %v1689
        %v1699 = vadd.f32 %v1635, %v1691
        %v1700 = vadd.f32 %v1636, %v1692
        %v1701 = vadd.f32 %v1637, %v1693
        %v1702 = vadd.f32 %v1638, %v1694
        %v1703 = vadd.f32 %v1639, %v1695
        %v1704 = vadd.f32 %v1640, %v1696
        %v1705 = vadd.f32 %v1641, %v1697
        %v1706 = vadd.f32 %v1642, %v1698
        %1707 = vrot.lane.b32.xlu0 %v1507, 1
        %v1708 = vpop.permute.xlu0 %1707
        %1709 = vrot.lane.b32.xlu0 %v1509, 1
        %v1710 = vpop.permute.xlu0 %1709
        %1711 = vrot.lane.b32.xlu0 %v1511, 1
        %v1712 = vpop.permute.xlu0 %1711
        %1713 = vrot.lane.b32.xlu0 %v1513, 1
        %v1714 = vpop.permute.xlu0 %1713
        %1715 = vrot.lane.b32.xlu0 %v1508, 1
        %v1716 = vpop.permute.xlu0 %1715
        %1717 = vrot.lane.b32.xlu0 %v1510, 1
        %v1718 = vpop.permute.xlu0 %1717
        %1719 = vrot.lane.b32.xlu0 %v1512, 1
        %v1720 = vpop.permute.xlu0 %1719
        %1721 = vrot.lane.b32.xlu0 %v1514, 1
        %v1722 = vpop.permute.xlu0 %1721
        %v1723 = vsel %vm637, %v1708, %v1716
        %v1724 = vsel %vm637, %v1710, %v1718
        %v1725 = vsel %vm637, %v1712, %v1720
        %v1726 = vsel %vm637, %v1714, %v1722
        %v1727 = vsel %vm637, %v1716, %v1708
        %v1728 = vsel %vm637, %v1718, %v1710
        %v1729 = vsel %vm637, %v1720, %v1712
        %v1730 = vsel %vm637, %v1722, %v1714
        %v1731 = vsel %vm648, %v1727, 0.0
        %v1732 = vsel %vm649, %v1723, 0.0
        %v1733 = vsel %vm648, %v1728, 0.0
        %v1734 = vsel %vm649, %v1724, 0.0
        %v1735 = vsel %vm648, %v1729, 0.0
        %v1736 = vsel %vm649, %v1725, 0.0
        %v1737 = vsel %vm648, %v1730, 0.0
        %v1738 = vsel %vm649, %v1726, 0.0
        %1739 = vset.pattern.permute.xlu0 18
        %1740 = vperm.xlu0 %1739, %v229
        %v1741 = vpop.permute.xlu0 %1740
        %1743 = vset.pattern.permute.xlu0 18
        %1744 = vperm.xlu0 %1743, %v230
        %v1745 = vpop.permute.xlu0 %1744
        %1747 = vset.pattern.permute.xlu0 18
        %1748 = vperm.xlu0 %1747, %v231
        %v1749 = vpop.permute.xlu0 %1748
        %1751 = vset.pattern.permute.xlu0 18
        %1752 = vperm.xlu0 %1751, %v232
        %v1753 = vpop.permute.xlu0 %1752
        %v1755 = vmul.f32 %v1731, %v1741
        %v1756 = vmul.f32 %v1732, %v1741
        %v1757 = vmul.f32 %v1733, %v1745
        %v1758 = vmul.f32 %v1734, %v1745
        %v1759 = vmul.f32 %v1735, %v1749
        %v1760 = vmul.f32 %v1736, %v1749
        %v1761 = vmul.f32 %v1737, %v1753
        %v1762 = vmul.f32 %v1738, %v1753
        %v1763 = vadd.f32 %v1699, %v1755
        %v1764 = vadd.f32 %v1700, %v1756
        %v1765 = vadd.f32 %v1701, %v1757
        %v1766 = vadd.f32 %v1702, %v1758
        %v1767 = vadd.f32 %v1703, %v1759
        %v1768 = vadd.f32 %v1704, %v1760
        %v1769 = vadd.f32 %v1705, %v1761
        %v1770 = vadd.f32 %v1706, %v1762
        %1771 = vset.pattern.permute.xlu0 19
        %1772 = vperm.xlu0 %1771, %v229
        %v1773 = vpop.permute.xlu0 %1772
        %1775 = vset.pattern.permute.xlu0 19
        %1776 = vperm.xlu0 %1775, %v230
        %v1777 = vpop.permute.xlu0 %1776
        %1779 = vset.pattern.permute.xlu0 19
        %1780 = vperm.xlu0 %1779, %v231
        %v1781 = vpop.permute.xlu0 %1780
        %1783 = vset.pattern.permute.xlu0 19
        %1784 = vperm.xlu0 %1783, %v232
        %v1785 = vpop.permute.xlu0 %1784
        %v1787 = vmul.f32 %v1507, %v1773
        %v1788 = vmul.f32 %v1508, %v1773
        %v1789 = vmul.f32 %v1509, %v1777
        %v1790 = vmul.f32 %v1510, %v1777
        %v1791 = vmul.f32 %v1511, %v1781
        %v1792 = vmul.f32 %v1512, %v1781
        %v1793 = vmul.f32 %v1513, %v1785
        %v1794 = vmul.f32 %v1514, %v1785
        %v1795 = vadd.f32 %v1763, %v1787
        %v1796 = vadd.f32 %v1764, %v1788
        %v1797 = vadd.f32 %v1765, %v1789
        %v1798 = vadd.f32 %v1766, %v1790
        %v1799 = vadd.f32 %v1767, %v1791
        %v1800 = vadd.f32 %v1768, %v1792
        %v1801 = vadd.f32 %v1769, %v1793
        %v1802 = vadd.f32 %v1770, %v1794
        %1803 = vrot.lane.b32.xlu0 %v1507, 127
        %v1804 = vpop.permute.xlu0 %1803
        %1805 = vrot.lane.b32.xlu0 %v1509, 127
        %v1806 = vpop.permute.xlu0 %1805
        %1807 = vrot.lane.b32.xlu0 %v1511, 127
        %v1808 = vpop.permute.xlu0 %1807
        %1809 = vrot.lane.b32.xlu0 %v1513, 127
        %v1810 = vpop.permute.xlu0 %1809
        %1811 = vrot.lane.b32.xlu0 %v1508, 127
        %v1812 = vpop.permute.xlu0 %1811
        %1813 = vrot.lane.b32.xlu0 %v1510, 127
        %v1814 = vpop.permute.xlu0 %1813
        %1815 = vrot.lane.b32.xlu0 %v1512, 127
        %v1816 = vpop.permute.xlu0 %1815
        %1817 = vrot.lane.b32.xlu0 %v1514, 127
        %v1818 = vpop.permute.xlu0 %1817
        %v1819 = vsel %vm738, %v1804, %v1812
        %v1820 = vsel %vm738, %v1806, %v1814
        %v1821 = vsel %vm738, %v1808, %v1816
        %v1822 = vsel %vm738, %v1810, %v1818
        %v1823 = vsel %vm738, %v1812, %v1804
        %v1824 = vsel %vm738, %v1814, %v1806
        %v1825 = vsel %vm738, %v1816, %v1808
        %v1826 = vsel %vm738, %v1818, %v1810
        %v1827 = vsel %vm749, %v1819, 0.0
        %v1828 = vsel %vm750, %v1823, 0.0
        %v1829 = vsel %vm749, %v1820, 0.0
        %v1830 = vsel %vm750, %v1824, 0.0
        %v1831 = vsel %vm749, %v1821, 0.0
        %v1832 = vsel %vm750, %v1825, 0.0
        %v1833 = vsel %vm749, %v1822, 0.0
        %v1834 = vsel %vm750, %v1826, 0.0
        %1835 = vset.pattern.permute.xlu0 20
        %1836 = vperm.xlu0 %1835, %v229
        %v1837 = vpop.permute.xlu0 %1836
        %1839 = vset.pattern.permute.xlu0 20
        %1840 = vperm.xlu0 %1839, %v230
        %v1841 = vpop.permute.xlu0 %1840
        %1843 = vset.pattern.permute.xlu0 20
        %1844 = vperm.xlu0 %1843, %v231
        %v1845 = vpop.permute.xlu0 %1844
        %1847 = vset.pattern.permute.xlu0 20
        %1848 = vperm.xlu0 %1847, %v232
        %v1849 = vpop.permute.xlu0 %1848
        %v1851 = vmul.f32 %v1827, %v1837
        %v1852 = vmul.f32 %v1828, %v1837
        %v1853 = vmul.f32 %v1829, %v1841
        %v1854 = vmul.f32 %v1830, %v1841
        %v1855 = vmul.f32 %v1831, %v1845
        %v1856 = vmul.f32 %v1832, %v1845
        %v1857 = vmul.f32 %v1833, %v1849
        %v1858 = vmul.f32 %v1834, %v1849
        %v1859 = vadd.f32 %v1795, %v1851
        %v1860 = vadd.f32 %v1796, %v1852
        %v1861 = vadd.f32 %v1797, %v1853
        %v1862 = vadd.f32 %v1798, %v1854
        %v1863 = vadd.f32 %v1799, %v1855
        %v1864 = vadd.f32 %v1800, %v1856
        %v1865 = vadd.f32 %v1801, %v1857
        %v1866 = vadd.f32 %v1802, %v1858
        %1867 = vrot.lane.b32.xlu0 %v1507, 113
        %v1868 = vpop.permute.xlu0 %1867
        %1869 = vrot.lane.b32.xlu0 %v1509, 113
        %v1870 = vpop.permute.xlu0 %1869
        %1871 = vrot.lane.b32.xlu0 %v1511, 113
        %v1872 = vpop.permute.xlu0 %1871
        %1873 = vrot.lane.b32.xlu0 %v1513, 113
        %v1874 = vpop.permute.xlu0 %1873
        %1875 = vrot.lane.b32.xlu0 %v1508, 113
        %v1876 = vpop.permute.xlu0 %1875
        %1877 = vrot.lane.b32.xlu0 %v1510, 113
        %v1878 = vpop.permute.xlu0 %1877
        %1879 = vrot.lane.b32.xlu0 %v1512, 113
        %v1880 = vpop.permute.xlu0 %1879
        %1881 = vrot.lane.b32.xlu0 %v1514, 113
        %v1882 = vpop.permute.xlu0 %1881
        %v1883 = vsel %vm807, %v1868, %v1876
        %v1884 = vsel %vm807, %v1870, %v1878
        %v1885 = vsel %vm807, %v1872, %v1880
        %v1886 = vsel %vm807, %v1874, %v1882
        %v1887 = vsel %vm807, %v1876, %v1868
        %v1888 = vsel %vm807, %v1878, %v1870
        %v1889 = vsel %vm807, %v1880, %v1872
        %v1890 = vsel %vm807, %v1882, %v1874
        %v1891 = vsel %vm822, %v1883, 0.0
        %v1892 = vsel %vm823, %v1887, 0.0
        %v1893 = vsel %vm822, %v1884, 0.0
        %v1894 = vsel %vm823, %v1888, 0.0
        %v1895 = vsel %vm822, %v1885, 0.0
        %v1896 = vsel %vm823, %v1889, 0.0
        %v1897 = vsel %vm822, %v1886, 0.0
        %v1898 = vsel %vm823, %v1890, 0.0
        %1899 = vset.pattern.permute.xlu0 21
        %1900 = vperm.xlu0 %1899, %v229
        %v1901 = vpop.permute.xlu0 %1900
        %1903 = vset.pattern.permute.xlu0 21
        %1904 = vperm.xlu0 %1903, %v230
        %v1905 = vpop.permute.xlu0 %1904
        %1907 = vset.pattern.permute.xlu0 21
        %1908 = vperm.xlu0 %1907, %v231
        %v1909 = vpop.permute.xlu0 %1908
        %1911 = vset.pattern.permute.xlu0 21
        %1912 = vperm.xlu0 %1911, %v232
        %v1913 = vpop.permute.xlu0 %1912
        %v1915 = vmul.f32 %v1891, %v1901
        %v1916 = vmul.f32 %v1892, %v1901
        %v1917 = vmul.f32 %v1893, %v1905
        %v1918 = vmul.f32 %v1894, %v1905
        %v1919 = vmul.f32 %v1895, %v1909
        %v1920 = vmul.f32 %v1896, %v1909
        %v1921 = vmul.f32 %v1897, %v1913
        %v1922 = vmul.f32 %v1898, %v1913
        %v1923 = vadd.f32 %v1859, %v1915
        %v1924 = vadd.f32 %v1860, %v1916
        %v1925 = vadd.f32 %v1861, %v1917
        %v1926 = vadd.f32 %v1862, %v1918
        %v1927 = vadd.f32 %v1863, %v1919
        %v1928 = vadd.f32 %v1864, %v1920
        %v1929 = vadd.f32 %v1865, %v1921
        %v1930 = vadd.f32 %v1866, %v1922
        %1931 = vrot.lane.b32.xlu0 %v1507, 112
        %v1932 = vpop.permute.xlu0 %1931
        %1933 = vrot.lane.b32.xlu0 %v1509, 112
        %v1934 = vpop.permute.xlu0 %1933
        %1935 = vrot.lane.b32.xlu0 %v1511, 112
        %v1936 = vpop.permute.xlu0 %1935
        %1937 = vrot.lane.b32.xlu0 %v1513, 112
        %v1938 = vpop.permute.xlu0 %1937
        %1939 = vrot.lane.b32.xlu0 %v1508, 112
        %v1940 = vpop.permute.xlu0 %1939
        %1941 = vrot.lane.b32.xlu0 %v1510, 112
        %v1942 = vpop.permute.xlu0 %1941
        %1943 = vrot.lane.b32.xlu0 %v1512, 112
        %v1944 = vpop.permute.xlu0 %1943
        %1945 = vrot.lane.b32.xlu0 %v1514, 112
        %v1946 = vpop.permute.xlu0 %1945
        %v1947 = vsel %vm880, %v1932, %v1940
        %v1948 = vsel %vm880, %v1934, %v1942
        %v1949 = vsel %vm880, %v1936, %v1944
        %v1950 = vsel %vm880, %v1938, %v1946
        %v1951 = vsel %vm880, %v1940, %v1932
        %v1952 = vsel %vm880, %v1942, %v1934
        %v1953 = vsel %vm880, %v1944, %v1936
        %v1954 = vsel %vm880, %v1946, %v1938
        %v1955 = vsel %vm891, %v1947, 0.0
        %v1956 = vsel %vm892, %v1951, 0.0
        %v1957 = vsel %vm891, %v1948, 0.0
        %v1958 = vsel %vm892, %v1952, 0.0
        %v1959 = vsel %vm891, %v1949, 0.0
        %v1960 = vsel %vm892, %v1953, 0.0
        %v1961 = vsel %vm891, %v1950, 0.0
        %v1962 = vsel %vm892, %v1954, 0.0
        %1963 = vset.pattern.permute.xlu0 22
        %1964 = vperm.xlu0 %1963, %v229
        %v1965 = vpop.permute.xlu0 %1964
        %1967 = vset.pattern.permute.xlu0 22
        %1968 = vperm.xlu0 %1967, %v230
        %v1969 = vpop.permute.xlu0 %1968
        %1971 = vset.pattern.permute.xlu0 22
        %1972 = vperm.xlu0 %1971, %v231
        %v1973 = vpop.permute.xlu0 %1972
        %1975 = vset.pattern.permute.xlu0 22
        %1976 = vperm.xlu0 %1975, %v232
        %v1977 = vpop.permute.xlu0 %1976
        %v1979 = vmul.f32 %v1955, %v1965
        %v1980 = vmul.f32 %v1956, %v1965
        %v1981 = vmul.f32 %v1957, %v1969
        %v1982 = vmul.f32 %v1958, %v1969
        %v1983 = vmul.f32 %v1959, %v1973
        %v1984 = vmul.f32 %v1960, %v1973
        %v1985 = vmul.f32 %v1961, %v1977
        %v1986 = vmul.f32 %v1962, %v1977
        %v1987 = vadd.f32 %v1923, %v1979
        %v1988 = vadd.f32 %v1924, %v1980
        %v1989 = vadd.f32 %v1925, %v1981
        %v1990 = vadd.f32 %v1926, %v1982
        %v1991 = vadd.f32 %v1927, %v1983
        %v1992 = vadd.f32 %v1928, %v1984
        %v1993 = vadd.f32 %v1929, %v1985
        %v1994 = vadd.f32 %v1930, %v1986
        %1995 = vrot.lane.b32.xlu0 %v1507, 111
        %v1996 = vpop.permute.xlu0 %1995
        %1997 = vrot.lane.b32.xlu0 %v1509, 111
        %v1998 = vpop.permute.xlu0 %1997
        %1999 = vrot.lane.b32.xlu0 %v1511, 111
        %v2000 = vpop.permute.xlu0 %1999
        %2001 = vrot.lane.b32.xlu0 %v1513, 111
        %v2002 = vpop.permute.xlu0 %2001
        %2003 = vrot.lane.b32.xlu0 %v1508, 111
        %v2004 = vpop.permute.xlu0 %2003
        %2005 = vrot.lane.b32.xlu0 %v1510, 111
        %v2006 = vpop.permute.xlu0 %2005
        %2007 = vrot.lane.b32.xlu0 %v1512, 111
        %v2008 = vpop.permute.xlu0 %2007
        %2009 = vrot.lane.b32.xlu0 %v1514, 111
        %v2010 = vpop.permute.xlu0 %2009
        %v2011 = vsel %vm949, %v1996, %v2004
        %v2012 = vsel %vm949, %v1998, %v2006
        %v2013 = vsel %vm949, %v2000, %v2008
        %v2014 = vsel %vm949, %v2002, %v2010
        %v2015 = vsel %vm949, %v2004, %v1996
        %v2016 = vsel %vm949, %v2006, %v1998
        %v2017 = vsel %vm949, %v2008, %v2000
        %v2018 = vsel %vm949, %v2010, %v2002
        %v2019 = vsel %vm962, %v2011, 0.0
        %v2020 = vsel %vm963, %v2015, 0.0
        %v2021 = vsel %vm962, %v2012, 0.0
        %v2022 = vsel %vm963, %v2016, 0.0
        %v2023 = vsel %vm962, %v2013, 0.0
        %v2024 = vsel %vm963, %v2017, 0.0
        %v2025 = vsel %vm962, %v2014, 0.0
        %v2026 = vsel %vm963, %v2018, 0.0
        %2027 = vset.pattern.permute.xlu0 23
        %2028 = vperm.xlu0 %2027, %v229
        %v2029 = vpop.permute.xlu0 %2028
        %2031 = vset.pattern.permute.xlu0 23
        %2032 = vperm.xlu0 %2031, %v230
        %v2033 = vpop.permute.xlu0 %2032
        %2035 = vset.pattern.permute.xlu0 23
        %2036 = vperm.xlu0 %2035, %v231
        %v2037 = vpop.permute.xlu0 %2036
        %2039 = vset.pattern.permute.xlu0 23
        %2040 = vperm.xlu0 %2039, %v232
        %v2041 = vpop.permute.xlu0 %2040
        %v2043 = vmul.f32 %v2019, %v2029
        %v2044 = vmul.f32 %v2020, %v2029
        %v2045 = vmul.f32 %v2021, %v2033
        %v2046 = vmul.f32 %v2022, %v2033
        %v2047 = vmul.f32 %v2023, %v2037
        %v2048 = vmul.f32 %v2024, %v2037
        %v2049 = vmul.f32 %v2025, %v2041
        %v2050 = vmul.f32 %v2026, %v2041
        %v2051 = vadd.f32 %v1987, %v2043
        %v2052 = vadd.f32 %v1988, %v2044
        %v2053 = vadd.f32 %v1989, %v2045
        %v2054 = vadd.f32 %v1990, %v2046
        %v2055 = vadd.f32 %v1991, %v2047
        %v2056 = vadd.f32 %v1992, %v2048
        %v2057 = vadd.f32 %v1993, %v2049
        %v2058 = vadd.f32 %v1994, %v2050
        %v2059 = vpack.c.bf16 %v2053, %v2051
        %v2060 = vpack.c.bf16 %v2054, %v2052
        %v2061 = vpack.c.bf16 %v2057, %v2055
        %v2062 = vpack.c.bf16 %v2058, %v2056
        %v2063 = vld [vmem:[#allocation4 + $0x3c] sm:$0xf]
        %v2064 = vld [vmem:[#allocation4 + $0x40] sm:$0xf]
        %v2065 = vld [vmem:[#allocation4 + $0x44] sm:$0xf]
        %v2066 = vld [vmem:[#allocation4 + $0x48] sm:$0xf]
        %v2067 = vld [vmem:[#allocation4 + $0x4c] sm:$0xf]
        %v2068 = vld [vmem:[#allocation4 + $0x50] sm:$0xf]
        %v2069 = vld [vmem:[#allocation4 + $0x54] sm:$0xf]
        %v2070 = vld [vmem:[#allocation4 + $0x58] sm:$0xf]
        %v2071 = vld [vmem:[#allocation4 + $0x5c] sm:$0xf]
        %v2072 = vld [vmem:[#allocation4 + $0x60] sm:$0xf]
        %v2073 = vld [vmem:[#allocation4 + $0x64] sm:$0xf]
        %v2074 = vld [vmem:[#allocation4 + $0x68] sm:$0xf]
        %v2075 = vld [vmem:[#allocation4 + $0x6c] sm:$0xf]
        %v2076 = vld [vmem:[#allocation4 + $0x70] sm:$0xf]
        %v2077 = vld [vmem:[#allocation4 + $0x74] sm:$0xf]
        %v2078 = vld [vmem:[#allocation4 + $0x78] sm:$0xf]
        %v2079 = vld [vmem:[#allocation4 + $0x7c] sm:$0xf]
        %v2080 = vld [vmem:[#allocation4 + $0x80] sm:$0xf]
        %v2081 = vld [vmem:[#allocation4 + $0x84] sm:$0xf]
        %v2082 = vld [vmem:[#allocation4 + $0x88] sm:$0xf]
        %v2083 = vld [vmem:[#allocation4 + $0x8c] sm:$0xf]
        %v2084 = vld [vmem:[#allocation4 + $0x90] sm:$0xf]
        %v2085 = vld [vmem:[#allocation4 + $0x94] sm:$0xf]
        %v2086 = vld [vmem:[#allocation4 + $0x98] sm:$0xf]
        %v2087 = vld [vmem:[#allocation4 + $0x9c] sm:$0xf]
        %v2088 = vld [vmem:[#allocation4 + $0xa0] sm:$0xf]
        %v2089 = vld [vmem:[#allocation4 + $0xa4] sm:$0xf]
        %v2090 = vld [vmem:[#allocation4 + $0xa8] sm:$0xf]
        %v2091 = vld [vmem:[#allocation4 + $0xac] sm:$0xf]
        %v2092 = vld [vmem:[#allocation4 + $0xb0] sm:$0xf]
        %v2093 = vld [vmem:[#allocation4 + $0xb4] sm:$0xf]
        %v2094 = vld [vmem:[#allocation4 + $0xb8] sm:$0xf]
        %2095 = vset.pattern.permute.xlu0 24
        %2096 = vperm.xlu0 %2095, %v229
        %v2097 = vpop.permute.xlu0 %2096
        %2099 = vset.pattern.permute.xlu0 24
        %2100 = vperm.xlu0 %2099, %v230
        %v2101 = vpop.permute.xlu0 %2100
        %2103 = vset.pattern.permute.xlu0 24
        %2104 = vperm.xlu0 %2103, %v231
        %v2105 = vpop.permute.xlu0 %2104
        %2107 = vset.pattern.permute.xlu0 24
        %2108 = vperm.xlu0 %2107, %v232
        %v2109 = vpop.permute.xlu0 %2108
        %v2143 = vunpack.c.l.b16 %v2063
        %v2144 = vunpack.c.l.b16 %v2064
        %v2145 = vunpack.c.l.b16 %v2065
        %v2146 = vunpack.c.l.b16 %v2066
        %v2147 = vunpack.c.l.b16 %v2067
        %v2148 = vunpack.c.l.b16 %v2068
        %v2149 = vunpack.c.l.b16 %v2069
        %v2150 = vunpack.c.l.b16 %v2070
        %v2151 = vunpack.c.l.b16 %v2071
        %v2152 = vunpack.c.l.b16 %v2072
        %v2153 = vunpack.c.l.b16 %v2073
        %v2154 = vunpack.c.l.b16 %v2074
        %v2155 = vunpack.c.l.b16 %v2075
        %v2156 = vunpack.c.l.b16 %v2076
        %v2157 = vunpack.c.l.b16 %v2077
        %v2158 = vunpack.c.l.b16 %v2078
        %v2159 = vunpack.c.l.b16 %v2079
        %v2160 = vunpack.c.l.b16 %v2080
        %v2161 = vunpack.c.l.b16 %v2081
        %v2162 = vunpack.c.l.b16 %v2082
        %v2163 = vunpack.c.l.b16 %v2083
        %v2164 = vunpack.c.l.b16 %v2084
        %v2165 = vunpack.c.l.b16 %v2085
        %v2166 = vunpack.c.l.b16 %v2086
        %v2167 = vunpack.c.l.b16 %v2087
        %v2168 = vunpack.c.l.b16 %v2088
        %v2169 = vunpack.c.l.b16 %v2089
        %v2170 = vunpack.c.l.b16 %v2090
        %v2171 = vunpack.c.l.b16 %v2091
        %v2172 = vunpack.c.l.b16 %v2092
        %v2173 = vunpack.c.l.b16 %v2093
        %v2174 = vunpack.c.l.b16 %v2094
        %v2175 = vpack.c.b16 %v2144, %v2143
        %v2176 = vpack.c.b16 %v2146, %v2145
        %v2177 = vpack.c.b16 %v2148, %v2147
        %v2178 = vpack.c.b16 %v2150, %v2149
        %v2179 = vpack.c.b16 %v2152, %v2151
        %v2180 = vpack.c.b16 %v2154, %v2153
        %v2181 = vpack.c.b16 %v2156, %v2155
        %v2182 = vpack.c.b16 %v2158, %v2157
        %v2183 = vpack.c.b16 %v2160, %v2159
        %v2184 = vpack.c.b16 %v2162, %v2161
        %v2185 = vpack.c.b16 %v2164, %v2163
        %v2186 = vpack.c.b16 %v2166, %v2165
        %v2187 = vpack.c.b16 %v2168, %v2167
        %v2188 = vpack.c.b16 %v2170, %v2169
        %v2189 = vpack.c.b16 %v2172, %v2171
        %v2190 = vpack.c.b16 %v2174, %v2173
        %2207 = vmatprep.subr.bf16.mxu0 0
        %2208 = vmatpush1.bf16.msra.mxu0 %v2182
        %2209 = vmatprep.subr.bf16.mxu0 0
        %2210 = vmatpush1.bf16.msra.mxu0 %v2181
        %2211 = vmatprep.subr.bf16.mxu0 0
        %2212 = vmatpush1.bf16.msra.mxu0 %v2180
        %2213 = vmatprep.subr.bf16.mxu0 0
        %2214 = vmatpush1.bf16.msra.mxu0 %v2179
        %2215 = vmatprep.subr.bf16.mxu0 0
        %2216 = vmatpush1.bf16.msra.mxu0 %v2178
        %2217 = vmatprep.subr.bf16.mxu0 0
        %2218 = vmatpush1.bf16.msra.mxu0 %v2177
        %2219 = vmatprep.subr.bf16.mxu0 0
        %2220 = vmatpush1.bf16.msra.mxu0 %v2176
        %2221 = vmatprep.subr.bf16.mxu0 0
        %2222 = vmatpush1.bf16.msra.mxu0 %v2175
        %2223 = vmatprep.subr.bf16.mxu0 0
        %2224 = vmatpush2.bf16.msra.mxu0 %v2190
        %2225 = vmatprep.subr.bf16.mxu0 0
        %2226 = vmatpush2.bf16.msra.mxu0 %v2189
        %2227 = vmatprep.subr.bf16.mxu0 0
        %2228 = vmatpush2.bf16.msra.mxu0 %v2188
        %2229 = vmatprep.subr.bf16.mxu0 0
        %2230 = vmatpush2.bf16.msra.mxu0 %v2187
        %2231 = vmatprep.subr.bf16.mxu0 0
        %2232 = vmatpush2.bf16.msra.mxu0 %v2186
        %2233 = vmatprep.subr.bf16.mxu0 0
        %2234 = vmatpush2.bf16.msra.mxu0 %v2185
        %2235 = vmatprep.subr.bf16.mxu0 0
        %2236 = vmatpush2.bf16.msra.mxu0 %v2184
        %2237 = vmatprep.subr.bf16.mxu0 0
        %2238 = vmatpush2.bf16.msra.mxu0 %v2183
        %2239 = vmatprep.mubr.bf16.mxu0 %v2060
        %2240 = vmatmul.mubr.bf16.gmra.mxu0 %v2059
        %v2241 = vpop.f32.mrf.mxu0
        %v2242 = vadd.f32 %v2097, %v2241
        %v2243 = vpop.f32.mrf.mxu0
        %v2244 = vpop.f32.mrf.mxu0
        %v2245 = vadd.f32 %v2101, %v2244
        %v2246 = vpop.f32.mrf.mxu0
        %2247 = vmatprep.mubr.bf16.mxu0 %v2062
        %2248 = vmatmul.mubr.bf16.gmra.mxu0 %v2061
        %v2249 = vpop.f32.mrf.mxu0
        %v2250 = vadd.f32 %v2105, %v2249
        %v2251 = vpop.f32.mrf.mxu0
        %v2252 = vpop.f32.mrf.mxu0
        %v2253 = vadd.f32 %v2109, %v2252
        %v2254 = vpop.f32.mrf.mxu0
        %2255 = vdwg.mxu0
        %v2256 = vxor.u32 %v2242, 2147483648
        %v2257 = vxor.u32 %v2245, 2147483648
        %v2258 = vxor.u32 %v2250, 2147483648
        %v2259 = vxor.u32 %v2253, 2147483648
        %v2260 = vmul.f32 %v2256, 1.442695
        %v2261 = vpow.pop %v2260
        %v2262 = vmul.f32 %v2257, 1.442695
        %v2263 = vpow.pop %v2262
        %v2264 = vmul.f32 %v2258, 1.442695
        %v2265 = vpow.pop %v2264
        %v2266 = vmul.f32 %v2259, 1.442695
        %v2267 = vpow.pop %v2266
        %v2268 = vadd.f32 %v2261, 1.0
        %v2269 = vadd.f32 %v2263, 1.0
        %v2270 = vadd.f32 %v2265, 1.0
        %v2271 = vadd.f32 %v2267, 1.0
        %v2272 = vrcp.pop %v2268
        %v2273 = vmul.f32 1.0, %v2272
        %v2274 = vrcp.pop %v2269
        %v2275 = vmul.f32 1.0, %v2274
        %v2276 = vrcp.pop %v2270
        %v2277 = vmul.f32 1.0, %v2276
        %v2278 = vrcp.pop %v2271
        %v2279 = vmul.f32 1.0, %v2278
        %v2280 = vmul.f32 %v2242, %v2273
        %v2281 = vmul.f32 %v2245, %v2275
        %v2282 = vmul.f32 %v2250, %v2277
        %v2283 = vmul.f32 %v2253, %v2279
        %vm2284 = vcmask 523264
        %v2285 = vsel %vm2284, %v2280, 0.0
        %2286 = vadd.xlane.f32.xlu0 %v2285
        %v2287 = vpop.xlane.xlu0 %2286
        %v2288 = vsel %vm2284, %v2281, 0.0
        %2289 = vadd.xlane.f32.xlu0 %v2288
        %v2290 = vpop.xlane.xlu0 %2289
        %v2291 = vsel %vm2284, %v2282, 0.0
        %2292 = vadd.xlane.f32.xlu0 %v2291
        %v2293 = vpop.xlane.xlu0 %2292
        %v2294 = vsel %vm2284, %v2283, 0.0
        %2295 = vadd.xlane.f32.xlu0 %v2294
        %v2296 = vpop.xlane.xlu0 %2295
        %v2297 = vrcp.pop 64.0
        %v2298 = vmul.f32 %v2287, %v2297
        %v2299 = vmul.f32 %v2290, %v2297
        %v2300 = vmul.f32 %v2293, %v2297
        %v2301 = vmul.f32 %v2296, %v2297
        %v2302 = vld [vmem:[#allocation4 + $0xbc] sm:$0x3]
        %v2303 = vpack.c.bf16 %v2299, %v2298
        %v2304 = vpack.c.bf16 %v2301, %v2300
        %v2305 = vld [vmem:[#allocation6] sm:$0xf]
        %2307 = vrot.lane.b32.xlu0 %v2305, 103
        %v2308 = vpop.permute.xlu0 %2307
        %v2311 = vsel %vm283, %v2302, 0
        %2313 = vmatprep.subr.bf16.mxu0 0
        %2314 = vmatpush1.bf16.msra.mxu0 0
        %2315 = vmatprep.subr.bf16.mxu0 0
        %2316 = vmatpush1.bf16.msra.mxu0 0
        %2317 = vmatprep.subr.bf16.mxu0 0
        %2318 = vmatpush1.bf16.msra.mxu0 0
        %2319 = vmatprep.subr.bf16.mxu0 0
        %2320 = vmatpush1.bf16.msra.mxu0 0
        %2321 = vmatprep.subr.bf16.mxu0 0
        %2322 = vmatpush1.bf16.msra.mxu0 0
        %2323 = vmatprep.subr.bf16.mxu0 0
        %2324 = vmatpush1.bf16.msra.mxu0 0
        %2325 = vmatprep.subr.bf16.mxu0 0
        %2326 = vmatpush1.bf16.msra.mxu0 %v2304
        %2327 = vmatprep.subr.bf16.mxu0 0
        %2328 = vmatpush1.bf16.msra.mxu0 %v2303
        %2329 = vmatprep.subr.bf16.mxu0 0
        %2330 = vmatpush2.bf16.msra.mxu0 0
        %2331 = vmatprep.subr.bf16.mxu0 0
        %2332 = vmatpush2.bf16.msra.mxu0 0
        %2333 = vmatprep.subr.bf16.mxu0 0
        %2334 = vmatpush2.bf16.msra.mxu0 0
        %2335 = vmatprep.subr.bf16.mxu0 0
        %2336 = vmatpush2.bf16.msra.mxu0 0
        %2337 = vmatprep.subr.bf16.mxu0 0
        %2338 = vmatpush2.bf16.msra.mxu0 0
        %2339 = vmatprep.subr.bf16.mxu0 0
        %2340 = vmatpush2.bf16.msra.mxu0 0
        %2341 = vmatprep.subr.bf16.mxu0 0
        %2342 = vmatpush2.bf16.msra.mxu0 0
        %2343 = vmatprep.subr.bf16.mxu0 0
        %2344 = vmatpush2.bf16.msra.mxu0 0
        %2345 = vmatprep.mubr.bf16.mxu0 0
        %2346 = vmatmul.mubr.bf16.gmra.mxu0 %v2311
        %v2347 = vpop.f32.mrf.mxu0
        %v2348 = vadd.f32 %v2308, %v2347
        %v2349 = vpop.f32.mrf.mxu0
        %v2350 = vpop.f32.mrf.mxu0
        %v2351 = vpop.f32.mrf.mxu0
        %2352 = vdwg.mxu0
        %v2353 = vxor.u32 %v2348, 2147483648
        %v2354 = vmul.f32 %v2353, 1.442695
        %v2355 = vpow.pop %v2354
        %v2356 = vadd.f32 %v2355, 1.0
        %v2357 = vrcp.pop %v2356
        %v2358 = vmul.f32 1.0, %v2357
        %v2359 = vmul.f32 %v2348, %v2358
        %v2360 = vld [vmem:[#allocation4 + $0xc0] sm:$0xf]
        %v2361 = vld [vmem:[#allocation4 + $0xc4] sm:$0xf]
        %v2362 = vld [vmem:[#allocation4 + $0xc8] sm:$0xf]
        %v2363 = vld [vmem:[#allocation4 + $0xcc] sm:$0xf]
        %v2364 = vpack.c.bf16 %v2359, %v2359
        %v2369 = vunpack.c.l.b16 %v2360
        %v2370 = vunpack.c.l.b16 %v2361
        %v2371 = vunpack.c.l.b16 %v2362
        %v2372 = vunpack.c.l.b16 %v2363
        %v2373 = vpack.c.b16 %v2370, %v2369
        %v2374 = vpack.c.b16 %v2372, %v2371
        %2375 = vrot.lane.b32.xlu0 %v229, 102
        %v2376 = vpop.permute.xlu0 %2375
        %2377 = vrot.lane.b32.xlu0 %v230, 102
        %v2378 = vpop.permute.xlu0 %2377
        %2379 = vrot.lane.b32.xlu0 %v231, 102
        %v2380 = vpop.permute.xlu0 %2379
        %2381 = vrot.lane.b32.xlu0 %v232, 102
        %v2382 = vpop.permute.xlu0 %2381
        %vm2387 = vcmask 31744
        %v2389 = vsel %vm2387, %v2373, 0
        %v2392 = vsel %vm2387, %v2374, 0
        %vm2394 = vcmask 1041408
        %v2396 = vsel %vm2394, %v2364, 0
        %2398 = vmatprep.subr.bf16.mxu0 0
        %2399 = vmatpush1.bf16.msra.mxu0 0
        %2400 = vmatprep.subr.bf16.mxu0 0
        %2401 = vmatpush1.bf16.msra.mxu0 0
        %2402 = vmatprep.subr.bf16.mxu0 0
        %2403 = vmatpush1.bf16.msra.mxu0 0
        %2404 = vmatprep.subr.bf16.mxu0 0
        %2405 = vmatpush1.bf16.msra.mxu0 0
        %2406 = vmatprep.subr.bf16.mxu0 0
        %2407 = vmatpush1.bf16.msra.mxu0 0
        %2408 = vmatprep.subr.bf16.mxu0 0
        %2409 = vmatpush1.bf16.msra.mxu0 0
        %2410 = vmatprep.subr.bf16.mxu0 0
        %2411 = vmatpush1.bf16.msra.mxu0 0
        %2412 = vmatprep.subr.bf16.mxu0 0
        %2413 = vmatpush1.bf16.msra.mxu0 %v2396
        %2414 = vmatprep.subr.bf16.mxu0 0
        %2415 = vmatpush2.bf16.msra.mxu0 0
        %2416 = vmatprep.subr.bf16.mxu0 0
        %2417 = vmatpush2.bf16.msra.mxu0 0
        %2418 = vmatprep.subr.bf16.mxu0 0
        %2419 = vmatpush2.bf16.msra.mxu0 0
        %2420 = vmatprep.subr.bf16.mxu0 0
        %2421 = vmatpush2.bf16.msra.mxu0 0
        %2422 = vmatprep.subr.bf16.mxu0 0
        %2423 = vmatpush2.bf16.msra.mxu0 0
        %2424 = vmatprep.subr.bf16.mxu0 0
        %2425 = vmatpush2.bf16.msra.mxu0 0
        %2426 = vmatprep.subr.bf16.mxu0 0
        %2427 = vmatpush2.bf16.msra.mxu0 0
        %2428 = vmatprep.subr.bf16.mxu0 0
        %2429 = vmatpush2.bf16.msra.mxu0 0
        %2430 = vmatprep.mubr.bf16.mxu0 0
        %2431 = vmatmul.mubr.bf16.gmra.mxu0 %v2389
        %v2432 = vpop.f32.mrf.mxu0
        %v2433 = vadd.f32 %v2376, %v2432
        %v2434 = vpop.f32.mrf.mxu0
        %v2435 = vpop.f32.mrf.mxu0
        %v2436 = vadd.f32 %v2378, %v2435
        %v2437 = vpop.f32.mrf.mxu0
        %2438 = vmatprep.mubr.bf16.mxu0 0
        %2439 = vmatmul.mubr.bf16.gmra.mxu0 %v2392
        %v2440 = vpop.f32.mrf.mxu0
        %v2441 = vadd.f32 %v2380, %v2440
        %v2442 = vpop.f32.mrf.mxu0
        %v2443 = vpop.f32.mrf.mxu0
        %v2444 = vadd.f32 %v2382, %v2443
        %v2445 = vpop.f32.mrf.mxu0
        %2446 = vdwg.mxu0
        %v2447 = vxor.u32 %v2433, 2147483648
        %v2448 = vxor.u32 %v2436, 2147483648
        %v2449 = vxor.u32 %v2441, 2147483648
        %v2450 = vxor.u32 %v2444, 2147483648
        %v2451 = vmul.f32 %v2447, 1.442695
        %v2452 = vpow.pop %v2451
        %v2453 = vmul.f32 %v2448, 1.442695
        %v2454 = vpow.pop %v2453
        %v2455 = vmul.f32 %v2449, 1.442695
        %v2456 = vpow.pop %v2455
        %v2457 = vmul.f32 %v2450, 1.442695
        %v2458 = vpow.pop %v2457
        %v2459 = vadd.f32 %v2452, 1.0
        %v2460 = vadd.f32 %v2454, 1.0
        %v2461 = vadd.f32 %v2456, 1.0
        %v2462 = vadd.f32 %v2458, 1.0
        %v2463 = vrcp.pop %v2459
        %v2464 = vmul.f32 1.0, %v2463
        %v2465 = vrcp.pop %v2460
        %v2466 = vmul.f32 1.0, %v2465
        %v2467 = vrcp.pop %v2461
        %v2468 = vmul.f32 1.0, %v2467
        %v2469 = vrcp.pop %v2462
        %v2470 = vmul.f32 1.0, %v2469
        %2472 = vset.pattern.permute.xlu0 0
        %2473 = vperm.xlu0 %2472, %v2464
        %v2474 = vpop.permute.xlu0 %2473
        %2477 = vset.pattern.permute.xlu0 0
        %2478 = vperm.xlu0 %2477, %v2466
        %v2479 = vpop.permute.xlu0 %2478
        %2482 = vset.pattern.permute.xlu0 0
        %2483 = vperm.xlu0 %2482, %v2468
        %v2484 = vpop.permute.xlu0 %2483
        %2487 = vset.pattern.permute.xlu0 0
        %2488 = vperm.xlu0 %2487, %v2470
        %v2489 = vpop.permute.xlu0 %2488
        %v2491 = vmul.f32 %v2280, %v2474
        %v2492 = vmul.f32 %v2281, %v2479
        %v2493 = vmul.f32 %v2282, %v2484
        %v2494 = vmul.f32 %v2283, %v2489
        %v2495 = vld [vmem:[#allocation4 + $0xd0] sm:$0xf]
        %v2496 = vld [vmem:[#allocation4 + $0xd4] sm:$0xf]
        %v2497 = vld [vmem:[#allocation4 + $0xd8] sm:$0xf]
        %v2498 = vpack.c.bf16 %v2492, %v2491
        %v2499 = vpack.c.bf16 %v2494, %v2493
        %v2500 = vld [vmem:[#allocation6] sm:$0xff]
        %v2501 = vld [vmem:[#allocation6 + $0x8] sm:$0xff]
        %v2502 = vld [vmem:[#allocation6 + $0x10] sm:$0xff]
        %2504 = vset.pattern.permute.xlu0 27
        %2505 = vperm.xlu0 %2504, %v2500
        %v2506 = vpop.permute.xlu0 %2505
        %2509 = vset.pattern.permute.xlu0 27
        %2510 = vperm.xlu0 %2509, %v2501
        %v2511 = vpop.permute.xlu0 %2510
        %2514 = vset.pattern.permute.xlu0 27
        %2515 = vperm.xlu0 %2514, %v2502
        %v2516 = vpop.permute.xlu0 %2515
        %v2521 = vunpack.c.l.b16 %v2495
        %v2522 = vunpack.c.l.b16 %v2496
        %v2523 = vunpack.c.l.b16 %v2497
        %v2524 = vpack.c.b16 %v2522, %v2521
        %v2525 = vpack.c.b16 %v2523, %v2523
        %v2527 = vsel %vm283, %v2524, 0
        %v2530 = vsel %vm283, %v2525, 0
        %2532 = vmatprep.subr.bf16.mxu0 0
        %2533 = vmatpush1.bf16.msra.mxu0 0
        %2534 = vmatprep.subr.bf16.mxu0 0
        %2535 = vmatpush1.bf16.msra.mxu0 0
        %2536 = vmatprep.subr.bf16.mxu0 0
        %2537 = vmatpush1.bf16.msra.mxu0 0
        %2538 = vmatprep.subr.bf16.mxu0 0
        %2539 = vmatpush1.bf16.msra.mxu0 0
        %2540 = vmatprep.subr.bf16.mxu0 0
        %2541 = vmatpush1.bf16.msra.mxu0 0
        %2542 = vmatprep.subr.bf16.mxu0 0
        %2543 = vmatpush1.bf16.msra.mxu0 0
        %2544 = vmatprep.subr.bf16.mxu0 0
        %2545 = vmatpush1.bf16.msra.mxu0 %v2499
        %2546 = vmatprep.subr.bf16.mxu0 0
        %2547 = vmatpush1.bf16.msra.mxu0 %v2498
        %2548 = vmatprep.subr.bf16.mxu0 0
        %2549 = vmatpush2.bf16.msra.mxu0 0
        %2550 = vmatprep.subr.bf16.mxu0 0
        %2551 = vmatpush2.bf16.msra.mxu0 0
        %2552 = vmatprep.subr.bf16.mxu0 0
        %2553 = vmatpush2.bf16.msra.mxu0 0
        %2554 = vmatprep.subr.bf16.mxu0 0
        %2555 = vmatpush2.bf16.msra.mxu0 0
        %2556 = vmatprep.subr.bf16.mxu0 0
        %2557 = vmatpush2.bf16.msra.mxu0 0
        %2558 = vmatprep.subr.bf16.mxu0 0
        %2559 = vmatpush2.bf16.msra.mxu0 0
        %2560 = vmatprep.subr.bf16.mxu0 0
        %2561 = vmatpush2.bf16.msra.mxu0 0
        %2562 = vmatprep.subr.bf16.mxu0 0
        %2563 = vmatpush2.bf16.msra.mxu0 0
        %2564 = vmatprep.mubr.bf16.mxu0 0
        %2565 = vmatmul.mubr.bf16.gmra.mxu0 %v2527
        %v2566 = vpop.f32.mrf.mxu0
        %v2567 = vadd.f32 %v2506, %v2566
        %v2568 = vpop.f32.mrf.mxu0
        %v2569 = vpop.f32.mrf.mxu0
        %v2570 = vadd.f32 %v2511, %v2569
        %v2571 = vpop.f32.mrf.mxu0
        %2572 = vmatprep.mubr.bf16.mxu0 0
        %2573 = vmatmul.mubr.bf16.gmra.mxu0 %v2530
        %v2574 = vpop.f32.mrf.mxu0
        %v2575 = vadd.f32 %v2516, %v2574
        %v2576 = vpop.f32.mrf.mxu0
        %v2577 = vpop.f32.mrf.mxu0
        %v2578 = vpop.f32.mrf.mxu0
        %2579 = vdwg.mxu0
        %v2580 = vsel %vm2284, %v2567, 0.0
        %2581 = vadd.xlane.f32.xlu0 %v2580
        %v2582 = vpop.xlane.xlu0 %2581
        %v2583 = vsel %vm2284, %v2570, 0.0
        %2584 = vadd.xlane.f32.xlu0 %v2583
        %v2585 = vpop.xlane.xlu0 %2584
        %v2586 = vsel %vm2284, %v2575, 0.0
        %2587 = vadd.xlane.f32.xlu0 %v2586
        %v2588 = vpop.xlane.xlu0 %2587
        %v2589 = vmul.f32 %v2582, %v2297
        %v2590 = vmul.f32 %v2585, %v2297
        %v2591 = vmul.f32 %v2588, %v2297
        %v2592 = vld [vmem:[#allocation4 + $0xdc] sm:$0xf]
        %v2593 = vld [vmem:[#allocation4 + $0xe0] sm:$0x1]
        %v2594 = vpack.c.bf16 %v2590, %v2589
        %v2595 = vpack.c.bf16 %v2591, %v2591
        %v2596 = vld [vmem:[#allocation6] sm:$0xff]
        %v2597 = vld [vmem:[#allocation6 + $0x8] sm:$0x3]
        %v2600 = vunpack.c.l.b16 %v2592
        %v2601 = vunpack.c.l.b16 %v2593
        %v2602 = vpack.c.b16 %v2601, %v2600
        %2605 = vrot.lane.b32.xlu0 %v2596, 100
        %v2606 = vpop.permute.xlu0 %2605
        %2607 = vrot.lane.b32.xlu0 %v2597, 100
        %v2608 = vpop.permute.xlu0 %2607
        %vm2611 = vcmask 195584
        %v2613 = vsel %vm2611, %v2602, 0
        %v2616 = vsel %vm1193, %v2595, 0
        %2618 = vmatprep.subr.bf16.mxu0 0
        %2619 = vmatpush1.bf16.msra.mxu0 0
        %2620 = vmatprep.subr.bf16.mxu0 0
        %2621 = vmatpush1.bf16.msra.mxu0 0
        %2622 = vmatprep.subr.bf16.mxu0 0
        %2623 = vmatpush1.bf16.msra.mxu0 0
        %2624 = vmatprep.subr.bf16.mxu0 0
        %2625 = vmatpush1.bf16.msra.mxu0 0
        %2626 = vmatprep.subr.bf16.mxu0 0
        %2627 = vmatpush1.bf16.msra.mxu0 0
        %2628 = vmatprep.subr.bf16.mxu0 0
        %2629 = vmatpush1.bf16.msra.mxu0 0
        %2630 = vmatprep.subr.bf16.mxu0 0
        %2631 = vmatpush1.bf16.msra.mxu0 %v2616
        %2632 = vmatprep.subr.bf16.mxu0 0
        %2633 = vmatpush1.bf16.msra.mxu0 %v2594
        %2634 = vmatprep.subr.bf16.mxu0 0
        %2635 = vmatpush2.bf16.msra.mxu0 0
        %2636 = vmatprep.subr.bf16.mxu0 0
        %2637 = vmatpush2.bf16.msra.mxu0 0
        %2638 = vmatprep.subr.bf16.mxu0 0
        %2639 = vmatpush2.bf16.msra.mxu0 0
        %2640 = vmatprep.subr.bf16.mxu0 0
        %2641 = vmatpush2.bf16.msra.mxu0 0
        %2642 = vmatprep.subr.bf16.mxu0 0
        %2643 = vmatpush2.bf16.msra.mxu0 0
        %2644 = vmatprep.subr.bf16.mxu0 0
        %2645 = vmatpush2.bf16.msra.mxu0 0
        %2646 = vmatprep.subr.bf16.mxu0 0
        %2647 = vmatpush2.bf16.msra.mxu0 0
        %2648 = vmatprep.subr.bf16.mxu0 0
        %2649 = vmatpush2.bf16.msra.mxu0 0
        %2650 = vmatprep.mubr.bf16.mxu0 0
        %2651 = vmatmul.mubr.bf16.gmra.mxu0 %v2613
        %v2652 = vpop.f32.mrf.mxu0
        %v2653 = vadd.f32 %v2606, %v2652
        %v2654 = vpop.f32.mrf.mxu0
        %v2655 = vpop.f32.mrf.mxu0
        %v2656 = vadd.f32 %v2608, %v2655
        %v2657 = vpop.f32.mrf.mxu0
        %2658 = vdwg.mxu0
        %vm2659 = vcmask 7168
        %2660 = vst.msk [vmem:[%s219] sm:$0xff] %vm2659, %v2653
        %vm2661 = vcmask 1024
        %2662 = vst.msk [vmem:[%s219 + $0x8] sm:$0x3] %vm2661, %v2656
        %p2663 = scmp.lt.s32.totalorder %s18, 1
        %s2664 = scalar_select %p2663, %s18, 1
        %s2665 = smul.addr %s2664, 2
        %s2666 = smul.addr %s2665, 8
        %s2667 = scalar_lea.vmem %s3, %s2666
        // Predicated region
        $region45: #{tpu_custom_call.1} parent=31 // pred_check
          %p2668 = pneg %p104
        $region46: #{tpu_custom_call.1} parent=31 // pred_check_branch
          %2670 = sbr.rel (%p2668) target = $region48
        $region47: #{tpu_custom_call.1} parent=31 // pred_region
          _
        $region48: #{tpu_custom_call.1} parent=31 // pred_fallthru
          _
      $region32: #{tpu_custom_call.1} parent=5 // pred_fallthru
        _
      %p2671 = scmp.le.s32.totalorder 2, %s13
      // Predicated region
      $region49: #{tpu_custom_call.1} parent=5 // pred_check
        %p2672 = pneg %p2671
      $region50: #{tpu_custom_call.1} parent=5 // pred_check_branch
        %2674 = sbr.rel (%p2672) target = $region52
      $region51: #{tpu_custom_call.1} parent=5 // pred_region
        %s2675 = ssub.s32 %s13, 2
        // Predicated region
        $region53: #{tpu_custom_call.1} parent=51 // pred_check
          %p2676 = pneg %p110
        $region54: #{tpu_custom_call.1} parent=51 // pred_check_branch
          %2678 = sbr.rel (%p2676) target = $region56
        $region55: #{tpu_custom_call.1} parent=51 // pred_region
          %p2679 = scmp.lt.s32.totalorder %s19, 1
          %s2680 = scalar_select %p2679, %s19, 1
          %s2681 = smul.addr %s2680, 2
          %s2682 = smul.addr %s2681, 8
          %s2683 = scalar_lea.vmem %s3, %s2682
        $region56: #{tpu_custom_call.1} parent=51 // pred_fallthru
          _
      $region52: #{tpu_custom_call.1} parent=5 // pred_fallthru
        _
    $region6: #{tpu_custom_call.1} parent=1 // loop_footer
      %s17 = sadd.s32 1, %s13
    $region7: #{tpu_custom_call.1} parent=1 // loop_footer_branch
      %12 = sbr.rel target = $region3
    $region8: #{tpu_custom_call.1} parent=1 // loop_exit
      _
    %2684 = vsyncpa [#allocation3], 1
    %s2685 = scalar_lea.sflag [#allocation3], 1
    %2686 = vsyncpa %s2685, 1
    %2687 = vsyncpa [#allocation5], 1

</llo_original>
